<compile_context>
chip_gen: v6e
topology: v6e:2x2x1
jax: 0.10.0
libtpu: 0.0.40
codegen_flags: <defaults>
</compile_context>

<pallas_src>
import functools

import jax
import jax.numpy as jnp
from jax import lax
from jax.experimental import pallas as pl
from jax.experimental.pallas import tpu as pltpu
import numpy as np


# ----------------------------- Pallas kernels ------------------------------

def _conv_pool_kernel(p_ref, w_ref, b_ref, o_ref, *, rows_q):
    """Fused conv-GEMM + bias + 2x2 max-pool for one Siamese branch.

    p_ref: (1, 4*rows_q, K)  im2col patches, rows ordered (pool-quadrant, batch, oh, ow)
    w_ref: (K, Cout)         reshaped conv weight
    b_ref: (1, Cout)
    o_ref: (1, rows_q, Cout) pooled activations, rows ordered (batch, oh, ow)
    """
    y = jnp.dot(p_ref[0], w_ref[...], preferred_element_type=jnp.float32)
    y = y + b_ref[...]
    # 2x2 max-pool == elementwise max of the four quadrant row-blocks (tile-aligned slices).
    m = jnp.maximum(
        jnp.maximum(y[0 * rows_q:1 * rows_q], y[1 * rows_q:2 * rows_q]),
        jnp.maximum(y[2 * rows_q:3 * rows_q], y[3 * rows_q:4 * rows_q]),
    )
    o_ref[0] = m.astype(o_ref.dtype)


def _fc_stack_kernel(x_ref, w1_ref, b1_ref, w2_ref, b2_ref, w3_ref, b3_ref, o_ref):
    """Fused Linear(800,500)+ReLU -> Linear(500,10) -> Linear(10,2); weights resident in VMEM."""
    x = x_ref[0]
    h = jnp.dot(x, w1_ref[...], preferred_element_type=jnp.float32) + b1_ref[...]
    h = jnp.maximum(h, 0.0)
    h = jnp.dot(h, w2_ref[...], preferred_element_type=jnp.float32) + b2_ref[...]
    h = jnp.dot(h, w3_ref[...], preferred_element_type=jnp.float32) + b3_ref[...]
    o_ref[0] = h.astype(o_ref.dtype)


_PARALLEL = pltpu.CompilerParams(dimension_semantics=("parallel",))


def conv_pool_pallas(patches, w_mat, bias):
    """patches: (G, 4*RQ, K); w_mat: (K, C); bias: (C,) -> (G, RQ, C).  Grid over branch axis G."""
    G, R, K = patches.shape
    C = w_mat.shape[1]
    rq = R // 4
    return pl.pallas_call(
        functools.partial(_conv_pool_kernel, rows_q=rq),
        out_shape=jax.ShapeDtypeStruct((G, rq, C), jnp.float32),
        grid=(G,),
        in_specs=[
            pl.BlockSpec((1, R, K), lambda g: (g, 0, 0)),
            pl.BlockSpec((K, C), lambda g: (0, 0)),
            pl.BlockSpec((1, C), lambda g: (0, 0)),
        ],
        out_specs=pl.BlockSpec((1, rq, C), lambda g: (g, 0, 0)),
        compiler_params=_PARALLEL,
    )(patches, w_mat, bias.reshape(1, C))


def fc_stack_pallas(x, w1, b1, w2, b2, w3, b3):
    """x: (G, B, 800) -> (G, B, 2); whole FC stack fused in a single kernel."""
    G, B, K1 = x.shape
    N1, N2, N3 = w1.shape[1], w2.shape[1], w3.shape[1]
    return pl.pallas_call(
        _fc_stack_kernel,
        out_shape=jax.ShapeDtypeStruct((G, B, N3), jnp.float32),
        grid=(G,),
        in_specs=[
            pl.BlockSpec((1, B, K1), lambda g: (g, 0, 0)),
            pl.BlockSpec((K1, N1), lambda g: (0, 0)),
            pl.BlockSpec((1, N1), lambda g: (0, 0)),
            pl.BlockSpec((N1, N2), lambda g: (0, 0)),
            pl.BlockSpec((1, N2), lambda g: (0, 0)),
            pl.BlockSpec((N2, N3), lambda g: (0, 0)),
            pl.BlockSpec((1, N3), lambda g: (0, 0)),
        ],
        out_specs=pl.BlockSpec((1, B, N3), lambda g: (g, 0, 0)),
        compiler_params=_PARALLEL,
    )(x, w1, b1.reshape(1, N1), w2, b2.reshape(1, N2), w3, b3.reshape(1, N3))


# ------------------------------- JAX glue ----------------------------------

def _im2col_pool_major(x, ksize, out_h2, out_w2):
    """x: (G, B, H, W, C) NHWC.  Returns (G, 4*B*out_h2*out_w2, ksize*ksize*C) patches
    whose rows are ordered (pool-quadrant, batch, pooled-row, pooled-col) so the fused
    conv+pool kernel can pool with an elementwise max of four contiguous row blocks.
    Feature ordering within a row is (kh, kw, cin), matching the reshaped weight."""
    G, B, H, W, C = x.shape
    ho, wo = 2 * out_h2, 2 * out_w2
    wins = [x[:, :, kh:kh + ho, kw:kw + wo, :]
            for kh in range(ksize) for kw in range(ksize)]
    p = jnp.concatenate(wins, axis=-1)                      # (G,B,ho,wo,k*k*C)
    p = p.reshape(G, B, out_h2, 2, out_w2, 2, ksize * ksize * C)
    p = jnp.transpose(p, (0, 3, 5, 1, 2, 4, 6))             # (G, di, dj, B, h2, w2, K)
    return p.reshape(G, 4 * B * out_h2 * out_w2, ksize * ksize * C)


def forward(input1, input2, params):
    B = input1.shape[0]
    # Shared weights -> stack the two branches and run the network once.
    x = jnp.stack([input1, input2], axis=0)                 # (2, B, 1, 28, 28)
    x = jnp.transpose(x, (0, 1, 3, 4, 2))                   # NCHW -> NHWC  (2, B, 28, 28, 1)

    # conv1 (1->20, k=5) + maxpool2x2, fused.
    w1m = jnp.transpose(params["w_conv1"], (2, 3, 1, 0)).reshape(25, 20)
    p1 = _im2col_pool_major(x, 5, 12, 12)                   # (2, 4*B*144, 25)
    h1 = conv_pool_pallas(p1, w1m, params["b_conv1"])       # (2, B*144, 20)
    h1 = h1.reshape(2, B, 12, 12, 20)

    # conv2 (20->50, k=5) + maxpool2x2, fused.
    w2m = jnp.transpose(params["w_conv2"], (2, 3, 1, 0)).reshape(500, 50)
    p2 = _im2col_pool_major(h1, 5, 4, 4)                    # (2, 4*B*16, 500)
    h2 = conv_pool_pallas(p2, w2m, params["b_conv2"])       # (2, B*16, 50)

    # FC stack fused in one kernel.  Activations are flattened in NHWC (i,j,c) order;
    # permute fc1's input columns once so the result matches PyTorch's NCHW flatten.
    x_fc = h2.reshape(2, B, 800)
    wfc1 = jnp.transpose(params["w_fc1"].reshape(500, 50, 4, 4), (2, 3, 1, 0)).reshape(800, 500)
    wfc2 = params["w_fc2"].T
    wfc3 = params["w_fc3"].T
    out = fc_stack_pallas(x_fc, wfc1, params["b_fc1"],
                          wfc2, params["b_fc2"],
                          wfc3, params["b_fc3"])            # (2, B, 2)
    return out[0], out[1]


# ------------------------- pure-JAX reference (check) ------------------------

def _forward_once_ref(x, p):
    dn = ("NCHW", "OIHW", "NCHW")

    def conv(x, w, b):
        y = lax.conv_general_dilated(x, w, (1, 1), "VALID", dimension_numbers=dn)
        return y + b.reshape(1, -1, 1, 1)

    def pool(x):
        return lax.reduce_window(x, -jnp.inf, lax.max, (1, 1, 2, 2), (1, 1, 2, 2), "VALID")

    y = pool(conv(x, p["w_conv1"], p["b_conv1"]))
    y = pool(conv(y, p["w_conv2"], p["b_conv2"]))
    y = y.reshape(y.shape[0], -1)
    y = jnp.maximum(y @ p["w_fc1"].T + p["b_fc1"], 0.0)
    y = y @ p["w_fc2"].T + p["b_fc2"]
    y = y @ p["w_fc3"].T + p["b_fc3"]
    return y


# ------------------------------ params / main -------------------------------

def init_params(key):
    def uni(k, shape, fan_in):
        bound = 1.0 / float(np.sqrt(fan_in))
        return jax.random.uniform(k, shape, jnp.float32, -bound, bound)

    ks = jax.random.split(key, 10)
    return {
        "w_conv1": uni(ks[0], (20, 1, 5, 5), 1 * 5 * 5),
        "b_conv1": uni(ks[1], (20,), 1 * 5 * 5),
        "w_conv2": uni(ks[2], (50, 20, 5, 5), 20 * 5 * 5),
        "b_conv2": uni(ks[3], (50,), 20 * 5 * 5),
        "w_fc1":   uni(ks[4], (500, 800), 800),
        "b_fc1":   uni(ks[5], (500,), 800),
        "w_fc2":   uni(ks[6], (10, 500), 500),
        "b_fc2":   uni(ks[7], (10,), 500),
        "w_fc3":   uni(ks[8], (2, 10), 10),
        "b_fc3":   uni(ks[9], (2,), 10),
    }


if __name__ == "__main__":
    key = jax.random.PRNGKey(0)
    k1, k2, kp = jax.random.split(key, 3)
    # Input spatial size must be 28x28 so the flatten is 50*4*4=800 as in the module.
    x1 = jax.random.normal(k1, (2, 1, 28, 28), jnp.float32)
    x2 = jax.random.normal(k2, (2, 1, 28, 28), jnp.float32)
    params = init_params(kp)

    out1, out2 = jax.jit(forward)(x1, x2, params)
    jax.block_until_ready((out1, out2))
    assert out1.shape == (2, 2) and out2.shape == (2, 2)

    ref1 = _forward_once_ref(x1, params)
    ref2 = _forward_once_ref(x2, params)
    np.testing.assert_allclose(np.asarray(out1), np.asarray(ref1), rtol=1e-4, atol=1e-4)
    np.testing.assert_allclose(np.asarray(out2), np.asarray(ref2), rtol=1e-4, atol=1e-4)

    print("KERNEL_OK")
</pallas_src>

<mosaic_0001>
module attributes {stable_mosaic.version = 11 : i64} {
  func.func @_conv_pool_kernel(%arg0: i32, %arg1: memref<1x1152x25xf32, #tpu.memory_space<vmem>>, %arg2: memref<25x20xf32, #tpu.memory_space<vmem>>, %arg3: memref<1x20xf32, #tpu.memory_space<vmem>>, %arg4: memref<1x288x20xf32, #tpu.memory_space<vmem>>) attributes {dimension_semantics = [#tpu.dimension_semantics<parallel>], iteration_bounds = array<i64: 2>, scalar_prefetch = 0 : i64, scratch_operands = 0 : i64, tpu.core_type = #tpu.core_type<tc>, window_params = [{transform_indices = @transform_0, window_bounds = array<i64: 1, 1152, 25>}, {pipeline_mode = #tpu.pipeline_mode<synchronous>, transform_indices = @transform_1, window_bounds = array<i64: 25, 20>}, {pipeline_mode = #tpu.pipeline_mode<synchronous>, transform_indices = @transform_2, window_bounds = array<i64: 1, 20>}, {transform_indices = @transform_3, window_bounds = array<i64: 1, 288, 20>}]} {
    %c0 = arith.constant 0 : index
    %c0_0 = arith.constant 0 : index
    %c0_1 = arith.constant 0 : index
    %0 = vector.load %arg1[%c0, %c0_0, %c0_1] : memref<1x1152x25xf32, #tpu.memory_space<vmem>>, vector<1x1152x25xf32>
    %1 = vector.shape_cast %0 : vector<1x1152x25xf32> to vector<1152x25xf32>
    %c0_2 = arith.constant 0 : index
    %c0_3 = arith.constant 0 : index
    %2 = vector.load %arg2[%c0_2, %c0_3] : memref<25x20xf32, #tpu.memory_space<vmem>>, vector<25x20xf32>
    %cst = arith.constant dense<0.000000e+00> : vector<1152x20xf32>
    %3 = tpu.matmul %1, %2, %cst {dimension_numbers = #tpu.dot_dimension_numbers<[1], [0], [0], [1], [0, 0, 1, 1], [], []>} : vector<1152x25xf32>, vector<25x20xf32>, vector<1152x20xf32> -> vector<1152x20xf32>
    %c0_4 = arith.constant 0 : index
    %c0_5 = arith.constant 0 : index
    %4 = vector.load %arg3[%c0_4, %c0_5] : memref<1x20xf32, #tpu.memory_space<vmem>>, vector<1x20xf32>
    %5 = vector.broadcast %4 : vector<1x20xf32> to vector<1152x20xf32>
    %6 = arith.addf %3, %5 : vector<1152x20xf32>
    %7 = vector.extract_strided_slice %6 {offsets = [0, 0], sizes = [288, 20], strides = [1, 1]} : vector<1152x20xf32> to vector<288x20xf32>
    %8 = vector.extract_strided_slice %6 {offsets = [288, 0], sizes = [288, 20], strides = [1, 1]} : vector<1152x20xf32> to vector<288x20xf32>
    %9 = arith.maximumf %7, %8 : vector<288x20xf32>
    %10 = vector.extract_strided_slice %6 {offsets = [576, 0], sizes = [288, 20], strides = [1, 1]} : vector<1152x20xf32> to vector<288x20xf32>
    %11 = vector.extract_strided_slice %6 {offsets = [864, 0], sizes = [288, 20], strides = [1, 1]} : vector<1152x20xf32> to vector<288x20xf32>
    %12 = arith.maximumf %10, %11 : vector<288x20xf32>
    %13 = arith.maximumf %9, %12 : vector<288x20xf32>
    %c0_6 = arith.constant 0 : index
    %c0_7 = arith.constant 0 : index
    %c0_8 = arith.constant 0 : index
    %14 = vector.load %arg4[%c0_6, %c0_7, %c0_8] : memref<1x288x20xf32, #tpu.memory_space<vmem>>, vector<1x288x20xf32>
    %15 = vector.shape_cast %14 : vector<1x288x20xf32> to vector<288x20xf32>
    %16 = vector.shape_cast %13 : vector<288x20xf32> to vector<1x288x20xf32>
    tpu.vector_store %arg4[%c0_6, %c0_7, %c0_8], %16 {strides = array<i32>} : memref<1x288x20xf32, #tpu.memory_space<vmem>>, vector<1x288x20xf32>,
    return
  }
  func.func @transform_0(%arg0: i32) -> (i32, i32, i32) {
    %c0_i32 = arith.constant 0 : i32
    %c0_i32_0 = arith.constant 0 : i32
    %c0_i32_1 = arith.constant 0 : i32
    return %arg0, %c0_i32, %c0_i32_0 : i32, i32, i32
  }
  func.func @transform_1(%arg0: i32) -> (i32, i32) {
    %c0_i32 = arith.constant 0 : i32
    %c0_i32_0 = arith.constant 0 : i32
    %c0_i32_1 = arith.constant 0 : i32
    return %c0_i32, %c0_i32_0 : i32, i32
  }
  func.func @transform_2(%arg0: i32) -> (i32, i32) {
    %c0_i32 = arith.constant 0 : i32
    %c0_i32_0 = arith.constant 0 : i32
    %c0_i32_1 = arith.constant 0 : i32
    return %c0_i32, %c0_i32_0 : i32, i32
  }
  func.func @transform_3(%arg0: i32) -> (i32, i32, i32) {
    %c0_i32 = arith.constant 0 : i32
    %c0_i32_0 = arith.constant 0 : i32
    %c0_i32_1 = arith.constant 0 : i32
    return %arg0, %c0_i32, %c0_i32_0 : i32, i32, i32
  }
}

module attributes {stable_mosaic.version = 11 : i64} {
  func.func @_conv_pool_kernel(%arg0: i32, %arg1: memref<1x128x500xf32, #tpu.memory_space<vmem>>, %arg2: memref<500x50xf32, #tpu.memory_space<vmem>>, %arg3: memref<1x50xf32, #tpu.memory_space<vmem>>, %arg4: memref<1x32x50xf32, #tpu.memory_space<vmem>>) attributes {dimension_semantics = [#tpu.dimension_semantics<parallel>], iteration_bounds = array<i64: 2>, scalar_prefetch = 0 : i64, scratch_operands = 0 : i64, tpu.core_type = #tpu.core_type<tc>, window_params = [{transform_indices = @transform_0, window_bounds = array<i64: 1, 128, 500>}, {pipeline_mode = #tpu.pipeline_mode<synchronous>, transform_indices = @transform_1, window_bounds = array<i64: 500, 50>}, {pipeline_mode = #tpu.pipeline_mode<synchronous>, transform_indices = @transform_2, window_bounds = array<i64: 1, 50>}, {transform_indices = @transform_3, window_bounds = array<i64: 1, 32, 50>}]} {
    %c0 = arith.constant 0 : index
    %c0_0 = arith.constant 0 : index
    %c0_1 = arith.constant 0 : index
    %0 = vector.load %arg1[%c0, %c0_0, %c0_1] : memref<1x128x500xf32, #tpu.memory_space<vmem>>, vector<1x128x500xf32>
    %1 = vector.shape_cast %0 : vector<1x128x500xf32> to vector<128x500xf32>
    %c0_2 = arith.constant 0 : index
    %c0_3 = arith.constant 0 : index
    %2 = vector.load %arg2[%c0_2, %c0_3] : memref<500x50xf32, #tpu.memory_space<vmem>>, vector<500x50xf32>
    %cst = arith.constant dense<0.000000e+00> : vector<128x50xf32>
    %3 = tpu.matmul %1, %2, %cst {dimension_numbers = #tpu.dot_dimension_numbers<[1], [0], [0], [1], [0, 0, 1, 1], [], []>} : vector<128x500xf32>, vector<500x50xf32>, vector<128x50xf32> -> vector<128x50xf32>
    %c0_4 = arith.constant 0 : index
    %c0_5 = arith.constant 0 : index
    %4 = vector.load %arg3[%c0_4, %c0_5] : memref<1x50xf32, #tpu.memory_space<vmem>>, vector<1x50xf32>
    %5 = vector.broadcast %4 : vector<1x50xf32> to vector<128x50xf32>
    %6 = arith.addf %3, %5 : vector<128x50xf32>
    %7 = vector.extract_strided_slice %6 {offsets = [0, 0], sizes = [32, 50], strides = [1, 1]} : vector<128x50xf32> to vector<32x50xf32>
    %8 = vector.extract_strided_slice %6 {offsets = [32, 0], sizes = [32, 50], strides = [1, 1]} : vector<128x50xf32> to vector<32x50xf32>
    %9 = arith.maximumf %7, %8 : vector<32x50xf32>
    %10 = vector.extract_strided_slice %6 {offsets = [64, 0], sizes = [32, 50], strides = [1, 1]} : vector<128x50xf32> to vector<32x50xf32>
    %11 = vector.extract_strided_slice %6 {offsets = [96, 0], sizes = [32, 50], strides = [1, 1]} : vector<128x50xf32> to vector<32x50xf32>
    %12 = arith.maximumf %10, %11 : vector<32x50xf32>
    %13 = arith.maximumf %9, %12 : vector<32x50xf32>
    %c0_6 = arith.constant 0 : index
    %c0_7 = arith.constant 0 : index
    %c0_8 = arith.constant 0 : index
    %14 = vector.load %arg4[%c0_6, %c0_7, %c0_8] : memref<1x32x50xf32, #tpu.memory_space<vmem>>, vector<1x32x50xf32>
    %15 = vector.shape_cast %14 : vector<1x32x50xf32> to vector<32x50xf32>
    %16 = vector.shape_cast %13 : vector<32x50xf32> to vector<1x32x50xf32>
    tpu.vector_store %arg4[%c0_6, %c0_7, %c0_8], %16 {strides = array<i32>} : memref<1x32x50xf32, #tpu.memory_space<vmem>>, vector<1x32x50xf32>,
    return
  }
  func.func @transform_0(%arg0: i32) -> (i32, i32, i32) {
    %c0_i32 = arith.constant 0 : i32
    %c0_i32_0 = arith.constant 0 : i32
    %c0_i32_1 = arith.constant 0 : i32
    return %arg0, %c0_i32, %c0_i32_0 : i32, i32, i32
  }
  func.func @transform_1(%arg0: i32) -> (i32, i32) {
    %c0_i32 = arith.constant 0 : i32
    %c0_i32_0 = arith.constant 0 : i32
    %c0_i32_1 = arith.constant 0 : i32
    return %c0_i32, %c0_i32_0 : i32, i32
  }
  func.func @transform_2(%arg0: i32) -> (i32, i32) {
    %c0_i32 = arith.constant 0 : i32
    %c0_i32_0 = arith.constant 0 : i32
    %c0_i32_1 = arith.constant 0 : i32
    return %c0_i32, %c0_i32_0 : i32, i32
  }
  func.func @transform_3(%arg0: i32) -> (i32, i32, i32) {
    %c0_i32 = arith.constant 0 : i32
    %c0_i32_0 = arith.constant 0 : i32
    %c0_i32_1 = arith.constant 0 : i32
    return %arg0, %c0_i32, %c0_i32_0 : i32, i32, i32
  }
}

module attributes {stable_mosaic.version = 11 : i64} {
  func.func @_fc_stack_kernel(%arg0: i32, %arg1: memref<1x2x800xf32, #tpu.memory_space<vmem>>, %arg2: memref<800x500xf32, #tpu.memory_space<vmem>>, %arg3: memref<1x500xf32, #tpu.memory_space<vmem>>, %arg4: memref<500x10xf32, #tpu.memory_space<vmem>>, %arg5: memref<1x10xf32, #tpu.memory_space<vmem>>, %arg6: memref<10x2xf32, #tpu.memory_space<vmem>>, %arg7: memref<1x2xf32, #tpu.memory_space<vmem>>, %arg8: memref<1x2x2xf32, #tpu.memory_space<vmem>>) attributes {dimension_semantics = [#tpu.dimension_semantics<parallel>], iteration_bounds = array<i64: 2>, scalar_prefetch = 0 : i64, scratch_operands = 0 : i64, tpu.core_type = #tpu.core_type<tc>, window_params = [{transform_indices = @transform_0, window_bounds = array<i64: 1, 2, 800>}, {pipeline_mode = #tpu.pipeline_mode<synchronous>, transform_indices = @transform_1, window_bounds = array<i64: 800, 500>}, {pipeline_mode = #tpu.pipeline_mode<synchronous>, transform_indices = @transform_2, window_bounds = array<i64: 1, 500>}, {pipeline_mode = #tpu.pipeline_mode<synchronous>, transform_indices = @transform_3, window_bounds = array<i64: 500, 10>}, {pipeline_mode = #tpu.pipeline_mode<synchronous>, transform_indices = @transform_4, window_bounds = array<i64: 1, 10>}, {pipeline_mode = #tpu.pipeline_mode<synchronous>, transform_indices = @transform_5, window_bounds = array<i64: 10, 2>}, {pipeline_mode = #tpu.pipeline_mode<synchronous>, transform_indices = @transform_6, window_bounds = array<i64: 1, 2>}, {transform_indices = @transform_7, window_bounds = array<i64: 1, 2, 2>}]} {
    %c0 = arith.constant 0 : index
    %c0_0 = arith.constant 0 : index
    %c0_1 = arith.constant 0 : index
    %0 = vector.load %arg1[%c0, %c0_0, %c0_1] : memref<1x2x800xf32, #tpu.memory_space<vmem>>, vector<1x2x800xf32>
    %1 = vector.shape_cast %0 : vector<1x2x800xf32> to vector<2x800xf32>
    %c0_2 = arith.constant 0 : index
    %c0_3 = arith.constant 0 : index
    %2 = vector.load %arg2[%c0_2, %c0_3] : memref<800x500xf32, #tpu.memory_space<vmem>>, vector<800x500xf32>
    %cst = arith.constant dense<0.000000e+00> : vector<2x500xf32>
    %3 = tpu.matmul %1, %2, %cst {dimension_numbers = #tpu.dot_dimension_numbers<[1], [0], [0], [1], [0, 0, 1, 1], [], []>} : vector<2x800xf32>, vector<800x500xf32>, vector<2x500xf32> -> vector<2x500xf32>
    %c0_4 = arith.constant 0 : index
    %c0_5 = arith.constant 0 : index
    %4 = vector.load %arg3[%c0_4, %c0_5] : memref<1x500xf32, #tpu.memory_space<vmem>>, vector<1x500xf32>
    %5 = vector.broadcast %4 : vector<1x500xf32> to vector<2x500xf32>
    %6 = arith.addf %3, %5 : vector<2x500xf32>
    %cst_6 = arith.constant 0.000000e+00 : f32
    %7 = vector.broadcast %cst_6 : f32 to vector<2x500xf32>
    %8 = arith.maximumf %6, %7 : vector<2x500xf32>
    %c0_7 = arith.constant 0 : index
    %c0_8 = arith.constant 0 : index
    %9 = vector.load %arg4[%c0_7, %c0_8] : memref<500x10xf32, #tpu.memory_space<vmem>>, vector<500x10xf32>
    %cst_9 = arith.constant dense<0.000000e+00> : vector<2x10xf32>
    %10 = tpu.matmul %8, %9, %cst_9 {dimension_numbers = #tpu.dot_dimension_numbers<[1], [0], [0], [1], [0, 0, 1, 1], [], []>} : vector<2x500xf32>, vector<500x10xf32>, vector<2x10xf32> -> vector<2x10xf32>
    %c0_10 = arith.constant 0 : index
    %c0_11 = arith.constant 0 : index
    %11 = vector.load %arg5[%c0_10, %c0_11] : memref<1x10xf32, #tpu.memory_space<vmem>>, vector<1x10xf32>
    %12 = vector.broadcast %11 : vector<1x10xf32> to vector<2x10xf32>
    %13 = arith.addf %10, %12 : vector<2x10xf32>
    %c0_12 = arith.constant 0 : index
    %c0_13 = arith.constant 0 : index
    %14 = vector.load %arg6[%c0_12, %c0_13] : memref<10x2xf32, #tpu.memory_space<vmem>>, vector<10x2xf32>
    %cst_14 = arith.constant dense<0.000000e+00> : vector<2x2xf32>
    %15 = tpu.matmul %13, %14, %cst_14 {dimension_numbers = #tpu.dot_dimension_numbers<[1], [0], [0], [1], [0, 0, 1, 1], [], []>} : vector<2x10xf32>, vector<10x2xf32>, vector<2x2xf32> -> vector<2x2xf32>
    %c0_15 = arith.constant 0 : index
    %c0_16 = arith.constant 0 : index
    %16 = vector.load %arg7[%c0_15, %c0_16] : memref<1x2xf32, #tpu.memory_space<vmem>>, vector<1x2xf32>
    %17 = vector.broadcast %16 : vector<1x2xf32> to vector<2x2xf32>
    %18 = arith.addf %15, %17 : vector<2x2xf32>
    %c0_17 = arith.constant 0 : index
    %c0_18 = arith.constant 0 : index
    %c0_19 = arith.constant 0 : index
    %19 = vector.load %arg8[%c0_17, %c0_18, %c0_19] : memref<1x2x2xf32, #tpu.memory_space<vmem>>, vector<1x2x2xf32>
    %20 = vector.shape_cast %19 : vector<1x2x2xf32> to vector<2x2xf32>
    %21 = vector.shape_cast %18 : vector<2x2xf32> to vector<1x2x2xf32>
    tpu.vector_store %arg8[%c0_17, %c0_18, %c0_19], %21 {strides = array<i32>} : memref<1x2x2xf32, #tpu.memory_space<vmem>>, vector<1x2x2xf32>,
    return
  }
  func.func @transform_0(%arg0: i32) -> (i32, i32, i32) {
    %c0_i32 = arith.constant 0 : i32
    %c0_i32_0 = arith.constant 0 : i32
    %c0_i32_1 = arith.constant 0 : i32
    return %arg0, %c0_i32, %c0_i32_0 : i32, i32, i32
  }
  func.func @transform_1(%arg0: i32) -> (i32, i32) {
    %c0_i32 = arith.constant 0 : i32
    %c0_i32_0 = arith.constant 0 : i32
    %c0_i32_1 = arith.constant 0 : i32
    return %c0_i32, %c0_i32_0 : i32, i32
  }
  func.func @transform_2(%arg0: i32) -> (i32, i32) {
    %c0_i32 = arith.constant 0 : i32
    %c0_i32_0 = arith.constant 0 : i32
    %c0_i32_1 = arith.constant 0 : i32
    return %c0_i32, %c0_i32_0 : i32, i32
  }
  func.func @transform_3(%arg0: i32) -> (i32, i32) {
    %c0_i32 = arith.constant 0 : i32
    %c0_i32_0 = arith.constant 0 : i32
    %c0_i32_1 = arith.constant 0 : i32
    return %c0_i32, %c0_i32_0 : i32, i32
  }
  func.func @transform_4(%arg0: i32) -> (i32, i32) {
    %c0_i32 = arith.constant 0 : i32
    %c0_i32_0 = arith.constant 0 : i32
    %c0_i32_1 = arith.constant 0 : i32
    return %c0_i32, %c0_i32_0 : i32, i32
  }
  func.func @transform_5(%arg0: i32) -> (i32, i32) {
    %c0_i32 = arith.constant 0 : i32
    %c0_i32_0 = arith.constant 0 : i32
    %c0_i32_1 = arith.constant 0 : i32
    return %c0_i32, %c0_i32_0 : i32, i32
  }
  func.func @transform_6(%arg0: i32) -> (i32, i32) {
    %c0_i32 = arith.constant 0 : i32
    %c0_i32_0 = arith.constant 0 : i32
    %c0_i32_1 = arith.constant 0 : i32
    return %c0_i32, %c0_i32_0 : i32, i32
  }
  func.func @transform_7(%arg0: i32) -> (i32, i32, i32) {
    %c0_i32 = arith.constant 0 : i32
    %c0_i32_0 = arith.constant 0 : i32
    %c0_i32_1 = arith.constant 0 : i32
    return %arg0, %c0_i32, %c0_i32_0 : i32, i32, i32
  }
}

</mosaic_0001>

<llo_original>
// kernel: forward.3
$region0: #{forward.3}
  #allocation0 [shape = 'u32[]', space=smem, size = 0x4, offset = 0x4, fixed_abs, tag = 'smem constant byte address 0x4 - core index']
  #allocation1 [shape = 'u32[144,128]{1,0:T(1,128)}', space=vmem, size = 0x12000, scoped, tag = 'internal scratch']
  %s0 = inlined_call_operand.vmem [shape: f32[2,1152,25], index: 0, kind: input, shape index: {}]
  %s1 = inlined_call_operand.vmem [shape: f32[25,20], index: 1, kind: input, shape index: {}]
  %s2 = inlined_call_operand.vmem [shape: f32[1,20], index: 2, kind: input, shape index: {}]
  %s3 = inlined_call_operand.vmem [shape: f32[2,288,20], index: 3, kind: output, shape index: {}]
  %s4 = sld [smem:[#allocation0]]
  $region45: #{forward.3} parent=0
    _
  %s6 = ssub.s32 1, %s4
  %s7 = scalar_select 0, %s6, %s4
  loop: start=0, step=1, limit=4
  $region2: #{forward.3} parent=0 // loop_pre_header
    _
  $region3: #{forward.3} parent=0 // loop_header
    %s9 = sphi 0, %s13
    %p10 = scmp.ge.s32.totalorder %s9, 4
    %s19 = sphi 0, %s21
    %s22 = sphi 0, %s19
    %s23 = sphi 0, %s22
    %s39 = sphi 0, %s23
    %s43 = sphi 0, %s43
    %s45 = sphi 0, %s43
    %s46 = sphi 0, %s45
    %s60 = sphi 0, %s46
    %s64 = sphi 0, %s64
    %s66 = sphi 0, %s64
    %s67 = sphi 0, %s66
    %s81 = sphi 0, %s67
    %s87 = sphi 0, %s89
    %s90 = sphi 0, %s87
    %s91 = sphi 0, %s90
    %s107 = sphi 0, %s91
  $region4: #{forward.3} parent=0 // loop_header_branch
    %12 = sbr.rel (%p10) target = $region8
  $region5: #{forward.3} parent=0 // loop_body
    %s14 = ssub.s32 %s9, 1
    %s15 = ssub.s32 %s9, 2
    %s16 = sadd.s32 %s9, 1
    %s17 = ssub.s32 %s9, %s16
    %p18 = scmp.eq.s32.totalorder %s17, 0
    %s20 = sadd.s32 %s19, 1
    %s21 = scalar_select %p18, %s19, %s20
    %p24 = pneg %p18
    %p25 = scmp.eq.s32.totalorder %s9, 1
    %p26 = por %p24, %p25
    %p27 = scmp.ne.s32.totalorder %s19, %s22
    %p28 = scmp.eq.s32.totalorder %s9, 0
    %p29 = por %p27, %p28
    %p30 = scmp.ne.s32.totalorder %s19, %s22
    %p31 = scmp.eq.s32.totalorder %s14, 1
    %p32 = por %p30, %p31
    %p33 = scmp.ne.s32.totalorder %s22, %s23
    %p34 = scmp.eq.s32.totalorder %s14, 0
    %p35 = por %p33, %p34
    %p36 = scmp.ne.s32.totalorder %s22, %s23
    %p37 = scmp.eq.s32.totalorder %s15, 1
    %p38 = por %p36, %p37
    %p40 = scmp.ne.s32.totalorder %s23, %s39
    %p41 = scmp.eq.s32.totalorder %s15, 0
    %p42 = por %p40, %p41
    %s44 = sadd.s32 %s43, 1
    %p47 = scmp.eq.s32.totalorder %s9, 1
    %p48 = scmp.ne.s32.totalorder %s43, %s45
    %p49 = scmp.eq.s32.totalorder %s9, 0
    %p50 = por %p48, %p49
    %p51 = scmp.ne.s32.totalorder %s43, %s45
    %p52 = scmp.eq.s32.totalorder %s14, 1
    %p53 = por %p51, %p52
    %p54 = scmp.ne.s32.totalorder %s45, %s46
    %p55 = scmp.eq.s32.totalorder %s14, 0
    %p56 = por %p54, %p55
    %p57 = scmp.ne.s32.totalorder %s45, %s46
    %p58 = scmp.eq.s32.totalorder %s15, 1
    %p59 = por %p57, %p58
    %p61 = scmp.ne.s32.totalorder %s46, %s60
    %p62 = scmp.eq.s32.totalorder %s15, 0
    %p63 = por %p61, %p62
    %s65 = sadd.s32 %s64, 1
    %p68 = scmp.eq.s32.totalorder %s9, 1
    %p69 = scmp.ne.s32.totalorder %s64, %s66
    %p70 = scmp.eq.s32.totalorder %s9, 0
    %p71 = por %p69, %p70
    %p72 = scmp.ne.s32.totalorder %s64, %s66
    %p73 = scmp.eq.s32.totalorder %s14, 1
    %p74 = por %p72, %p73
    %p75 = scmp.ne.s32.totalorder %s66, %s67
    %p76 = scmp.eq.s32.totalorder %s14, 0
    %p77 = por %p75, %p76
    %p78 = scmp.ne.s32.totalorder %s66, %s67
    %p79 = scmp.eq.s32.totalorder %s15, 1
    %p80 = por %p78, %p79
    %p82 = scmp.ne.s32.totalorder %s67, %s81
    %p83 = scmp.eq.s32.totalorder %s15, 0
    %p84 = por %p82, %p83
    %s85 = ssub.s32 %s9, %s16
    %p86 = scmp.eq.s32.totalorder %s85, 0
    %s88 = sadd.s32 %s87, 1
    %s89 = scalar_select %p86, %s87, %s88
    %p92 = pneg %p86
    %p93 = scmp.eq.s32.totalorder %s9, 1
    %p94 = por %p92, %p93
    %p95 = scmp.ne.s32.totalorder %s87, %s90
    %p96 = scmp.eq.s32.totalorder %s9, 0
    %p97 = por %p95, %p96
    %p98 = scmp.ne.s32.totalorder %s87, %s90
    %p99 = scmp.eq.s32.totalorder %s14, 1
    %p100 = por %p98, %p99
    %p101 = scmp.ne.s32.totalorder %s90, %s91
    %p102 = scmp.eq.s32.totalorder %s14, 0
    %p103 = por %p101, %p102
    %p104 = scmp.ne.s32.totalorder %s90, %s91
    %p105 = scmp.eq.s32.totalorder %s15, 1
    %p106 = por %p104, %p105
    %p108 = scmp.ne.s32.totalorder %s91, %s107
    %p109 = scmp.eq.s32.totalorder %s15, 0
    %p110 = por %p108, %p109
    %p111 = scmp.le.s32.totalorder 1, %s9
    %p112 = scmp.lt.s32.totalorder %s9, 3
    %p113 = pnand %p111, %p112
    %p114 = pneg %p113
    // Predicated region
    $region9: #{forward.3} parent=5 // pred_check
      _
    $region10: #{forward.3} parent=5 // pred_check_branch
      %116 = sbr.rel (%p113) target = $region12
    $region11: #{forward.3} parent=5 // pred_region
      %s117 = ssub.s32 %s9, 1
      // Predicated region
      $region13: #{forward.3} parent=11 // pred_check
        %p118 = pneg %p56
      $region14: #{forward.3} parent=11 // pred_check_branch
        %120 = sbr.rel (%p118) target = $region16
      $region15: #{forward.3} parent=11 // pred_region
        _
      $region16: #{forward.3} parent=11 // pred_fallthru
        _
      // Predicated region
      $region17: #{forward.3} parent=11 // pred_check
        %p121 = pneg %p77
      $region18: #{forward.3} parent=11 // pred_check_branch
        %123 = sbr.rel (%p121) target = $region20
      $region19: #{forward.3} parent=11 // pred_region
        _
      $region20: #{forward.3} parent=11 // pred_fallthru
        _
    $region12: #{forward.3} parent=5 // pred_fallthru
      _
    %p124 = scmp.lt.s32.totalorder %s9, 2
    // Predicated region
    $region21: #{forward.3} parent=5 // pred_check
      %p125 = pneg %p124
    $region22: #{forward.3} parent=5 // pred_check_branch
      %127 = sbr.rel (%p125) target = $region24
    $region23: #{forward.3} parent=5 // pred_region
      // Predicated region
      $region25: #{forward.3} parent=23 // pred_check
        %p128 = pneg %p29
      $region26: #{forward.3} parent=23 // pred_check_branch
        %130 = sbr.rel (%p128) target = $region28
      $region27: #{forward.3} parent=23 // pred_region
        %p131 = scmp.lt.s32.totalorder %s9, 1
        %s132 = scalar_select %p131, %s9, 1
        %s133 = smul.addr %s132, 144
        %s134 = smul.addr %s133, 8
        %s135 = scalar_lea.vmem %s0, %s134
      $region28: #{forward.3} parent=23 // pred_fallthru
        _
    $region24: #{forward.3} parent=5 // pred_fallthru
      _
    %p136 = scmp.le.s32.totalorder 1, %s9
    %p137 = scmp.lt.s32.totalorder %s9, 3
    %p138 = pnand %p136, %p137
    %p139 = pneg %p138
    // Predicated region
    $region29: #{forward.3} parent=5 // pred_check
      _
    $region30: #{forward.3} parent=5 // pred_check_branch
      %141 = sbr.rel (%p138) target = $region32
    $region31: #{forward.3} parent=5 // pred_region
      %s142 = ssub.s32 %s9, 1
      %p143 = scmp.lt.s32.totalorder %s14, 1
      %s144 = scalar_select %p143, %s14, 1
      %s145 = smul.addr %s144, 144
      %s146 = smul.addr %s145, 8
      %s147 = scalar_lea.vmem %s0, %s146
      %p148 = pneg %p35
      %p149 = pneg %p32
      %p150 = pneg %p56
      %p151 = pneg %p53
      %p152 = pneg %p77
      %p153 = pneg %p74
      %p154 = pneg %p103
      %p155 = pneg %p100
      %p156 = scmp.lt.s32.totalorder %s14, 1
      %s157 = scalar_select %p156, %s14, 1
      %s158 = smul.addr %s157, 36
      %s159 = smul.addr %s158, 8
      %s160 = scalar_lea.vmem %s3, %s159
      %p161 = scmp.lt.s32.totalorder %s14, 1
      %s162 = scalar_select %p161, %s14, 1
      %s163 = smul.addr %s162, 144
      %s164 = smul.addr %s163, 8
      %s165 = scalar_lea.vmem %s0, %s164
      %p166 = scmp.lt.s32.totalorder %s14, 1
      %s167 = scalar_select %p166, %s14, 1
      %s168 = smul.addr %s167, 36
      %s169 = smul.addr %s168, 8
      %s170 = scalar_lea.vmem %s3, %s169
      %v171 = vld [vmem:[%s165] sm:$0xff]
      %v172 = vld [vmem:[%s165 + $0x8] sm:$0xff]
      %v173 = vld [vmem:[%s165 + $0x10] sm:$0xff]
      %v174 = vld [vmem:[%s165 + $0x18] sm:$0xff]
      %v175 = vld [vmem:[%s165 + $0x20] sm:$0xff]
      %v176 = vld [vmem:[%s165 + $0x28] sm:$0xff]
      %v177 = vld [vmem:[%s165 + $0x30] sm:$0xff]
      %v178 = vld [vmem:[%s165 + $0x38] sm:$0xff]
      %v179 = vld [vmem:[%s165 + $0x40] sm:$0xff]
      %v180 = vld [vmem:[%s165 + $0x48] sm:$0xff]
      %v181 = vld [vmem:[%s165 + $0x50] sm:$0xff]
      %v182 = vld [vmem:[%s165 + $0x58] sm:$0xff]
      %v183 = vld [vmem:[%s165 + $0x60] sm:$0xff]
      %v184 = vld [vmem:[%s165 + $0x68] sm:$0xff]
      %v185 = vld [vmem:[%s165 + $0x70] sm:$0xff]
      %v186 = vld [vmem:[%s165 + $0x78] sm:$0xff]
      %v187 = vld [vmem:[%s165 + $0x80] sm:$0xff]
      %v188 = vld [vmem:[%s165 + $0x88] sm:$0xff]
      %v189 = vld [vmem:[%s165 + $0x90] sm:$0xff]
      %v190 = vld [vmem:[%s165 + $0x98] sm:$0xff]
      %v191 = vld [vmem:[%s165 + $0xa0] sm:$0xff]
      %v192 = vld [vmem:[%s165 + $0xa8] sm:$0xff]
      %v193 = vld [vmem:[%s165 + $0xb0] sm:$0xff]
      %v194 = vld [vmem:[%s165 + $0xb8] sm:$0xff]
      %v195 = vld [vmem:[%s165 + $0xc0] sm:$0xff]
      %v196 = vld [vmem:[%s165 + $0xc8] sm:$0xff]
      %v197 = vld [vmem:[%s165 + $0xd0] sm:$0xff]
      %v198 = vld [vmem:[%s165 + $0xd8] sm:$0xff]
      %v199 = vld [vmem:[%s165 + $0xe0] sm:$0xff]
      %v200 = vld [vmem:[%s165 + $0xe8] sm:$0xff]
      %v201 = vld [vmem:[%s165 + $0xf0] sm:$0xff]
      %v202 = vld [vmem:[%s165 + $0xf8] sm:$0xff]
      %v203 = vld [vmem:[%s165 + $0x100] sm:$0xff]
      %v204 = vld [vmem:[%s165 + $0x108] sm:$0xff]
      %v205 = vld [vmem:[%s165 + $0x110] sm:$0xff]
      %v206 = vld [vmem:[%s165 + $0x118] sm:$0xff]
      %v207 = vld [vmem:[%s165 + $0x120] sm:$0xff]
      %v208 = vld [vmem:[%s165 + $0x128] sm:$0xff]
      %v209 = vld [vmem:[%s165 + $0x130] sm:$0xff]
      %v210 = vld [vmem:[%s165 + $0x138] sm:$0xff]
      %v211 = vld [vmem:[%s165 + $0x140] sm:$0xff]
      %v212 = vld [vmem:[%s165 + $0x148] sm:$0xff]
      %v213 = vld [vmem:[%s165 + $0x150] sm:$0xff]
      %v214 = vld [vmem:[%s165 + $0x158] sm:$0xff]
      %v215 = vld [vmem:[%s165 + $0x160] sm:$0xff]
      %v216 = vld [vmem:[%s165 + $0x168] sm:$0xff]
      %v217 = vld [vmem:[%s165 + $0x170] sm:$0xff]
      %v218 = vld [vmem:[%s165 + $0x178] sm:$0xff]
      %v219 = vld [vmem:[%s165 + $0x180] sm:$0xff]
      %v220 = vld [vmem:[%s165 + $0x188] sm:$0xff]
      %v221 = vld [vmem:[%s165 + $0x190] sm:$0xff]
      %v222 = vld [vmem:[%s165 + $0x198] sm:$0xff]
      %v223 = vld [vmem:[%s165 + $0x1a0] sm:$0xff]
      %v224 = vld [vmem:[%s165 + $0x1a8] sm:$0xff]
      %v225 = vld [vmem:[%s165 + $0x1b0] sm:$0xff]
      %v226 = vld [vmem:[%s165 + $0x1b8] sm:$0xff]
      %v227 = vld [vmem:[%s165 + $0x1c0] sm:$0xff]
      %v228 = vld [vmem:[%s165 + $0x1c8] sm:$0xff]
      %v229 = vld [vmem:[%s165 + $0x1d0] sm:$0xff]
      %v230 = vld [vmem:[%s165 + $0x1d8] sm:$0xff]
      %v231 = vld [vmem:[%s165 + $0x1e0] sm:$0xff]
      %v232 = vld [vmem:[%s165 + $0x1e8] sm:$0xff]
      %v233 = vld [vmem:[%s165 + $0x1f0] sm:$0xff]
      %v234 = vld [vmem:[%s165 + $0x1f8] sm:$0xff]
      %v235 = vld [vmem:[%s165 + $0x200] sm:$0xff]
      %v236 = vld [vmem:[%s165 + $0x208] sm:$0xff]
      %v237 = vld [vmem:[%s165 + $0x210] sm:$0xff]
      %v238 = vld [vmem:[%s165 + $0x218] sm:$0xff]
      %v239 = vld [vmem:[%s165 + $0x220] sm:$0xff]
      %v240 = vld [vmem:[%s165 + $0x228] sm:$0xff]
      %v241 = vld [vmem:[%s165 + $0x230] sm:$0xff]
      %v242 = vld [vmem:[%s165 + $0x238] sm:$0xff]
      %v243 = vld [vmem:[%s165 + $0x240] sm:$0xff]
      %v244 = vld [vmem:[%s165 + $0x248] sm:$0xff]
      %v245 = vld [vmem:[%s165 + $0x250] sm:$0xff]
      %v246 = vld [vmem:[%s165 + $0x258] sm:$0xff]
      %v247 = vld [vmem:[%s165 + $0x260] sm:$0xff]
      %v248 = vld [vmem:[%s165 + $0x268] sm:$0xff]
      %v249 = vld [vmem:[%s165 + $0x270] sm:$0xff]
      %v250 = vld [vmem:[%s165 + $0x278] sm:$0xff]
      %v251 = vld [vmem:[%s165 + $0x280] sm:$0xff]
      %v252 = vld [vmem:[%s165 + $0x288] sm:$0xff]
      %v253 = vld [vmem:[%s165 + $0x290] sm:$0xff]
      %v254 = vld [vmem:[%s165 + $0x298] sm:$0xff]
      %v255 = vld [vmem:[%s165 + $0x2a0] sm:$0xff]
      %v256 = vld [vmem:[%s165 + $0x2a8] sm:$0xff]
      %v257 = vld [vmem:[%s165 + $0x2b0] sm:$0xff]
      %v258 = vld [vmem:[%s165 + $0x2b8] sm:$0xff]
      %v259 = vld [vmem:[%s165 + $0x2c0] sm:$0xff]
      %v260 = vld [vmem:[%s165 + $0x2c8] sm:$0xff]
      %v261 = vld [vmem:[%s165 + $0x2d0] sm:$0xff]
      %v262 = vld [vmem:[%s165 + $0x2d8] sm:$0xff]
      %v263 = vld [vmem:[%s165 + $0x2e0] sm:$0xff]
      %v264 = vld [vmem:[%s165 + $0x2e8] sm:$0xff]
      %v265 = vld [vmem:[%s165 + $0x2f0] sm:$0xff]
      %v266 = vld [vmem:[%s165 + $0x2f8] sm:$0xff]
      %v267 = vld [vmem:[%s165 + $0x300] sm:$0xff]
      %v268 = vld [vmem:[%s165 + $0x308] sm:$0xff]
      %v269 = vld [vmem:[%s165 + $0x310] sm:$0xff]
      %v270 = vld [vmem:[%s165 + $0x318] sm:$0xff]
      %v271 = vld [vmem:[%s165 + $0x320] sm:$0xff]
      %v272 = vld [vmem:[%s165 + $0x328] sm:$0xff]
      %v273 = vld [vmem:[%s165 + $0x330] sm:$0xff]
      %v274 = vld [vmem:[%s165 + $0x338] sm:$0xff]
      %v275 = vld [vmem:[%s165 + $0x340] sm:$0xff]
      %v276 = vld [vmem:[%s165 + $0x348] sm:$0xff]
      %v277 = vld [vmem:[%s165 + $0x350] sm:$0xff]
      %v278 = vld [vmem:[%s165 + $0x358] sm:$0xff]
      %v279 = vld [vmem:[%s165 + $0x360] sm:$0xff]
      %v280 = vld [vmem:[%s165 + $0x368] sm:$0xff]
      %v281 = vld [vmem:[%s165 + $0x370] sm:$0xff]
      %v282 = vld [vmem:[%s165 + $0x378] sm:$0xff]
      %v283 = vld [vmem:[%s165 + $0x380] sm:$0xff]
      %v284 = vld [vmem:[%s165 + $0x388] sm:$0xff]
      %v285 = vld [vmem:[%s165 + $0x390] sm:$0xff]
      %v286 = vld [vmem:[%s165 + $0x398] sm:$0xff]
      %v287 = vld [vmem:[%s165 + $0x3a0] sm:$0xff]
      %v288 = vld [vmem:[%s165 + $0x3a8] sm:$0xff]
      %v289 = vld [vmem:[%s165 + $0x3b0] sm:$0xff]
      %v290 = vld [vmem:[%s165 + $0x3b8] sm:$0xff]
      %v291 = vld [vmem:[%s165 + $0x3c0] sm:$0xff]
      %v292 = vld [vmem:[%s165 + $0x3c8] sm:$0xff]
      %v293 = vld [vmem:[%s165 + $0x3d0] sm:$0xff]
      %v294 = vld [vmem:[%s165 + $0x3d8] sm:$0xff]
      %v295 = vld [vmem:[%s165 + $0x3e0] sm:$0xff]
      %v296 = vld [vmem:[%s165 + $0x3e8] sm:$0xff]
      %v297 = vld [vmem:[%s165 + $0x3f0] sm:$0xff]
      %v298 = vld [vmem:[%s165 + $0x3f8] sm:$0xff]
      %v299 = vld [vmem:[%s165 + $0x400] sm:$0xff]
      %v300 = vld [vmem:[%s165 + $0x408] sm:$0xff]
      %v301 = vld [vmem:[%s165 + $0x410] sm:$0xff]
      %v302 = vld [vmem:[%s165 + $0x418] sm:$0xff]
      %v303 = vld [vmem:[%s165 + $0x420] sm:$0xff]
      %v304 = vld [vmem:[%s165 + $0x428] sm:$0xff]
      %v305 = vld [vmem:[%s165 + $0x430] sm:$0xff]
      %v306 = vld [vmem:[%s165 + $0x438] sm:$0xff]
      %v307 = vld [vmem:[%s165 + $0x440] sm:$0xff]
      %v308 = vld [vmem:[%s165 + $0x448] sm:$0xff]
      %v309 = vld [vmem:[%s165 + $0x450] sm:$0xff]
      %v310 = vld [vmem:[%s165 + $0x458] sm:$0xff]
      %v311 = vld [vmem:[%s165 + $0x460] sm:$0xff]
      %v312 = vld [vmem:[%s165 + $0x468] sm:$0xff]
      %v313 = vld [vmem:[%s165 + $0x470] sm:$0xff]
      %v314 = vld [vmem:[%s165 + $0x478] sm:$0xff]
      %v315 = vld [vmem:[%s1] sm:$0xff]
      %v316 = vld [vmem:[%s1 + $0x8] sm:$0xff]
      %v317 = vld [vmem:[%s1 + $0x10] sm:$0xff]
      %v318 = vld [vmem:[%s1 + $0x18] sm:$0x1]
      %v319 = vld [vmem:[%s2] sm:$0x1]
      %v321 = vlaneseq
      %v322 = vshrl.u32 %v321, 7
      %v323 = vsub.s32 0, %v322
      %v324 = vrot.slane %v319, %v323
      %vm326 = vcmask 203776
      %v328 = vsel %vm326, %v171, 0
      %v331 = vsel %vm326, %v172, 0
      %v334 = vsel %vm326, %v173, 0
      %v337 = vsel %vm326, %v174, 0
      %v340 = vsel %vm326, %v175, 0
      %v343 = vsel %vm326, %v176, 0
      %v346 = vsel %vm326, %v177, 0
      %v349 = vsel %vm326, %v178, 0
      %v352 = vsel %vm326, %v179, 0
      %v355 = vsel %vm326, %v180, 0
      %v358 = vsel %vm326, %v181, 0
      %v361 = vsel %vm326, %v182, 0
      %v364 = vsel %vm326, %v183, 0
      %v367 = vsel %vm326, %v184, 0
      %v370 = vsel %vm326, %v185, 0
      %v373 = vsel %vm326, %v186, 0
      %v376 = vsel %vm326, %v187, 0
      %v379 = vsel %vm326, %v188, 0
      %v382 = vsel %vm326, %v189, 0
      %v385 = vsel %vm326, %v190, 0
      %v388 = vsel %vm326, %v191, 0
      %v391 = vsel %vm326, %v192, 0
      %v394 = vsel %vm326, %v193, 0
      %v397 = vsel %vm326, %v194, 0
      %v400 = vsel %vm326, %v195, 0
      %v403 = vsel %vm326, %v196, 0
      %v406 = vsel %vm326, %v197, 0
      %v409 = vsel %vm326, %v198, 0
      %v412 = vsel %vm326, %v199, 0
      %v415 = vsel %vm326, %v200, 0
      %v418 = vsel %vm326, %v201, 0
      %v421 = vsel %vm326, %v202, 0
      %v424 = vsel %vm326, %v203, 0
      %v427 = vsel %vm326, %v204, 0
      %v430 = vsel %vm326, %v205, 0
      %v433 = vsel %vm326, %v206, 0
      %v436 = vsel %vm326, %v207, 0
      %v439 = vsel %vm326, %v208, 0
      %v442 = vsel %vm326, %v209, 0
      %v445 = vsel %vm326, %v210, 0
      %v448 = vsel %vm326, %v211, 0
      %v451 = vsel %vm326, %v212, 0
      %v454 = vsel %vm326, %v213, 0
      %v457 = vsel %vm326, %v214, 0
      %v460 = vsel %vm326, %v215, 0
      %v463 = vsel %vm326, %v216, 0
      %v466 = vsel %vm326, %v217, 0
      %v469 = vsel %vm326, %v218, 0
      %v472 = vsel %vm326, %v219, 0
      %v475 = vsel %vm326, %v220, 0
      %v478 = vsel %vm326, %v221, 0
      %v481 = vsel %vm326, %v222, 0
      %v484 = vsel %vm326, %v223, 0
      %v487 = vsel %vm326, %v224, 0
      %v490 = vsel %vm326, %v225, 0
      %v493 = vsel %vm326, %v226, 0
      %v496 = vsel %vm326, %v227, 0
      %v499 = vsel %vm326, %v228, 0
      %v502 = vsel %vm326, %v229, 0
      %v505 = vsel %vm326, %v230, 0
      %v508 = vsel %vm326, %v231, 0
      %v511 = vsel %vm326, %v232, 0
      %v514 = vsel %vm326, %v233, 0
      %v517 = vsel %vm326, %v234, 0
      %v520 = vsel %vm326, %v235, 0
      %v523 = vsel %vm326, %v236, 0
      %v526 = vsel %vm326, %v237, 0
      %v529 = vsel %vm326, %v238, 0
      %v532 = vsel %vm326, %v239, 0
      %v535 = vsel %vm326, %v240, 0
      %v538 = vsel %vm326, %v241, 0
      %v541 = vsel %vm326, %v242, 0
      %v544 = vsel %vm326, %v243, 0
      %v547 = vsel %vm326, %v244, 0
      %v550 = vsel %vm326, %v245, 0
      %v553 = vsel %vm326, %v246, 0
      %v556 = vsel %vm326, %v247, 0
      %v559 = vsel %vm326, %v248, 0
      %v562 = vsel %vm326, %v249, 0
      %v565 = vsel %vm326, %v250, 0
      %v568 = vsel %vm326, %v251, 0
      %v571 = vsel %vm326, %v252, 0
      %v574 = vsel %vm326, %v253, 0
      %v577 = vsel %vm326, %v254, 0
      %v580 = vsel %vm326, %v255, 0
      %v583 = vsel %vm326, %v256, 0
      %v586 = vsel %vm326, %v257, 0
      %v589 = vsel %vm326, %v258, 0
      %v592 = vsel %vm326, %v259, 0
      %v595 = vsel %vm326, %v260, 0
      %v598 = vsel %vm326, %v261, 0
      %v601 = vsel %vm326, %v262, 0
      %v604 = vsel %vm326, %v263, 0
      %v607 = vsel %vm326, %v264, 0
      %v610 = vsel %vm326, %v265, 0
      %v613 = vsel %vm326, %v266, 0
      %v616 = vsel %vm326, %v267, 0
      %v619 = vsel %vm326, %v268, 0
      %v622 = vsel %vm326, %v269, 0
      %v625 = vsel %vm326, %v270, 0
      %v628 = vsel %vm326, %v271, 0
      %v631 = vsel %vm326, %v272, 0
      %v634 = vsel %vm326, %v273, 0
      %v637 = vsel %vm326, %v274, 0
      %v640 = vsel %vm326, %v275, 0
      %v643 = vsel %vm326, %v276, 0
      %v646 = vsel %vm326, %v277, 0
      %v649 = vsel %vm326, %v278, 0
      %v652 = vsel %vm326, %v279, 0
      %v655 = vsel %vm326, %v280, 0
      %v658 = vsel %vm326, %v281, 0
      %v661 = vsel %vm326, %v282, 0
      %v664 = vsel %vm326, %v283, 0
      %v667 = vsel %vm326, %v284, 0
      %v670 = vsel %vm326, %v285, 0
      %v673 = vsel %vm326, %v286, 0
      %v676 = vsel %vm326, %v287, 0
      %v679 = vsel %vm326, %v288, 0
      %v682 = vsel %vm326, %v289, 0
      %v685 = vsel %vm326, %v290, 0
      %v688 = vsel %vm326, %v291, 0
      %v691 = vsel %vm326, %v292, 0
      %v694 = vsel %vm326, %v293, 0
      %v697 = vsel %vm326, %v294, 0
      %v700 = vsel %vm326, %v295, 0
      %v703 = vsel %vm326, %v296, 0
      %v706 = vsel %vm326, %v297, 0
      %v709 = vsel %vm326, %v298, 0
      %v712 = vsel %vm326, %v299, 0
      %v715 = vsel %vm326, %v300, 0
      %v718 = vsel %vm326, %v301, 0
      %v721 = vsel %vm326, %v302, 0
      %v724 = vsel %vm326, %v303, 0
      %v727 = vsel %vm326, %v304, 0
      %v730 = vsel %vm326, %v305, 0
      %v733 = vsel %vm326, %v306, 0
      %v736 = vsel %vm326, %v307, 0
      %v739 = vsel %vm326, %v308, 0
      %v742 = vsel %vm326, %v309, 0
      %v745 = vsel %vm326, %v310, 0
      %v748 = vsel %vm326, %v311, 0
      %v751 = vsel %vm326, %v312, 0
      %v754 = vsel %vm326, %v313, 0
      %v757 = vsel %vm326, %v314, 0
      %vm759 = vcmask 1040384
      %v761 = vsel %vm759, %v318, 0
      %763 = vmatprep.subr.mxu0 0.0
      %764 = vmatpush1.msra.mxu0 0.0
      %765 = vmatprep.subr.mxu0 0.0
      %766 = vmatpush1.msra.mxu0 0.0
      %767 = vmatprep.subr.mxu0 0.0
      %768 = vmatpush1.msra.mxu0 0.0
      %769 = vmatprep.subr.mxu0 0.0
      %770 = vmatpush1.msra.mxu0 0.0
      %771 = vmatprep.subr.mxu0 0.0
      %772 = vmatpush1.msra.mxu0 0.0
      %773 = vmatprep.subr.mxu0 0.0
      %774 = vmatpush1.msra.mxu0 0.0
      %775 = vmatprep.subr.mxu0 0.0
      %776 = vmatpush1.msra.mxu0 0.0
      %777 = vmatprep.subr.mxu0 0.0
      %778 = vmatpush1.msra.mxu0 0.0
      %779 = vmatprep.subr.mxu0 0.0
      %780 = vmatpush1.msra.mxu0 0.0
      %781 = vmatprep.subr.mxu0 0.0
      %782 = vmatpush1.msra.mxu0 0.0
      %783 = vmatprep.subr.mxu0 0.0
      %784 = vmatpush1.msra.mxu0 0.0
      %785 = vmatprep.subr.mxu0 0.0
      %786 = vmatpush1.msra.mxu0 0.0
      %787 = vmatprep.subr.mxu0 0.0
      %788 = vmatpush1.msra.mxu0 %v761
      %789 = vmatprep.subr.mxu0 0.0
      %790 = vmatpush1.msra.mxu0 %v317
      %791 = vmatprep.subr.mxu0 0.0
      %792 = vmatpush1.msra.mxu0 %v316
      %793 = vmatprep.subr.mxu0 0.0
      %794 = vmatpush1.msra.mxu0 %v315
      %795 = vmatprep.subr.mxu0 0.0
      %796 = vmatpush2.msra.mxu0 0.0
      %797 = vmatprep.subr.mxu0 0.0
      %798 = vmatpush2.msra.mxu0 0.0
      %799 = vmatprep.subr.mxu0 0.0
      %800 = vmatpush2.msra.mxu0 0.0
      %801 = vmatprep.subr.mxu0 0.0
      %802 = vmatpush2.msra.mxu0 0.0
      %803 = vmatprep.subr.mxu0 0.0
      %804 = vmatpush2.msra.mxu0 0.0
      %805 = vmatprep.subr.mxu0 0.0
      %806 = vmatpush2.msra.mxu0 0.0
      %807 = vmatprep.subr.mxu0 0.0
      %808 = vmatpush2.msra.mxu0 0.0
      %809 = vmatprep.subr.mxu0 0.0
      %810 = vmatpush2.msra.mxu0 0.0
      %811 = vmatprep.subr.mxu0 0.0
      %812 = vmatpush2.msra.mxu0 0.0
      %813 = vmatprep.subr.mxu0 0.0
      %814 = vmatpush2.msra.mxu0 0.0
      %815 = vmatprep.subr.mxu0 0.0
      %816 = vmatpush2.msra.mxu0 0.0
      %817 = vmatprep.subr.mxu0 0.0
      %818 = vmatpush2.msra.mxu0 0.0
      %819 = vmatprep.subr.mxu0 0.0
      %820 = vmatpush2.msra.mxu0 0.0
      %821 = vmatprep.subr.mxu0 0.0
      %822 = vmatpush2.msra.mxu0 0.0
      %823 = vmatprep.subr.mxu0 0.0
      %824 = vmatpush2.msra.mxu0 0.0
      %825 = vmatprep.subr.mxu0 0.0
      %826 = vmatpush2.msra.mxu0 0.0
      %827 = vmatprep.mubr.f32.mxu0 0.0
      %828 = vmatmul.mubr.f32.gmra.mxu0 %v328
      %v829 = vpop.f32.mrf.mxu0
      %v830 = vadd.f32 %v324, %v829
      %v831 = vpop.f32.mrf.mxu0
      %832 = vmatprep.mubr.f32.mxu0 0.0
      %833 = vmatmul.mubr.f32.gmra.mxu0 %v331
      %v834 = vpop.f32.mrf.mxu0
      %v835 = vadd.f32 %v324, %v834
      %v836 = vpop.f32.mrf.mxu0
      %837 = vmatprep.mubr.f32.mxu0 0.0
      %838 = vmatmul.mubr.f32.gmra.mxu0 %v334
      %v839 = vpop.f32.mrf.mxu0
      %v840 = vadd.f32 %v324, %v839
      %v841 = vpop.f32.mrf.mxu0
      %842 = vmatprep.mubr.f32.mxu0 0.0
      %843 = vmatmul.mubr.f32.gmra.mxu0 %v337
      %v844 = vpop.f32.mrf.mxu0
      %v845 = vadd.f32 %v324, %v844
      %v846 = vpop.f32.mrf.mxu0
      %847 = vmatprep.mubr.f32.mxu0 0.0
      %848 = vmatmul.mubr.f32.gmra.mxu0 %v340
      %v849 = vpop.f32.mrf.mxu0
      %v850 = vadd.f32 %v324, %v849
      %v851 = vpop.f32.mrf.mxu0
      %852 = vmatprep.mubr.f32.mxu0 0.0
      %853 = vmatmul.mubr.f32.gmra.mxu0 %v343
      %v854 = vpop.f32.mrf.mxu0
      %v855 = vadd.f32 %v324, %v854
      %v856 = vpop.f32.mrf.mxu0
      %857 = vmatprep.mubr.f32.mxu0 0.0
      %858 = vmatmul.mubr.f32.gmra.mxu0 %v346
      %v859 = vpop.f32.mrf.mxu0
      %v860 = vadd.f32 %v324, %v859
      %v861 = vpop.f32.mrf.mxu0
      %862 = vmatprep.mubr.f32.mxu0 0.0
      %863 = vmatmul.mubr.f32.gmra.mxu0 %v349
      %v864 = vpop.f32.mrf.mxu0
      %v865 = vadd.f32 %v324, %v864
      %v866 = vpop.f32.mrf.mxu0
      %867 = vmatprep.mubr.f32.mxu0 0.0
      %868 = vmatmul.mubr.f32.gmra.mxu0 %v352
      %v869 = vpop.f32.mrf.mxu0
      %v870 = vadd.f32 %v324, %v869
      %v871 = vpop.f32.mrf.mxu0
      %872 = vmatprep.mubr.f32.mxu0 0.0
      %873 = vmatmul.mubr.f32.gmra.mxu0 %v355
      %v874 = vpop.f32.mrf.mxu0
      %v875 = vadd.f32 %v324, %v874
      %v876 = vpop.f32.mrf.mxu0
      %877 = vmatprep.mubr.f32.mxu0 0.0
      %878 = vmatmul.mubr.f32.gmra.mxu0 %v358
      %v879 = vpop.f32.mrf.mxu0
      %v880 = vadd.f32 %v324, %v879
      %v881 = vpop.f32.mrf.mxu0
      %882 = vmatprep.mubr.f32.mxu0 0.0
      %883 = vmatmul.mubr.f32.gmra.mxu0 %v361
      %v884 = vpop.f32.mrf.mxu0
      %v885 = vadd.f32 %v324, %v884
      %v886 = vpop.f32.mrf.mxu0
      %887 = vmatprep.mubr.f32.mxu0 0.0
      %888 = vmatmul.mubr.f32.gmra.mxu0 %v364
      %v889 = vpop.f32.mrf.mxu0
      %v890 = vadd.f32 %v324, %v889
      %v891 = vpop.f32.mrf.mxu0
      %892 = vmatprep.mubr.f32.mxu0 0.0
      %893 = vmatmul.mubr.f32.gmra.mxu0 %v367
      %v894 = vpop.f32.mrf.mxu0
      %v895 = vadd.f32 %v324, %v894
      %v896 = vpop.f32.mrf.mxu0
      %897 = vmatprep.mubr.f32.mxu0 0.0
      %898 = vmatmul.mubr.f32.gmra.mxu0 %v370
      %v899 = vpop.f32.mrf.mxu0
      %v900 = vadd.f32 %v324, %v899
      %v901 = vpop.f32.mrf.mxu0
      %902 = vmatprep.mubr.f32.mxu0 0.0
      %903 = vmatmul.mubr.f32.gmra.mxu0 %v373
      %v904 = vpop.f32.mrf.mxu0
      %v905 = vadd.f32 %v324, %v904
      %v906 = vpop.f32.mrf.mxu0
      %907 = vmatprep.mubr.f32.mxu0 0.0
      %908 = vmatmul.mubr.f32.gmra.mxu0 %v376
      %v909 = vpop.f32.mrf.mxu0
      %v910 = vadd.f32 %v324, %v909
      %v911 = vpop.f32.mrf.mxu0
      %912 = vmatprep.mubr.f32.mxu0 0.0
      %913 = vmatmul.mubr.f32.gmra.mxu0 %v379
      %v914 = vpop.f32.mrf.mxu0
      %v915 = vadd.f32 %v324, %v914
      %v916 = vpop.f32.mrf.mxu0
      %917 = vmatprep.mubr.f32.mxu0 0.0
      %918 = vmatmul.mubr.f32.gmra.mxu0 %v382
      %v919 = vpop.f32.mrf.mxu0
      %v920 = vadd.f32 %v324, %v919
      %v921 = vpop.f32.mrf.mxu0
      %922 = vmatprep.mubr.f32.mxu0 0.0
      %923 = vmatmul.mubr.f32.gmra.mxu0 %v385
      %v924 = vpop.f32.mrf.mxu0
      %v925 = vadd.f32 %v324, %v924
      %v926 = vpop.f32.mrf.mxu0
      %927 = vmatprep.mubr.f32.mxu0 0.0
      %928 = vmatmul.mubr.f32.gmra.mxu0 %v388
      %v929 = vpop.f32.mrf.mxu0
      %v930 = vadd.f32 %v324, %v929
      %v931 = vpop.f32.mrf.mxu0
      %932 = vmatprep.mubr.f32.mxu0 0.0
      %933 = vmatmul.mubr.f32.gmra.mxu0 %v391
      %v934 = vpop.f32.mrf.mxu0
      %v935 = vadd.f32 %v324, %v934
      %v936 = vpop.f32.mrf.mxu0
      %937 = vmatprep.mubr.f32.mxu0 0.0
      %938 = vmatmul.mubr.f32.gmra.mxu0 %v394
      %v939 = vpop.f32.mrf.mxu0
      %v940 = vadd.f32 %v324, %v939
      %v941 = vpop.f32.mrf.mxu0
      %942 = vmatprep.mubr.f32.mxu0 0.0
      %943 = vmatmul.mubr.f32.gmra.mxu0 %v397
      %v944 = vpop.f32.mrf.mxu0
      %v945 = vadd.f32 %v324, %v944
      %v946 = vpop.f32.mrf.mxu0
      %947 = vmatprep.mubr.f32.mxu0 0.0
      %948 = vmatmul.mubr.f32.gmra.mxu0 %v400
      %v949 = vpop.f32.mrf.mxu0
      %v950 = vadd.f32 %v324, %v949
      %v951 = vpop.f32.mrf.mxu0
      %952 = vmatprep.mubr.f32.mxu0 0.0
      %953 = vmatmul.mubr.f32.gmra.mxu0 %v403
      %v954 = vpop.f32.mrf.mxu0
      %v955 = vadd.f32 %v324, %v954
      %v956 = vpop.f32.mrf.mxu0
      %957 = vmatprep.mubr.f32.mxu0 0.0
      %958 = vmatmul.mubr.f32.gmra.mxu0 %v406
      %v959 = vpop.f32.mrf.mxu0
      %v960 = vadd.f32 %v324, %v959
      %v961 = vpop.f32.mrf.mxu0
      %962 = vmatprep.mubr.f32.mxu0 0.0
      %963 = vmatmul.mubr.f32.gmra.mxu0 %v409
      %v964 = vpop.f32.mrf.mxu0
      %v965 = vadd.f32 %v324, %v964
      %v966 = vpop.f32.mrf.mxu0
      %967 = vmatprep.mubr.f32.mxu0 0.0
      %968 = vmatmul.mubr.f32.gmra.mxu0 %v412
      %v969 = vpop.f32.mrf.mxu0
      %v970 = vadd.f32 %v324, %v969
      %v971 = vpop.f32.mrf.mxu0
      %972 = vmatprep.mubr.f32.mxu0 0.0
      %973 = vmatmul.mubr.f32.gmra.mxu0 %v415
      %v974 = vpop.f32.mrf.mxu0
      %v975 = vadd.f32 %v324, %v974
      %v976 = vpop.f32.mrf.mxu0
      %977 = vmatprep.mubr.f32.mxu0 0.0
      %978 = vmatmul.mubr.f32.gmra.mxu0 %v418
      %v979 = vpop.f32.mrf.mxu0
      %v980 = vadd.f32 %v324, %v979
      %v981 = vpop.f32.mrf.mxu0
      %982 = vmatprep.mubr.f32.mxu0 0.0
      %983 = vmatmul.mubr.f32.gmra.mxu0 %v421
      %v984 = vpop.f32.mrf.mxu0
      %v985 = vadd.f32 %v324, %v984
      %v986 = vpop.f32.mrf.mxu0
      %987 = vmatprep.mubr.f32.mxu0 0.0
      %988 = vmatmul.mubr.f32.gmra.mxu0 %v424
      %v989 = vpop.f32.mrf.mxu0
      %v990 = vadd.f32 %v324, %v989
      %v991 = vpop.f32.mrf.mxu0
      %992 = vmatprep.mubr.f32.mxu0 0.0
      %993 = vmatmul.mubr.f32.gmra.mxu0 %v427
      %v994 = vpop.f32.mrf.mxu0
      %v995 = vadd.f32 %v324, %v994
      %v996 = vpop.f32.mrf.mxu0
      %997 = vmatprep.mubr.f32.mxu0 0.0
      %998 = vmatmul.mubr.f32.gmra.mxu0 %v430
      %v999 = vpop.f32.mrf.mxu0
      %v1000 = vadd.f32 %v324, %v999
      %v1001 = vpop.f32.mrf.mxu0
      %1002 = vmatprep.mubr.f32.mxu0 0.0
      %1003 = vmatmul.mubr.f32.gmra.mxu0 %v433
      %v1004 = vpop.f32.mrf.mxu0
      %v1005 = vadd.f32 %v324, %v1004
      %v1006 = vpop.f32.mrf.mxu0
      %1007 = vmatprep.mubr.f32.mxu0 0.0
      %1008 = vmatmul.mubr.f32.gmra.mxu0 %v436
      %v1009 = vpop.f32.mrf.mxu0
      %v1010 = vadd.f32 %v324, %v1009
      %v1011 = vpop.f32.mrf.mxu0
      %1012 = vmatprep.mubr.f32.mxu0 0.0
      %1013 = vmatmul.mubr.f32.gmra.mxu0 %v439
      %v1014 = vpop.f32.mrf.mxu0
      %v1015 = vadd.f32 %v324, %v1014
      %v1016 = vpop.f32.mrf.mxu0
      %1017 = vmatprep.mubr.f32.mxu0 0.0
      %1018 = vmatmul.mubr.f32.gmra.mxu0 %v442
      %v1019 = vpop.f32.mrf.mxu0
      %v1020 = vadd.f32 %v324, %v1019
      %v1021 = vpop.f32.mrf.mxu0
      %1022 = vmatprep.mubr.f32.mxu0 0.0
      %1023 = vmatmul.mubr.f32.gmra.mxu0 %v445
      %v1024 = vpop.f32.mrf.mxu0
      %v1025 = vadd.f32 %v324, %v1024
      %v1026 = vpop.f32.mrf.mxu0
      %1027 = vmatprep.mubr.f32.mxu0 0.0
      %1028 = vmatmul.mubr.f32.gmra.mxu0 %v448
      %v1029 = vpop.f32.mrf.mxu0
      %v1030 = vadd.f32 %v324, %v1029
      %v1031 = vpop.f32.mrf.mxu0
      %1032 = vmatprep.mubr.f32.mxu0 0.0
      %1033 = vmatmul.mubr.f32.gmra.mxu0 %v451
      %v1034 = vpop.f32.mrf.mxu0
      %v1035 = vadd.f32 %v324, %v1034
      %v1036 = vpop.f32.mrf.mxu0
      %1037 = vmatprep.mubr.f32.mxu0 0.0
      %1038 = vmatmul.mubr.f32.gmra.mxu0 %v454
      %v1039 = vpop.f32.mrf.mxu0
      %v1040 = vadd.f32 %v324, %v1039
      %v1041 = vpop.f32.mrf.mxu0
      %1042 = vmatprep.mubr.f32.mxu0 0.0
      %1043 = vmatmul.mubr.f32.gmra.mxu0 %v457
      %v1044 = vpop.f32.mrf.mxu0
      %v1045 = vadd.f32 %v324, %v1044
      %v1046 = vpop.f32.mrf.mxu0
      %1047 = vmatprep.mubr.f32.mxu0 0.0
      %1048 = vmatmul.mubr.f32.gmra.mxu0 %v460
      %v1049 = vpop.f32.mrf.mxu0
      %v1050 = vadd.f32 %v324, %v1049
      %v1051 = vpop.f32.mrf.mxu0
      %1052 = vmatprep.mubr.f32.mxu0 0.0
      %1053 = vmatmul.mubr.f32.gmra.mxu0 %v463
      %v1054 = vpop.f32.mrf.mxu0
      %v1055 = vadd.f32 %v324, %v1054
      %v1056 = vpop.f32.mrf.mxu0
      %1057 = vmatprep.mubr.f32.mxu0 0.0
      %1058 = vmatmul.mubr.f32.gmra.mxu0 %v466
      %v1059 = vpop.f32.mrf.mxu0
      %v1060 = vadd.f32 %v324, %v1059
      %v1061 = vpop.f32.mrf.mxu0
      %1062 = vmatprep.mubr.f32.mxu0 0.0
      %1063 = vmatmul.mubr.f32.gmra.mxu0 %v469
      %v1064 = vpop.f32.mrf.mxu0
      %v1065 = vadd.f32 %v324, %v1064
      %v1066 = vpop.f32.mrf.mxu0
      %1067 = vmatprep.mubr.f32.mxu0 0.0
      %1068 = vmatmul.mubr.f32.gmra.mxu0 %v472
      %v1069 = vpop.f32.mrf.mxu0
      %v1070 = vadd.f32 %v324, %v1069
      %v1071 = vpop.f32.mrf.mxu0
      %1072 = vmatprep.mubr.f32.mxu0 0.0
      %1073 = vmatmul.mubr.f32.gmra.mxu0 %v475
      %v1074 = vpop.f32.mrf.mxu0
      %v1075 = vadd.f32 %v324, %v1074
      %v1076 = vpop.f32.mrf.mxu0
      %1077 = vmatprep.mubr.f32.mxu0 0.0
      %1078 = vmatmul.mubr.f32.gmra.mxu0 %v478
      %v1079 = vpop.f32.mrf.mxu0
      %v1080 = vadd.f32 %v324, %v1079
      %v1081 = vpop.f32.mrf.mxu0
      %1082 = vmatprep.mubr.f32.mxu0 0.0
      %1083 = vmatmul.mubr.f32.gmra.mxu0 %v481
      %v1084 = vpop.f32.mrf.mxu0
      %v1085 = vadd.f32 %v324, %v1084
      %v1086 = vpop.f32.mrf.mxu0
      %1087 = vmatprep.mubr.f32.mxu0 0.0
      %1088 = vmatmul.mubr.f32.gmra.mxu0 %v484
      %v1089 = vpop.f32.mrf.mxu0
      %v1090 = vadd.f32 %v324, %v1089
      %v1091 = vpop.f32.mrf.mxu0
      %1092 = vmatprep.mubr.f32.mxu0 0.0
      %1093 = vmatmul.mubr.f32.gmra.mxu0 %v487
      %v1094 = vpop.f32.mrf.mxu0
      %v1095 = vadd.f32 %v324, %v1094
      %v1096 = vpop.f32.mrf.mxu0
      %1097 = vmatprep.mubr.f32.mxu0 0.0
      %1098 = vmatmul.mubr.f32.gmra.mxu0 %v490
      %v1099 = vpop.f32.mrf.mxu0
      %v1100 = vadd.f32 %v324, %v1099
      %v1101 = vpop.f32.mrf.mxu0
      %1102 = vmatprep.mubr.f32.mxu0 0.0
      %1103 = vmatmul.mubr.f32.gmra.mxu0 %v493
      %v1104 = vpop.f32.mrf.mxu0
      %v1105 = vadd.f32 %v324, %v1104
      %v1106 = vpop.f32.mrf.mxu0
      %1107 = vmatprep.mubr.f32.mxu0 0.0
      %1108 = vmatmul.mubr.f32.gmra.mxu0 %v496
      %v1109 = vpop.f32.mrf.mxu0
      %v1110 = vadd.f32 %v324, %v1109
      %v1111 = vpop.f32.mrf.mxu0
      %1112 = vmatprep.mubr.f32.mxu0 0.0
      %1113 = vmatmul.mubr.f32.gmra.mxu0 %v499
      %v1114 = vpop.f32.mrf.mxu0
      %v1115 = vadd.f32 %v324, %v1114
      %v1116 = vpop.f32.mrf.mxu0
      %1117 = vmatprep.mubr.f32.mxu0 0.0
      %1118 = vmatmul.mubr.f32.gmra.mxu0 %v502
      %v1119 = vpop.f32.mrf.mxu0
      %v1120 = vadd.f32 %v324, %v1119
      %v1121 = vpop.f32.mrf.mxu0
      %1122 = vmatprep.mubr.f32.mxu0 0.0
      %1123 = vmatmul.mubr.f32.gmra.mxu0 %v505
      %v1124 = vpop.f32.mrf.mxu0
      %v1125 = vadd.f32 %v324, %v1124
      %v1126 = vpop.f32.mrf.mxu0
      %1127 = vmatprep.mubr.f32.mxu0 0.0
      %1128 = vmatmul.mubr.f32.gmra.mxu0 %v508
      %v1129 = vpop.f32.mrf.mxu0
      %v1130 = vadd.f32 %v324, %v1129
      %v1131 = vpop.f32.mrf.mxu0
      %1132 = vmatprep.mubr.f32.mxu0 0.0
      %1133 = vmatmul.mubr.f32.gmra.mxu0 %v511
      %v1134 = vpop.f32.mrf.mxu0
      %v1135 = vadd.f32 %v324, %v1134
      %v1136 = vpop.f32.mrf.mxu0
      %1137 = vmatprep.mubr.f32.mxu0 0.0
      %1138 = vmatmul.mubr.f32.gmra.mxu0 %v514
      %v1139 = vpop.f32.mrf.mxu0
      %v1140 = vadd.f32 %v324, %v1139
      %v1141 = vpop.f32.mrf.mxu0
      %1142 = vmatprep.mubr.f32.mxu0 0.0
      %1143 = vmatmul.mubr.f32.gmra.mxu0 %v517
      %v1144 = vpop.f32.mrf.mxu0
      %v1145 = vadd.f32 %v324, %v1144
      %v1146 = vpop.f32.mrf.mxu0
      %1147 = vmatprep.mubr.f32.mxu0 0.0
      %1148 = vmatmul.mubr.f32.gmra.mxu0 %v520
      %v1149 = vpop.f32.mrf.mxu0
      %v1150 = vadd.f32 %v324, %v1149
      %v1151 = vpop.f32.mrf.mxu0
      %1152 = vmatprep.mubr.f32.mxu0 0.0
      %1153 = vmatmul.mubr.f32.gmra.mxu0 %v523
      %v1154 = vpop.f32.mrf.mxu0
      %v1155 = vadd.f32 %v324, %v1154
      %v1156 = vpop.f32.mrf.mxu0
      %1157 = vmatprep.mubr.f32.mxu0 0.0
      %1158 = vmatmul.mubr.f32.gmra.mxu0 %v526
      %v1159 = vpop.f32.mrf.mxu0
      %v1160 = vadd.f32 %v324, %v1159
      %v1161 = vpop.f32.mrf.mxu0
      %1162 = vmatprep.mubr.f32.mxu0 0.0
      %1163 = vmatmul.mubr.f32.gmra.mxu0 %v529
      %v1164 = vpop.f32.mrf.mxu0
      %v1165 = vadd.f32 %v324, %v1164
      %v1166 = vpop.f32.mrf.mxu0
      %1167 = vmatprep.mubr.f32.mxu0 0.0
      %1168 = vmatmul.mubr.f32.gmra.mxu0 %v532
      %v1169 = vpop.f32.mrf.mxu0
      %v1170 = vadd.f32 %v324, %v1169
      %v1171 = vpop.f32.mrf.mxu0
      %1172 = vmatprep.mubr.f32.mxu0 0.0
      %1173 = vmatmul.mubr.f32.gmra.mxu0 %v535
      %v1174 = vpop.f32.mrf.mxu0
      %v1175 = vadd.f32 %v324, %v1174
      %v1176 = vpop.f32.mrf.mxu0
      %1177 = vmatprep.mubr.f32.mxu0 0.0
      %1178 = vmatmul.mubr.f32.gmra.mxu0 %v538
      %v1179 = vpop.f32.mrf.mxu0
      %v1180 = vadd.f32 %v324, %v1179
      %v1181 = vpop.f32.mrf.mxu0
      %1182 = vmatprep.mubr.f32.mxu0 0.0
      %1183 = vmatmul.mubr.f32.gmra.mxu0 %v541
      %v1184 = vpop.f32.mrf.mxu0
      %v1185 = vadd.f32 %v324, %v1184
      %v1186 = vpop.f32.mrf.mxu0
      %1187 = vmatprep.mubr.f32.mxu0 0.0
      %1188 = vmatmul.mubr.f32.gmra.mxu0 %v544
      %v1189 = vpop.f32.mrf.mxu0
      %v1190 = vadd.f32 %v324, %v1189
      %v1191 = vpop.f32.mrf.mxu0
      %1192 = vmatprep.mubr.f32.mxu0 0.0
      %1193 = vmatmul.mubr.f32.gmra.mxu0 %v547
      %v1194 = vpop.f32.mrf.mxu0
      %v1195 = vadd.f32 %v324, %v1194
      %v1196 = vpop.f32.mrf.mxu0
      %1197 = vmatprep.mubr.f32.mxu0 0.0
      %1198 = vmatmul.mubr.f32.gmra.mxu0 %v550
      %v1199 = vpop.f32.mrf.mxu0
      %v1200 = vadd.f32 %v324, %v1199
      %v1201 = vpop.f32.mrf.mxu0
      %1202 = vmatprep.mubr.f32.mxu0 0.0
      %1203 = vmatmul.mubr.f32.gmra.mxu0 %v553
      %v1204 = vpop.f32.mrf.mxu0
      %v1205 = vadd.f32 %v324, %v1204
      %v1206 = vpop.f32.mrf.mxu0
      %1207 = vmatprep.mubr.f32.mxu0 0.0
      %1208 = vmatmul.mubr.f32.gmra.mxu0 %v556
      %v1209 = vpop.f32.mrf.mxu0
      %v1210 = vadd.f32 %v324, %v1209
      %v1211 = vpop.f32.mrf.mxu0
      %1212 = vmatprep.mubr.f32.mxu0 0.0
      %1213 = vmatmul.mubr.f32.gmra.mxu0 %v559
      %v1214 = vpop.f32.mrf.mxu0
      %v1215 = vadd.f32 %v324, %v1214
      %v1216 = vpop.f32.mrf.mxu0
      %1217 = vmatprep.mubr.f32.mxu0 0.0
      %1218 = vmatmul.mubr.f32.gmra.mxu0 %v562
      %v1219 = vpop.f32.mrf.mxu0
      %v1220 = vadd.f32 %v324, %v1219
      %v1221 = vpop.f32.mrf.mxu0
      %1222 = vmatprep.mubr.f32.mxu0 0.0
      %1223 = vmatmul.mubr.f32.gmra.mxu0 %v565
      %v1224 = vpop.f32.mrf.mxu0
      %v1225 = vadd.f32 %v324, %v1224
      %v1226 = vpop.f32.mrf.mxu0
      %1227 = vmatprep.mubr.f32.mxu0 0.0
      %1228 = vmatmul.mubr.f32.gmra.mxu0 %v568
      %v1229 = vpop.f32.mrf.mxu0
      %v1230 = vadd.f32 %v324, %v1229
      %v1231 = vpop.f32.mrf.mxu0
      %1232 = vmatprep.mubr.f32.mxu0 0.0
      %1233 = vmatmul.mubr.f32.gmra.mxu0 %v571
      %v1234 = vpop.f32.mrf.mxu0
      %v1235 = vadd.f32 %v324, %v1234
      %v1236 = vpop.f32.mrf.mxu0
      %1237 = vmatprep.mubr.f32.mxu0 0.0
      %1238 = vmatmul.mubr.f32.gmra.mxu0 %v574
      %v1239 = vpop.f32.mrf.mxu0
      %v1240 = vadd.f32 %v324, %v1239
      %v1241 = vpop.f32.mrf.mxu0
      %1242 = vmatprep.mubr.f32.mxu0 0.0
      %1243 = vmatmul.mubr.f32.gmra.mxu0 %v577
      %v1244 = vpop.f32.mrf.mxu0
      %v1245 = vadd.f32 %v324, %v1244
      %v1246 = vpop.f32.mrf.mxu0
      %1247 = vmatprep.mubr.f32.mxu0 0.0
      %1248 = vmatmul.mubr.f32.gmra.mxu0 %v580
      %v1249 = vpop.f32.mrf.mxu0
      %v1250 = vadd.f32 %v324, %v1249
      %v1251 = vpop.f32.mrf.mxu0
      %1252 = vmatprep.mubr.f32.mxu0 0.0
      %1253 = vmatmul.mubr.f32.gmra.mxu0 %v583
      %v1254 = vpop.f32.mrf.mxu0
      %v1255 = vadd.f32 %v324, %v1254
      %v1256 = vpop.f32.mrf.mxu0
      %1257 = vmatprep.mubr.f32.mxu0 0.0
      %1258 = vmatmul.mubr.f32.gmra.mxu0 %v586
      %v1259 = vpop.f32.mrf.mxu0
      %v1260 = vadd.f32 %v324, %v1259
      %v1261 = vpop.f32.mrf.mxu0
      %1262 = vmatprep.mubr.f32.mxu0 0.0
      %1263 = vmatmul.mubr.f32.gmra.mxu0 %v589
      %v1264 = vpop.f32.mrf.mxu0
      %v1265 = vadd.f32 %v324, %v1264
      %v1266 = vpop.f32.mrf.mxu0
      %1267 = vmatprep.mubr.f32.mxu0 0.0
      %1268 = vmatmul.mubr.f32.gmra.mxu0 %v592
      %v1269 = vpop.f32.mrf.mxu0
      %v1270 = vadd.f32 %v324, %v1269
      %v1271 = vpop.f32.mrf.mxu0
      %1272 = vmatprep.mubr.f32.mxu0 0.0
      %1273 = vmatmul.mubr.f32.gmra.mxu0 %v595
      %v1274 = vpop.f32.mrf.mxu0
      %v1275 = vadd.f32 %v324, %v1274
      %v1276 = vpop.f32.mrf.mxu0
      %1277 = vmatprep.mubr.f32.mxu0 0.0
      %1278 = vmatmul.mubr.f32.gmra.mxu0 %v598
      %v1279 = vpop.f32.mrf.mxu0
      %v1280 = vadd.f32 %v324, %v1279
      %v1281 = vpop.f32.mrf.mxu0
      %1282 = vmatprep.mubr.f32.mxu0 0.0
      %1283 = vmatmul.mubr.f32.gmra.mxu0 %v601
      %v1284 = vpop.f32.mrf.mxu0
      %v1285 = vadd.f32 %v324, %v1284
      %v1286 = vpop.f32.mrf.mxu0
      %1287 = vmatprep.mubr.f32.mxu0 0.0
      %1288 = vmatmul.mubr.f32.gmra.mxu0 %v604
      %v1289 = vpop.f32.mrf.mxu0
      %v1290 = vadd.f32 %v324, %v1289
      %v1291 = vpop.f32.mrf.mxu0
      %1292 = vmatprep.mubr.f32.mxu0 0.0
      %1293 = vmatmul.mubr.f32.gmra.mxu0 %v607
      %v1294 = vpop.f32.mrf.mxu0
      %v1295 = vadd.f32 %v324, %v1294
      %v1296 = vpop.f32.mrf.mxu0
      %1297 = vmatprep.mubr.f32.mxu0 0.0
      %1298 = vmatmul.mubr.f32.gmra.mxu0 %v610
      %v1299 = vpop.f32.mrf.mxu0
      %v1300 = vadd.f32 %v324, %v1299
      %v1301 = vpop.f32.mrf.mxu0
      %1302 = vmatprep.mubr.f32.mxu0 0.0
      %1303 = vmatmul.mubr.f32.gmra.mxu0 %v613
      %v1304 = vpop.f32.mrf.mxu0
      %v1305 = vadd.f32 %v324, %v1304
      %v1306 = vpop.f32.mrf.mxu0
      %1307 = vmatprep.mubr.f32.mxu0 0.0
      %1308 = vmatmul.mubr.f32.gmra.mxu0 %v616
      %v1309 = vpop.f32.mrf.mxu0
      %v1310 = vadd.f32 %v324, %v1309
      %v1311 = vpop.f32.mrf.mxu0
      %1312 = vmatprep.mubr.f32.mxu0 0.0
      %1313 = vmatmul.mubr.f32.gmra.mxu0 %v619
      %v1314 = vpop.f32.mrf.mxu0
      %v1315 = vadd.f32 %v324, %v1314
      %v1316 = vpop.f32.mrf.mxu0
      %1317 = vmatprep.mubr.f32.mxu0 0.0
      %1318 = vmatmul.mubr.f32.gmra.mxu0 %v622
      %v1319 = vpop.f32.mrf.mxu0
      %v1320 = vadd.f32 %v324, %v1319
      %v1321 = vpop.f32.mrf.mxu0
      %1322 = vmatprep.mubr.f32.mxu0 0.0
      %1323 = vmatmul.mubr.f32.gmra.mxu0 %v625
      %v1324 = vpop.f32.mrf.mxu0
      %v1325 = vadd.f32 %v324, %v1324
      %v1326 = vpop.f32.mrf.mxu0
      %1327 = vmatprep.mubr.f32.mxu0 0.0
      %1328 = vmatmul.mubr.f32.gmra.mxu0 %v628
      %v1329 = vpop.f32.mrf.mxu0
      %v1330 = vadd.f32 %v324, %v1329
      %v1331 = vpop.f32.mrf.mxu0
      %1332 = vmatprep.mubr.f32.mxu0 0.0
      %1333 = vmatmul.mubr.f32.gmra.mxu0 %v631
      %v1334 = vpop.f32.mrf.mxu0
      %v1335 = vadd.f32 %v324, %v1334
      %v1336 = vpop.f32.mrf.mxu0
      %1337 = vmatprep.mubr.f32.mxu0 0.0
      %1338 = vmatmul.mubr.f32.gmra.mxu0 %v634
      %v1339 = vpop.f32.mrf.mxu0
      %v1340 = vadd.f32 %v324, %v1339
      %v1341 = vpop.f32.mrf.mxu0
      %1342 = vmatprep.mubr.f32.mxu0 0.0
      %1343 = vmatmul.mubr.f32.gmra.mxu0 %v637
      %v1344 = vpop.f32.mrf.mxu0
      %v1345 = vadd.f32 %v324, %v1344
      %v1346 = vpop.f32.mrf.mxu0
      %1347 = vmatprep.mubr.f32.mxu0 0.0
      %1348 = vmatmul.mubr.f32.gmra.mxu0 %v640
      %v1349 = vpop.f32.mrf.mxu0
      %v1350 = vadd.f32 %v324, %v1349
      %v1351 = vpop.f32.mrf.mxu0
      %1352 = vmatprep.mubr.f32.mxu0 0.0
      %1353 = vmatmul.mubr.f32.gmra.mxu0 %v643
      %v1354 = vpop.f32.mrf.mxu0
      %v1355 = vadd.f32 %v324, %v1354
      %v1356 = vpop.f32.mrf.mxu0
      %1357 = vmatprep.mubr.f32.mxu0 0.0
      %1358 = vmatmul.mubr.f32.gmra.mxu0 %v646
      %v1359 = vpop.f32.mrf.mxu0
      %v1360 = vadd.f32 %v324, %v1359
      %v1361 = vpop.f32.mrf.mxu0
      %1362 = vmatprep.mubr.f32.mxu0 0.0
      %1363 = vmatmul.mubr.f32.gmra.mxu0 %v649
      %v1364 = vpop.f32.mrf.mxu0
      %v1365 = vadd.f32 %v324, %v1364
      %v1366 = vpop.f32.mrf.mxu0
      %1367 = vmatprep.mubr.f32.mxu0 0.0
      %1368 = vmatmul.mubr.f32.gmra.mxu0 %v652
      %v1369 = vpop.f32.mrf.mxu0
      %v1370 = vadd.f32 %v324, %v1369
      %v1371 = vpop.f32.mrf.mxu0
      %1372 = vmatprep.mubr.f32.mxu0 0.0
      %1373 = vmatmul.mubr.f32.gmra.mxu0 %v655
      %v1374 = vpop.f32.mrf.mxu0
      %v1375 = vadd.f32 %v324, %v1374
      %v1376 = vpop.f32.mrf.mxu0
      %1377 = vmatprep.mubr.f32.mxu0 0.0
      %1378 = vmatmul.mubr.f32.gmra.mxu0 %v658
      %v1379 = vpop.f32.mrf.mxu0
      %v1380 = vadd.f32 %v324, %v1379
      %v1381 = vpop.f32.mrf.mxu0
      %1382 = vmatprep.mubr.f32.mxu0 0.0
      %1383 = vmatmul.mubr.f32.gmra.mxu0 %v661
      %v1384 = vpop.f32.mrf.mxu0
      %v1385 = vadd.f32 %v324, %v1384
      %v1386 = vpop.f32.mrf.mxu0
      %1387 = vmatprep.mubr.f32.mxu0 0.0
      %1388 = vmatmul.mubr.f32.gmra.mxu0 %v664
      %v1389 = vpop.f32.mrf.mxu0
      %v1390 = vadd.f32 %v324, %v1389
      %v1391 = vpop.f32.mrf.mxu0
      %1392 = vmatprep.mubr.f32.mxu0 0.0
      %1393 = vmatmul.mubr.f32.gmra.mxu0 %v667
      %v1394 = vpop.f32.mrf.mxu0
      %v1395 = vadd.f32 %v324, %v1394
      %v1396 = vpop.f32.mrf.mxu0
      %1397 = vmatprep.mubr.f32.mxu0 0.0
      %1398 = vmatmul.mubr.f32.gmra.mxu0 %v670
      %v1399 = vpop.f32.mrf.mxu0
      %v1400 = vadd.f32 %v324, %v1399
      %v1401 = vpop.f32.mrf.mxu0
      %1402 = vmatprep.mubr.f32.mxu0 0.0
      %1403 = vmatmul.mubr.f32.gmra.mxu0 %v673
      %v1404 = vpop.f32.mrf.mxu0
      %v1405 = vadd.f32 %v324, %v1404
      %v1406 = vpop.f32.mrf.mxu0
      %1407 = vmatprep.mubr.f32.mxu0 0.0
      %1408 = vmatmul.mubr.f32.gmra.mxu0 %v676
      %v1409 = vpop.f32.mrf.mxu0
      %v1410 = vadd.f32 %v324, %v1409
      %v1411 = vpop.f32.mrf.mxu0
      %1412 = vmatprep.mubr.f32.mxu0 0.0
      %1413 = vmatmul.mubr.f32.gmra.mxu0 %v679
      %v1414 = vpop.f32.mrf.mxu0
      %v1415 = vadd.f32 %v324, %v1414
      %v1416 = vpop.f32.mrf.mxu0
      %1417 = vmatprep.mubr.f32.mxu0 0.0
      %1418 = vmatmul.mubr.f32.gmra.mxu0 %v682
      %v1419 = vpop.f32.mrf.mxu0
      %v1420 = vadd.f32 %v324, %v1419
      %v1421 = vpop.f32.mrf.mxu0
      %1422 = vmatprep.mubr.f32.mxu0 0.0
      %1423 = vmatmul.mubr.f32.gmra.mxu0 %v685
      %v1424 = vpop.f32.mrf.mxu0
      %v1425 = vadd.f32 %v324, %v1424
      %v1426 = vpop.f32.mrf.mxu0
      %1427 = vmatprep.mubr.f32.mxu0 0.0
      %1428 = vmatmul.mubr.f32.gmra.mxu0 %v688
      %v1429 = vpop.f32.mrf.mxu0
      %v1430 = vadd.f32 %v324, %v1429
      %v1431 = vpop.f32.mrf.mxu0
      %1432 = vmatprep.mubr.f32.mxu0 0.0
      %1433 = vmatmul.mubr.f32.gmra.mxu0 %v691
      %v1434 = vpop.f32.mrf.mxu0
      %v1435 = vadd.f32 %v324, %v1434
      %v1436 = vpop.f32.mrf.mxu0
      %1437 = vmatprep.mubr.f32.mxu0 0.0
      %1438 = vmatmul.mubr.f32.gmra.mxu0 %v694
      %v1439 = vpop.f32.mrf.mxu0
      %v1440 = vadd.f32 %v324, %v1439
      %v1441 = vpop.f32.mrf.mxu0
      %1442 = vmatprep.mubr.f32.mxu0 0.0
      %1443 = vmatmul.mubr.f32.gmra.mxu0 %v697
      %v1444 = vpop.f32.mrf.mxu0
      %v1445 = vadd.f32 %v324, %v1444
      %v1446 = vpop.f32.mrf.mxu0
      %1447 = vmatprep.mubr.f32.mxu0 0.0
      %1448 = vmatmul.mubr.f32.gmra.mxu0 %v700
      %v1449 = vpop.f32.mrf.mxu0
      %v1450 = vadd.f32 %v324, %v1449
      %v1451 = vpop.f32.mrf.mxu0
      %1452 = vmatprep.mubr.f32.mxu0 0.0
      %1453 = vmatmul.mubr.f32.gmra.mxu0 %v703
      %v1454 = vpop.f32.mrf.mxu0
      %v1455 = vadd.f32 %v324, %v1454
      %v1456 = vpop.f32.mrf.mxu0
      %1457 = vmatprep.mubr.f32.mxu0 0.0
      %1458 = vmatmul.mubr.f32.gmra.mxu0 %v706
      %v1459 = vpop.f32.mrf.mxu0
      %v1460 = vadd.f32 %v324, %v1459
      %v1461 = vpop.f32.mrf.mxu0
      %1462 = vmatprep.mubr.f32.mxu0 0.0
      %1463 = vmatmul.mubr.f32.gmra.mxu0 %v709
      %v1464 = vpop.f32.mrf.mxu0
      %v1465 = vadd.f32 %v324, %v1464
      %v1466 = vpop.f32.mrf.mxu0
      %1467 = vmatprep.mubr.f32.mxu0 0.0
      %1468 = vmatmul.mubr.f32.gmra.mxu0 %v712
      %v1469 = vpop.f32.mrf.mxu0
      %v1470 = vadd.f32 %v324, %v1469
      %v1471 = vpop.f32.mrf.mxu0
      %1472 = vmatprep.mubr.f32.mxu0 0.0
      %1473 = vmatmul.mubr.f32.gmra.mxu0 %v715
      %v1474 = vpop.f32.mrf.mxu0
      %v1475 = vadd.f32 %v324, %v1474
      %v1476 = vpop.f32.mrf.mxu0
      %1477 = vmatprep.mubr.f32.mxu0 0.0
      %1478 = vmatmul.mubr.f32.gmra.mxu0 %v718
      %v1479 = vpop.f32.mrf.mxu0
      %v1480 = vadd.f32 %v324, %v1479
      %v1481 = vpop.f32.mrf.mxu0
      %1482 = vmatprep.mubr.f32.mxu0 0.0
      %1483 = vmatmul.mubr.f32.gmra.mxu0 %v721
      %v1484 = vpop.f32.mrf.mxu0
      %v1485 = vadd.f32 %v324, %v1484
      %v1486 = vpop.f32.mrf.mxu0
      %1487 = vmatprep.mubr.f32.mxu0 0.0
      %1488 = vmatmul.mubr.f32.gmra.mxu0 %v724
      %v1489 = vpop.f32.mrf.mxu0
      %v1490 = vadd.f32 %v324, %v1489
      %v1491 = vpop.f32.mrf.mxu0
      %1492 = vmatprep.mubr.f32.mxu0 0.0
      %1493 = vmatmul.mubr.f32.gmra.mxu0 %v727
      %v1494 = vpop.f32.mrf.mxu0
      %v1495 = vadd.f32 %v324, %v1494
      %v1496 = vpop.f32.mrf.mxu0
      %1497 = vmatprep.mubr.f32.mxu0 0.0
      %1498 = vmatmul.mubr.f32.gmra.mxu0 %v730
      %v1499 = vpop.f32.mrf.mxu0
      %v1500 = vadd.f32 %v324, %v1499
      %v1501 = vpop.f32.mrf.mxu0
      %1502 = vmatprep.mubr.f32.mxu0 0.0
      %1503 = vmatmul.mubr.f32.gmra.mxu0 %v733
      %v1504 = vpop.f32.mrf.mxu0
      %v1505 = vadd.f32 %v324, %v1504
      %v1506 = vpop.f32.mrf.mxu0
      %1507 = vmatprep.mubr.f32.mxu0 0.0
      %1508 = vmatmul.mubr.f32.gmra.mxu0 %v736
      %v1509 = vpop.f32.mrf.mxu0
      %v1510 = vadd.f32 %v324, %v1509
      %v1511 = vpop.f32.mrf.mxu0
      %1512 = vmatprep.mubr.f32.mxu0 0.0
      %1513 = vmatmul.mubr.f32.gmra.mxu0 %v739
      %v1514 = vpop.f32.mrf.mxu0
      %v1515 = vadd.f32 %v324, %v1514
      %v1516 = vpop.f32.mrf.mxu0
      %1517 = vmatprep.mubr.f32.mxu0 0.0
      %1518 = vmatmul.mubr.f32.gmra.mxu0 %v742
      %v1519 = vpop.f32.mrf.mxu0
      %v1520 = vadd.f32 %v324, %v1519
      %v1521 = vpop.f32.mrf.mxu0
      %1522 = vmatprep.mubr.f32.mxu0 0.0
      %1523 = vmatmul.mubr.f32.gmra.mxu0 %v745
      %v1524 = vpop.f32.mrf.mxu0
      %v1525 = vadd.f32 %v324, %v1524
      %v1526 = vpop.f32.mrf.mxu0
      %1527 = vmatprep.mubr.f32.mxu0 0.0
      %1528 = vmatmul.mubr.f32.gmra.mxu0 %v748
      %v1529 = vpop.f32.mrf.mxu0
      %v1530 = vadd.f32 %v324, %v1529
      %v1531 = vpop.f32.mrf.mxu0
      %1532 = vmatprep.mubr.f32.mxu0 0.0
      %1533 = vmatmul.mubr.f32.gmra.mxu0 %v751
      %v1534 = vpop.f32.mrf.mxu0
      %v1535 = vadd.f32 %v324, %v1534
      %v1536 = vpop.f32.mrf.mxu0
      %1537 = vmatprep.mubr.f32.mxu0 0.0
      %1538 = vmatmul.mubr.f32.gmra.mxu0 %v754
      %v1539 = vpop.f32.mrf.mxu0
      %v1540 = vadd.f32 %v324, %v1539
      %v1541 = vpop.f32.mrf.mxu0
      %1542 = vmatprep.mubr.f32.mxu0 0.0
      %1543 = vmatmul.mubr.f32.gmra.mxu0 %v757
      %v1544 = vpop.f32.mrf.mxu0
      %v1545 = vadd.f32 %v324, %v1544
      %v1546 = vpop.f32.mrf.mxu0
      %1547 = vdwg.mxu0
      %v1548 = vmax.f32 %v830, %v1010
      %v1549 = vmax.f32 %v835, %v1015
      %v1550 = vmax.f32 %v840, %v1020
      %v1551 = vmax.f32 %v845, %v1025
      %v1552 = vmax.f32 %v850, %v1030
      %v1553 = vmax.f32 %v855, %v1035
      %v1554 = vmax.f32 %v860, %v1040
      %v1555 = vmax.f32 %v865, %v1045
      %v1556 = vmax.f32 %v870, %v1050
      %v1557 = vmax.f32 %v875, %v1055
      %v1558 = vmax.f32 %v880, %v1060
      %v1559 = vmax.f32 %v885, %v1065
      %v1560 = vmax.f32 %v890, %v1070
      %v1561 = vmax.f32 %v895, %v1075
      %v1562 = vmax.f32 %v900, %v1080
      %v1563 = vmax.f32 %v905, %v1085
      %v1564 = vmax.f32 %v910, %v1090
      %v1565 = vmax.f32 %v915, %v1095
      %v1566 = vmax.f32 %v920, %v1100
      %v1567 = vmax.f32 %v925, %v1105
      %v1568 = vmax.f32 %v930, %v1110
      %v1569 = vmax.f32 %v935, %v1115
      %v1570 = vmax.f32 %v940, %v1120
      %v1571 = vmax.f32 %v945, %v1125
      %v1572 = vmax.f32 %v950, %v1130
      %v1573 = vmax.f32 %v955, %v1135
      %v1574 = vmax.f32 %v960, %v1140
      %v1575 = vmax.f32 %v965, %v1145
      %v1576 = vmax.f32 %v970, %v1150
      %v1577 = vmax.f32 %v975, %v1155
      %v1578 = vmax.f32 %v980, %v1160
      %v1579 = vmax.f32 %v985, %v1165
      %v1580 = vmax.f32 %v990, %v1170
      %v1581 = vmax.f32 %v995, %v1175
      %v1582 = vmax.f32 %v1000, %v1180
      %v1583 = vmax.f32 %v1005, %v1185
      %v1584 = vmax.f32 %v1190, %v1370
      %v1585 = vmax.f32 %v1195, %v1375
      %v1586 = vmax.f32 %v1200, %v1380
      %v1587 = vmax.f32 %v1205, %v1385
      %v1588 = vmax.f32 %v1210, %v1390
      %v1589 = vmax.f32 %v1215, %v1395
      %v1590 = vmax.f32 %v1220, %v1400
      %v1591 = vmax.f32 %v1225, %v1405
      %v1592 = vmax.f32 %v1230, %v1410
      %v1593 = vmax.f32 %v1235, %v1415
      %v1594 = vmax.f32 %v1240, %v1420
      %v1595 = vmax.f32 %v1245, %v1425
      %v1596 = vmax.f32 %v1250, %v1430
      %v1597 = vmax.f32 %v1255, %v1435
      %v1598 = vmax.f32 %v1260, %v1440
      %v1599 = vmax.f32 %v1265, %v1445
      %v1600 = vmax.f32 %v1270, %v1450
      %v1601 = vmax.f32 %v1275, %v1455
      %v1602 = vmax.f32 %v1280, %v1460
      %v1603 = vmax.f32 %v1285, %v1465
      %v1604 = vmax.f32 %v1290, %v1470
      %v1605 = vmax.f32 %v1295, %v1475
      %v1606 = vmax.f32 %v1300, %v1480
      %v1607 = vmax.f32 %v1305, %v1485
      %v1608 = vmax.f32 %v1310, %v1490
      %v1609 = vmax.f32 %v1315, %v1495
      %v1610 = vmax.f32 %v1320, %v1500
      %v1611 = vmax.f32 %v1325, %v1505
      %v1612 = vmax.f32 %v1330, %v1510
      %v1613 = vmax.f32 %v1335, %v1515
      %v1614 = vmax.f32 %v1340, %v1520
      %v1615 = vmax.f32 %v1345, %v1525
      %v1616 = vmax.f32 %v1350, %v1530
      %v1617 = vmax.f32 %v1355, %v1535
      %v1618 = vmax.f32 %v1360, %v1540
      %v1619 = vmax.f32 %v1365, %v1545
      %v1620 = vmax.f32 %v1548, %v1584
      %v1621 = vmax.f32 %v1549, %v1585
      %v1622 = vmax.f32 %v1550, %v1586
      %v1623 = vmax.f32 %v1551, %v1587
      %v1624 = vmax.f32 %v1552, %v1588
      %v1625 = vmax.f32 %v1553, %v1589
      %v1626 = vmax.f32 %v1554, %v1590
      %v1627 = vmax.f32 %v1555, %v1591
      %v1628 = vmax.f32 %v1556, %v1592
      %v1629 = vmax.f32 %v1557, %v1593
      %v1630 = vmax.f32 %v1558, %v1594
      %v1631 = vmax.f32 %v1559, %v1595
      %v1632 = vmax.f32 %v1560, %v1596
      %v1633 = vmax.f32 %v1561, %v1597
      %v1634 = vmax.f32 %v1562, %v1598
      %v1635 = vmax.f32 %v1563, %v1599
      %v1636 = vmax.f32 %v1564, %v1600
      %v1637 = vmax.f32 %v1565, %v1601
      %v1638 = vmax.f32 %v1566, %v1602
      %v1639 = vmax.f32 %v1567, %v1603
      %v1640 = vmax.f32 %v1568, %v1604
      %v1641 = vmax.f32 %v1569, %v1605
      %v1642 = vmax.f32 %v1570, %v1606
      %v1643 = vmax.f32 %v1571, %v1607
      %v1644 = vmax.f32 %v1572, %v1608
      %v1645 = vmax.f32 %v1573, %v1609
      %v1646 = vmax.f32 %v1574, %v1610
      %v1647 = vmax.f32 %v1575, %v1611
      %v1648 = vmax.f32 %v1576, %v1612
      %v1649 = vmax.f32 %v1577, %v1613
      %v1650 = vmax.f32 %v1578, %v1614
      %v1651 = vmax.f32 %v1579, %v1615
      %v1652 = vmax.f32 %v1580, %v1616
      %v1653 = vmax.f32 %v1581, %v1617
      %v1654 = vmax.f32 %v1582, %v1618
      %v1655 = vmax.f32 %v1583, %v1619
      %vm1656 = vcmask 162816
      %1657 = vst.msk [vmem:[%s170] sm:$0xff] %vm1656, %v1620
      %1658 = vst.msk [vmem:[%s170 + $0x8] sm:$0xff] %vm1656, %v1621
      %1659 = vst.msk [vmem:[%s170 + $0x10] sm:$0xff] %vm1656, %v1622
      %1660 = vst.msk [vmem:[%s170 + $0x18] sm:$0xff] %vm1656, %v1623
      %1661 = vst.msk [vmem:[%s170 + $0x20] sm:$0xff] %vm1656, %v1624
      %1662 = vst.msk [vmem:[%s170 + $0x28] sm:$0xff] %vm1656, %v1625
      %1663 = vst.msk [vmem:[%s170 + $0x30] sm:$0xff] %vm1656, %v1626
      %1664 = vst.msk [vmem:[%s170 + $0x38] sm:$0xff] %vm1656, %v1627
      %1665 = vst.msk [vmem:[%s170 + $0x40] sm:$0xff] %vm1656, %v1628
      %1666 = vst.msk [vmem:[%s170 + $0x48] sm:$0xff] %vm1656, %v1629
      %1667 = vst.msk [vmem:[%s170 + $0x50] sm:$0xff] %vm1656, %v1630
      %1668 = vst.msk [vmem:[%s170 + $0x58] sm:$0xff] %vm1656, %v1631
      %1669 = vst.msk [vmem:[%s170 + $0x60] sm:$0xff] %vm1656, %v1632
      %1670 = vst.msk [vmem:[%s170 + $0x68] sm:$0xff] %vm1656, %v1633
      %1671 = vst.msk [vmem:[%s170 + $0x70] sm:$0xff] %vm1656, %v1634
      %1672 = vst.msk [vmem:[%s170 + $0x78] sm:$0xff] %vm1656, %v1635
      %1673 = vst.msk [vmem:[%s170 + $0x80] sm:$0xff] %vm1656, %v1636
      %1674 = vst.msk [vmem:[%s170 + $0x88] sm:$0xff] %vm1656, %v1637
      %1675 = vst.msk [vmem:[%s170 + $0x90] sm:$0xff] %vm1656, %v1638
      %1676 = vst.msk [vmem:[%s170 + $0x98] sm:$0xff] %vm1656, %v1639
      %1677 = vst.msk [vmem:[%s170 + $0xa0] sm:$0xff] %vm1656, %v1640
      %1678 = vst.msk [vmem:[%s170 + $0xa8] sm:$0xff] %vm1656, %v1641
      %1679 = vst.msk [vmem:[%s170 + $0xb0] sm:$0xff] %vm1656, %v1642
      %1680 = vst.msk [vmem:[%s170 + $0xb8] sm:$0xff] %vm1656, %v1643
      %1681 = vst.msk [vmem:[%s170 + $0xc0] sm:$0xff] %vm1656, %v1644
      %1682 = vst.msk [vmem:[%s170 + $0xc8] sm:$0xff] %vm1656, %v1645
      %1683 = vst.msk [vmem:[%s170 + $0xd0] sm:$0xff] %vm1656, %v1646
      %1684 = vst.msk [vmem:[%s170 + $0xd8] sm:$0xff] %vm1656, %v1647
      %1685 = vst.msk [vmem:[%s170 + $0xe0] sm:$0xff] %vm1656, %v1648
      %1686 = vst.msk [vmem:[%s170 + $0xe8] sm:$0xff] %vm1656, %v1649
      %1687 = vst.msk [vmem:[%s170 + $0xf0] sm:$0xff] %vm1656, %v1650
      %1688 = vst.msk [vmem:[%s170 + $0xf8] sm:$0xff] %vm1656, %v1651
      %1689 = vst.msk [vmem:[%s170 + $0x100] sm:$0xff] %vm1656, %v1652
      %1690 = vst.msk [vmem:[%s170 + $0x108] sm:$0xff] %vm1656, %v1653
      %1691 = vst.msk [vmem:[%s170 + $0x110] sm:$0xff] %vm1656, %v1654
      %1692 = vst.msk [vmem:[%s170 + $0x118] sm:$0xff] %vm1656, %v1655
      %p1693 = scmp.lt.s32.totalorder %s14, 1
      %s1694 = scalar_select %p1693, %s14, 1
      %s1695 = smul.addr %s1694, 36
      %s1696 = smul.addr %s1695, 8
      %s1697 = scalar_lea.vmem %s3, %s1696
      // Predicated region
      $region33: #{forward.3} parent=31 // pred_check
        %p1698 = pneg %p100
      $region34: #{forward.3} parent=31 // pred_check_branch
        %1700 = sbr.rel (%p1698) target = $region36
      $region35: #{forward.3} parent=31 // pred_region
        _
      $region36: #{forward.3} parent=31 // pred_fallthru
        _
    $region32: #{forward.3} parent=5 // pred_fallthru
      _
    %p1701 = scmp.le.s32.totalorder 2, %s9
    // Predicated region
    $region37: #{forward.3} parent=5 // pred_check
      %p1702 = pneg %p1701
    $region38: #{forward.3} parent=5 // pred_check_branch
      %1704 = sbr.rel (%p1702) target = $region40
    $region39: #{forward.3} parent=5 // pred_region
      %s1705 = ssub.s32 %s9, 2
      // Predicated region
      $region41: #{forward.3} parent=39 // pred_check
        %p1706 = pneg %p106
      $region42: #{forward.3} parent=39 // pred_check_branch
        %1708 = sbr.rel (%p1706) target = $region44
      $region43: #{forward.3} parent=39 // pred_region
        %p1709 = scmp.lt.s32.totalorder %s15, 1
        %s1710 = scalar_select %p1709, %s15, 1
        %s1711 = smul.addr %s1710, 36
        %s1712 = smul.addr %s1711, 8
        %s1713 = scalar_lea.vmem %s3, %s1712
      $region44: #{forward.3} parent=39 // pred_fallthru
        _
    $region40: #{forward.3} parent=5 // pred_fallthru
      _
  $region6: #{forward.3} parent=0 // loop_footer
    %s13 = sadd.s32 1, %s9
  $region7: #{forward.3} parent=0 // loop_footer_branch
    %8 = sbr.rel target = $region3
  $region8: #{forward.3} parent=0 // loop_exit
    _

// kernel: forward.4
$region0: #{forward.4}
  #allocation0 [shape = 'u32[]', space=smem, size = 0x4, offset = 0x4, fixed_abs, tag = 'smem constant byte address 0x4 - core index']
  #allocation1 [shape = 'u32[144,128]{1,0:T(1,128)}', space=vmem, size = 0x12000, scoped, tag = 'internal scratch']
  %s0 = inlined_call_operand.vmem [shape: f32[2,128,500], index: 0, kind: input, shape index: {}]
  %s1 = inlined_call_operand.vmem [shape: f32[500,50], index: 1, kind: input, shape index: {}]
  %s2 = inlined_call_operand.vmem [shape: f32[1,50], index: 2, kind: input, shape index: {}]
  %s3 = inlined_call_operand.vmem [shape: f32[2,32,50], index: 3, kind: output, shape index: {}]
  %s4 = sld [smem:[#allocation0]]
  $region45: #{forward.4} parent=0
    _
  %s6 = ssub.s32 1, %s4
  %s7 = scalar_select 0, %s6, %s4
  loop: start=0, step=1, limit=4
  $region2: #{forward.4} parent=0 // loop_pre_header
    _
  $region3: #{forward.4} parent=0 // loop_header
    %s9 = sphi 0, %s13
    %p10 = scmp.ge.s32.totalorder %s9, 4
    %s19 = sphi 0, %s21
    %s22 = sphi 0, %s19
    %s23 = sphi 0, %s22
    %s39 = sphi 0, %s23
    %s43 = sphi 0, %s43
    %s45 = sphi 0, %s43
    %s46 = sphi 0, %s45
    %s60 = sphi 0, %s46
    %s64 = sphi 0, %s64
    %s66 = sphi 0, %s64
    %s67 = sphi 0, %s66
    %s81 = sphi 0, %s67
    %s87 = sphi 0, %s89
    %s90 = sphi 0, %s87
    %s91 = sphi 0, %s90
    %s107 = sphi 0, %s91
  $region4: #{forward.4} parent=0 // loop_header_branch
    %12 = sbr.rel (%p10) target = $region8
  $region5: #{forward.4} parent=0 // loop_body
    %s14 = ssub.s32 %s9, 1
    %s15 = ssub.s32 %s9, 2
    %s16 = sadd.s32 %s9, 1
    %s17 = ssub.s32 %s9, %s16
    %p18 = scmp.eq.s32.totalorder %s17, 0
    %s20 = sadd.s32 %s19, 1
    %s21 = scalar_select %p18, %s19, %s20
    %p24 = pneg %p18
    %p25 = scmp.eq.s32.totalorder %s9, 1
    %p26 = por %p24, %p25
    %p27 = scmp.ne.s32.totalorder %s19, %s22
    %p28 = scmp.eq.s32.totalorder %s9, 0
    %p29 = por %p27, %p28
    %p30 = scmp.ne.s32.totalorder %s19, %s22
    %p31 = scmp.eq.s32.totalorder %s14, 1
    %p32 = por %p30, %p31
    %p33 = scmp.ne.s32.totalorder %s22, %s23
    %p34 = scmp.eq.s32.totalorder %s14, 0
    %p35 = por %p33, %p34
    %p36 = scmp.ne.s32.totalorder %s22, %s23
    %p37 = scmp.eq.s32.totalorder %s15, 1
    %p38 = por %p36, %p37
    %p40 = scmp.ne.s32.totalorder %s23, %s39
    %p41 = scmp.eq.s32.totalorder %s15, 0
    %p42 = por %p40, %p41
    %s44 = sadd.s32 %s43, 1
    %p47 = scmp.eq.s32.totalorder %s9, 1
    %p48 = scmp.ne.s32.totalorder %s43, %s45
    %p49 = scmp.eq.s32.totalorder %s9, 0
    %p50 = por %p48, %p49
    %p51 = scmp.ne.s32.totalorder %s43, %s45
    %p52 = scmp.eq.s32.totalorder %s14, 1
    %p53 = por %p51, %p52
    %p54 = scmp.ne.s32.totalorder %s45, %s46
    %p55 = scmp.eq.s32.totalorder %s14, 0
    %p56 = por %p54, %p55
    %p57 = scmp.ne.s32.totalorder %s45, %s46
    %p58 = scmp.eq.s32.totalorder %s15, 1
    %p59 = por %p57, %p58
    %p61 = scmp.ne.s32.totalorder %s46, %s60
    %p62 = scmp.eq.s32.totalorder %s15, 0
    %p63 = por %p61, %p62
    %s65 = sadd.s32 %s64, 1
    %p68 = scmp.eq.s32.totalorder %s9, 1
    %p69 = scmp.ne.s32.totalorder %s64, %s66
    %p70 = scmp.eq.s32.totalorder %s9, 0
    %p71 = por %p69, %p70
    %p72 = scmp.ne.s32.totalorder %s64, %s66
    %p73 = scmp.eq.s32.totalorder %s14, 1
    %p74 = por %p72, %p73
    %p75 = scmp.ne.s32.totalorder %s66, %s67
    %p76 = scmp.eq.s32.totalorder %s14, 0
    %p77 = por %p75, %p76
    %p78 = scmp.ne.s32.totalorder %s66, %s67
    %p79 = scmp.eq.s32.totalorder %s15, 1
    %p80 = por %p78, %p79
    %p82 = scmp.ne.s32.totalorder %s67, %s81
    %p83 = scmp.eq.s32.totalorder %s15, 0
    %p84 = por %p82, %p83
    %s85 = ssub.s32 %s9, %s16
    %p86 = scmp.eq.s32.totalorder %s85, 0
    %s88 = sadd.s32 %s87, 1
    %s89 = scalar_select %p86, %s87, %s88
    %p92 = pneg %p86
    %p93 = scmp.eq.s32.totalorder %s9, 1
    %p94 = por %p92, %p93
    %p95 = scmp.ne.s32.totalorder %s87, %s90
    %p96 = scmp.eq.s32.totalorder %s9, 0
    %p97 = por %p95, %p96
    %p98 = scmp.ne.s32.totalorder %s87, %s90
    %p99 = scmp.eq.s32.totalorder %s14, 1
    %p100 = por %p98, %p99
    %p101 = scmp.ne.s32.totalorder %s90, %s91
    %p102 = scmp.eq.s32.totalorder %s14, 0
    %p103 = por %p101, %p102
    %p104 = scmp.ne.s32.totalorder %s90, %s91
    %p105 = scmp.eq.s32.totalorder %s15, 1
    %p106 = por %p104, %p105
    %p108 = scmp.ne.s32.totalorder %s91, %s107
    %p109 = scmp.eq.s32.totalorder %s15, 0
    %p110 = por %p108, %p109
    %p111 = scmp.le.s32.totalorder 1, %s9
    %p112 = scmp.lt.s32.totalorder %s9, 3
    %p113 = pnand %p111, %p112
    %p114 = pneg %p113
    // Predicated region
    $region9: #{forward.4} parent=5 // pred_check
      _
    $region10: #{forward.4} parent=5 // pred_check_branch
      %116 = sbr.rel (%p113) target = $region12
    $region11: #{forward.4} parent=5 // pred_region
      %s117 = ssub.s32 %s9, 1
      // Predicated region
      $region13: #{forward.4} parent=11 // pred_check
        %p118 = pneg %p56
      $region14: #{forward.4} parent=11 // pred_check_branch
        %120 = sbr.rel (%p118) target = $region16
      $region15: #{forward.4} parent=11 // pred_region
        _
      $region16: #{forward.4} parent=11 // pred_fallthru
        _
      // Predicated region
      $region17: #{forward.4} parent=11 // pred_check
        %p121 = pneg %p77
      $region18: #{forward.4} parent=11 // pred_check_branch
        %123 = sbr.rel (%p121) target = $region20
      $region19: #{forward.4} parent=11 // pred_region
        _
      $region20: #{forward.4} parent=11 // pred_fallthru
        _
    $region12: #{forward.4} parent=5 // pred_fallthru
      _
    %p124 = scmp.lt.s32.totalorder %s9, 2
    // Predicated region
    $region21: #{forward.4} parent=5 // pred_check
      %p125 = pneg %p124
    $region22: #{forward.4} parent=5 // pred_check_branch
      %127 = sbr.rel (%p125) target = $region24
    $region23: #{forward.4} parent=5 // pred_region
      // Predicated region
      $region25: #{forward.4} parent=23 // pred_check
        %p128 = pneg %p29
      $region26: #{forward.4} parent=23 // pred_check_branch
        %130 = sbr.rel (%p128) target = $region28
      $region27: #{forward.4} parent=23 // pred_region
        %p131 = scmp.lt.s32.totalorder %s9, 1
        %s132 = scalar_select %p131, %s9, 1
        %s133 = smul.addr %s132, 64
        %s134 = smul.addr %s133, 8
        %s135 = scalar_lea.vmem %s0, %s134
      $region28: #{forward.4} parent=23 // pred_fallthru
        _
    $region24: #{forward.4} parent=5 // pred_fallthru
      _
    %p136 = scmp.le.s32.totalorder 1, %s9
    %p137 = scmp.lt.s32.totalorder %s9, 3
    %p138 = pnand %p136, %p137
    %p139 = pneg %p138
    // Predicated region
    $region29: #{forward.4} parent=5 // pred_check
      _
    $region30: #{forward.4} parent=5 // pred_check_branch
      %141 = sbr.rel (%p138) target = $region32
    $region31: #{forward.4} parent=5 // pred_region
      %s142 = ssub.s32 %s9, 1
      %p143 = scmp.lt.s32.totalorder %s14, 1
      %s144 = scalar_select %p143, %s14, 1
      %s145 = smul.addr %s144, 64
      %s146 = smul.addr %s145, 8
      %s147 = scalar_lea.vmem %s0, %s146
      %p148 = pneg %p35
      %p149 = pneg %p32
      %p150 = pneg %p56
      %p151 = pneg %p53
      %p152 = pneg %p77
      %p153 = pneg %p74
      %p154 = pneg %p103
      %p155 = pneg %p100
      %p156 = scmp.lt.s32.totalorder %s14, 1
      %s157 = scalar_select %p156, %s14, 1
      %s158 = smul.addr %s157, 4
      %s159 = smul.addr %s158, 8
      %s160 = scalar_lea.vmem %s3, %s159
      %p161 = scmp.lt.s32.totalorder %s14, 1
      %s162 = scalar_select %p161, %s14, 1
      %s163 = smul.addr %s162, 64
      %s164 = smul.addr %s163, 8
      %s165 = scalar_lea.vmem %s0, %s164
      %p166 = scmp.lt.s32.totalorder %s14, 1
      %s167 = scalar_select %p166, %s14, 1
      %s168 = smul.addr %s167, 4
      %s169 = smul.addr %s168, 8
      %s170 = scalar_lea.vmem %s3, %s169
      %v171 = vld [vmem:[%s165] sm:$0xff]
      %v172 = vld [vmem:[%s165 + $0x8] sm:$0xff]
      %v173 = vld [vmem:[%s165 + $0x10] sm:$0xff]
      %v174 = vld [vmem:[%s165 + $0x18] sm:$0xff]
      %v175 = vld [vmem:[%s165 + $0x20] sm:$0xff]
      %v176 = vld [vmem:[%s165 + $0x28] sm:$0xff]
      %v177 = vld [vmem:[%s165 + $0x30] sm:$0xff]
      %v178 = vld [vmem:[%s165 + $0x38] sm:$0xff]
      %v179 = vld [vmem:[%s165 + $0x40] sm:$0xff]
      %v180 = vld [vmem:[%s165 + $0x48] sm:$0xff]
      %v181 = vld [vmem:[%s165 + $0x50] sm:$0xff]
      %v182 = vld [vmem:[%s165 + $0x58] sm:$0xff]
      %v183 = vld [vmem:[%s165 + $0x60] sm:$0xff]
      %v184 = vld [vmem:[%s165 + $0x68] sm:$0xff]
      %v185 = vld [vmem:[%s165 + $0x70] sm:$0xff]
      %v186 = vld [vmem:[%s165 + $0x78] sm:$0xff]
      %v187 = vld [vmem:[%s165 + $0x80] sm:$0xff]
      %v188 = vld [vmem:[%s165 + $0x88] sm:$0xff]
      %v189 = vld [vmem:[%s165 + $0x90] sm:$0xff]
      %v190 = vld [vmem:[%s165 + $0x98] sm:$0xff]
      %v191 = vld [vmem:[%s165 + $0xa0] sm:$0xff]
      %v192 = vld [vmem:[%s165 + $0xa8] sm:$0xff]
      %v193 = vld [vmem:[%s165 + $0xb0] sm:$0xff]
      %v194 = vld [vmem:[%s165 + $0xb8] sm:$0xff]
      %v195 = vld [vmem:[%s165 + $0xc0] sm:$0xff]
      %v196 = vld [vmem:[%s165 + $0xc8] sm:$0xff]
      %v197 = vld [vmem:[%s165 + $0xd0] sm:$0xff]
      %v198 = vld [vmem:[%s165 + $0xd8] sm:$0xff]
      %v199 = vld [vmem:[%s165 + $0xe0] sm:$0xff]
      %v200 = vld [vmem:[%s165 + $0xe8] sm:$0xff]
      %v201 = vld [vmem:[%s165 + $0xf0] sm:$0xff]
      %v202 = vld [vmem:[%s165 + $0xf8] sm:$0xff]
      %v203 = vld [vmem:[%s165 + $0x100] sm:$0xff]
      %v204 = vld [vmem:[%s165 + $0x108] sm:$0xff]
      %v205 = vld [vmem:[%s165 + $0x110] sm:$0xff]
      %v206 = vld [vmem:[%s165 + $0x118] sm:$0xff]
      %v207 = vld [vmem:[%s165 + $0x120] sm:$0xff]
      %v208 = vld [vmem:[%s165 + $0x128] sm:$0xff]
      %v209 = vld [vmem:[%s165 + $0x130] sm:$0xff]
      %v210 = vld [vmem:[%s165 + $0x138] sm:$0xff]
      %v211 = vld [vmem:[%s165 + $0x140] sm:$0xff]
      %v212 = vld [vmem:[%s165 + $0x148] sm:$0xff]
      %v213 = vld [vmem:[%s165 + $0x150] sm:$0xff]
      %v214 = vld [vmem:[%s165 + $0x158] sm:$0xff]
      %v215 = vld [vmem:[%s165 + $0x160] sm:$0xff]
      %v216 = vld [vmem:[%s165 + $0x168] sm:$0xff]
      %v217 = vld [vmem:[%s165 + $0x170] sm:$0xff]
      %v218 = vld [vmem:[%s165 + $0x178] sm:$0xff]
      %v219 = vld [vmem:[%s165 + $0x180] sm:$0xff]
      %v220 = vld [vmem:[%s165 + $0x188] sm:$0xff]
      %v221 = vld [vmem:[%s165 + $0x190] sm:$0xff]
      %v222 = vld [vmem:[%s165 + $0x198] sm:$0xff]
      %v223 = vld [vmem:[%s165 + $0x1a0] sm:$0xff]
      %v224 = vld [vmem:[%s165 + $0x1a8] sm:$0xff]
      %v225 = vld [vmem:[%s165 + $0x1b0] sm:$0xff]
      %v226 = vld [vmem:[%s165 + $0x1b8] sm:$0xff]
      %v227 = vld [vmem:[%s165 + $0x1c0] sm:$0xff]
      %v228 = vld [vmem:[%s165 + $0x1c8] sm:$0xff]
      %v229 = vld [vmem:[%s165 + $0x1d0] sm:$0xff]
      %v230 = vld [vmem:[%s165 + $0x1d8] sm:$0xff]
      %v231 = vld [vmem:[%s165 + $0x1e0] sm:$0xff]
      %v232 = vld [vmem:[%s165 + $0x1e8] sm:$0xff]
      %v233 = vld [vmem:[%s165 + $0x1f0] sm:$0xff]
      %v234 = vld [vmem:[%s165 + $0x1f8] sm:$0xff]
      %v235 = vld [vmem:[%s1] sm:$0xff]
      %v236 = vld [vmem:[%s1 + $0x8] sm:$0xff]
      %v237 = vld [vmem:[%s1 + $0x10] sm:$0xff]
      %v238 = vld [vmem:[%s1 + $0x18] sm:$0xff]
      %v239 = vld [vmem:[%s1 + $0x20] sm:$0xff]
      %v240 = vld [vmem:[%s1 + $0x28] sm:$0xff]
      %v241 = vld [vmem:[%s1 + $0x30] sm:$0xff]
      %v242 = vld [vmem:[%s1 + $0x38] sm:$0xff]
      %v243 = vld [vmem:[%s1 + $0x40] sm:$0xff]
      %v244 = vld [vmem:[%s1 + $0x48] sm:$0xff]
      %v245 = vld [vmem:[%s1 + $0x50] sm:$0xff]
      %v246 = vld [vmem:[%s1 + $0x58] sm:$0xff]
      %v247 = vld [vmem:[%s1 + $0x60] sm:$0xff]
      %v248 = vld [vmem:[%s1 + $0x68] sm:$0xff]
      %v249 = vld [vmem:[%s1 + $0x70] sm:$0xff]
      %v250 = vld [vmem:[%s1 + $0x78] sm:$0xff]
      %v251 = vld [vmem:[%s1 + $0x80] sm:$0xff]
      %v252 = vld [vmem:[%s1 + $0x88] sm:$0xff]
      %v253 = vld [vmem:[%s1 + $0x90] sm:$0xff]
      %v254 = vld [vmem:[%s1 + $0x98] sm:$0xff]
      %v255 = vld [vmem:[%s1 + $0xa0] sm:$0xff]
      %v256 = vld [vmem:[%s1 + $0xa8] sm:$0xff]
      %v257 = vld [vmem:[%s1 + $0xb0] sm:$0xff]
      %v258 = vld [vmem:[%s1 + $0xb8] sm:$0xff]
      %v259 = vld [vmem:[%s1 + $0xc0] sm:$0xff]
      %v260 = vld [vmem:[%s1 + $0xc8] sm:$0xff]
      %v261 = vld [vmem:[%s1 + $0xd0] sm:$0xff]
      %v262 = vld [vmem:[%s1 + $0xd8] sm:$0xff]
      %v263 = vld [vmem:[%s1 + $0xe0] sm:$0xff]
      %v264 = vld [vmem:[%s1 + $0xe8] sm:$0xff]
      %v265 = vld [vmem:[%s1 + $0xf0] sm:$0xff]
      %v266 = vld [vmem:[%s1 + $0xf8] sm:$0xff]
      %v267 = vld [vmem:[%s1 + $0x100] sm:$0xff]
      %v268 = vld [vmem:[%s1 + $0x108] sm:$0xff]
      %v269 = vld [vmem:[%s1 + $0x110] sm:$0xff]
      %v270 = vld [vmem:[%s1 + $0x118] sm:$0xff]
      %v271 = vld [vmem:[%s1 + $0x120] sm:$0xff]
      %v272 = vld [vmem:[%s1 + $0x128] sm:$0xff]
      %v273 = vld [vmem:[%s1 + $0x130] sm:$0xff]
      %v274 = vld [vmem:[%s1 + $0x138] sm:$0xff]
      %v275 = vld [vmem:[%s1 + $0x140] sm:$0xff]
      %v276 = vld [vmem:[%s1 + $0x148] sm:$0xff]
      %v277 = vld [vmem:[%s1 + $0x150] sm:$0xff]
      %v278 = vld [vmem:[%s1 + $0x158] sm:$0xff]
      %v279 = vld [vmem:[%s1 + $0x160] sm:$0xff]
      %v280 = vld [vmem:[%s1 + $0x168] sm:$0xff]
      %v281 = vld [vmem:[%s1 + $0x170] sm:$0xff]
      %v282 = vld [vmem:[%s1 + $0x178] sm:$0xff]
      %v283 = vld [vmem:[%s1 + $0x180] sm:$0xff]
      %v284 = vld [vmem:[%s1 + $0x188] sm:$0xff]
      %v285 = vld [vmem:[%s1 + $0x190] sm:$0xff]
      %v286 = vld [vmem:[%s1 + $0x198] sm:$0xff]
      %v287 = vld [vmem:[%s1 + $0x1a0] sm:$0xff]
      %v288 = vld [vmem:[%s1 + $0x1a8] sm:$0xff]
      %v289 = vld [vmem:[%s1 + $0x1b0] sm:$0xff]
      %v290 = vld [vmem:[%s1 + $0x1b8] sm:$0xff]
      %v291 = vld [vmem:[%s1 + $0x1c0] sm:$0xff]
      %v292 = vld [vmem:[%s1 + $0x1c8] sm:$0xff]
      %v293 = vld [vmem:[%s1 + $0x1d0] sm:$0xff]
      %v294 = vld [vmem:[%s1 + $0x1d8] sm:$0xff]
      %v295 = vld [vmem:[%s1 + $0x1e0] sm:$0xff]
      %v296 = vld [vmem:[%s1 + $0x1e8] sm:$0xff]
      %v297 = vld [vmem:[%s1 + $0x1f0] sm:$0xf]
      %v298 = vld [vmem:[%s2] sm:$0x1]
      %v300 = vlaneseq
      %v301 = vshrl.u32 %v300, 7
      %v302 = vsub.s32 0, %v301
      %v303 = vrot.slane %v298, %v302
      %vm305 = vcmask 949248
      %v307 = vsel %vm305, %v174, 0
      %v310 = vsel %vm305, %v178, 0
      %v313 = vsel %vm305, %v182, 0
      %v316 = vsel %vm305, %v186, 0
      %v319 = vsel %vm305, %v190, 0
      %v322 = vsel %vm305, %v194, 0
      %v325 = vsel %vm305, %v198, 0
      %v328 = vsel %vm305, %v202, 0
      %v331 = vsel %vm305, %v206, 0
      %v334 = vsel %vm305, %v210, 0
      %v337 = vsel %vm305, %v214, 0
      %v340 = vsel %vm305, %v218, 0
      %v343 = vsel %vm305, %v222, 0
      %v346 = vsel %vm305, %v226, 0
      %v349 = vsel %vm305, %v230, 0
      %v352 = vsel %vm305, %v234, 0
      %vm354 = vcmask 1043456
      %v356 = vsel %vm354, %v297, 0
      %358 = vmatprep.subr.mxu0 0.0
      %359 = vmatpush1.msra.mxu0 %v250
      %360 = vmatprep.subr.mxu0 0.0
      %361 = vmatpush1.msra.mxu0 %v249
      %362 = vmatprep.subr.mxu0 0.0
      %363 = vmatpush1.msra.mxu0 %v248
      %364 = vmatprep.subr.mxu0 0.0
      %365 = vmatpush1.msra.mxu0 %v247
      %366 = vmatprep.subr.mxu0 0.0
      %367 = vmatpush1.msra.mxu0 %v246
      %368 = vmatprep.subr.mxu0 0.0
      %369 = vmatpush1.msra.mxu0 %v245
      %370 = vmatprep.subr.mxu0 0.0
      %371 = vmatpush1.msra.mxu0 %v244
      %372 = vmatprep.subr.mxu0 0.0
      %373 = vmatpush1.msra.mxu0 %v243
      %374 = vmatprep.subr.mxu0 0.0
      %375 = vmatpush1.msra.mxu0 %v242
      %376 = vmatprep.subr.mxu0 0.0
      %377 = vmatpush1.msra.mxu0 %v241
      %378 = vmatprep.subr.mxu0 0.0
      %379 = vmatpush1.msra.mxu0 %v240
      %380 = vmatprep.subr.mxu0 0.0
      %381 = vmatpush1.msra.mxu0 %v239
      %382 = vmatprep.subr.mxu0 0.0
      %383 = vmatpush1.msra.mxu0 %v238
      %384 = vmatprep.subr.mxu0 0.0
      %385 = vmatpush1.msra.mxu0 %v237
      %386 = vmatprep.subr.mxu0 0.0
      %387 = vmatpush1.msra.mxu0 %v236
      %388 = vmatprep.subr.mxu0 0.0
      %389 = vmatpush1.msra.mxu0 %v235
      %390 = vmatprep.subr.mxu0 0.0
      %391 = vmatpush2.msra.mxu0 %v266
      %392 = vmatprep.subr.mxu0 0.0
      %393 = vmatpush2.msra.mxu0 %v265
      %394 = vmatprep.subr.mxu0 0.0
      %395 = vmatpush2.msra.mxu0 %v264
      %396 = vmatprep.subr.mxu0 0.0
      %397 = vmatpush2.msra.mxu0 %v263
      %398 = vmatprep.subr.mxu0 0.0
      %399 = vmatpush2.msra.mxu0 %v262
      %400 = vmatprep.subr.mxu0 0.0
      %401 = vmatpush2.msra.mxu0 %v261
      %402 = vmatprep.subr.mxu0 0.0
      %403 = vmatpush2.msra.mxu0 %v260
      %404 = vmatprep.subr.mxu0 0.0
      %405 = vmatpush2.msra.mxu0 %v259
      %406 = vmatprep.subr.mxu0 0.0
      %407 = vmatpush2.msra.mxu0 %v258
      %408 = vmatprep.subr.mxu0 0.0
      %409 = vmatpush2.msra.mxu0 %v257
      %410 = vmatprep.subr.mxu0 0.0
      %411 = vmatpush2.msra.mxu0 %v256
      %412 = vmatprep.subr.mxu0 0.0
      %413 = vmatpush2.msra.mxu0 %v255
      %414 = vmatprep.subr.mxu0 0.0
      %415 = vmatpush2.msra.mxu0 %v254
      %416 = vmatprep.subr.mxu0 0.0
      %417 = vmatpush2.msra.mxu0 %v253
      %418 = vmatprep.subr.mxu0 0.0
      %419 = vmatpush2.msra.mxu0 %v252
      %420 = vmatprep.subr.mxu0 0.0
      %421 = vmatpush2.msra.mxu0 %v251
      %422 = vmatprep.mubr.f32.mxu0 %v172
      %423 = vmatmul.mubr.f32.gmra.mxu0 %v171
      %v424 = vpop.f32.mrf.mxu0
      %v425 = vadd.f32 %v303, %v424
      %v426 = vpop.f32.mrf.mxu0
      %427 = vmatprep.mubr.f32.mxu0 %v176
      %428 = vmatmul.mubr.f32.gmra.mxu0 %v175
      %v429 = vpop.f32.mrf.mxu0
      %v430 = vadd.f32 %v303, %v429
      %v431 = vpop.f32.mrf.mxu0
      %432 = vmatprep.mubr.f32.mxu0 %v180
      %433 = vmatmul.mubr.f32.gmra.mxu0 %v179
      %v434 = vpop.f32.mrf.mxu0
      %v435 = vadd.f32 %v303, %v434
      %v436 = vpop.f32.mrf.mxu0
      %437 = vmatprep.mubr.f32.mxu0 %v184
      %438 = vmatmul.mubr.f32.gmra.mxu0 %v183
      %v439 = vpop.f32.mrf.mxu0
      %v440 = vadd.f32 %v303, %v439
      %v441 = vpop.f32.mrf.mxu0
      %442 = vmatprep.mubr.f32.mxu0 %v188
      %443 = vmatmul.mubr.f32.gmra.mxu0 %v187
      %v444 = vpop.f32.mrf.mxu0
      %v445 = vadd.f32 %v303, %v444
      %v446 = vpop.f32.mrf.mxu0
      %447 = vmatprep.mubr.f32.mxu0 %v192
      %448 = vmatmul.mubr.f32.gmra.mxu0 %v191
      %v449 = vpop.f32.mrf.mxu0
      %v450 = vadd.f32 %v303, %v449
      %v451 = vpop.f32.mrf.mxu0
      %452 = vmatprep.mubr.f32.mxu0 %v196
      %453 = vmatmul.mubr.f32.gmra.mxu0 %v195
      %v454 = vpop.f32.mrf.mxu0
      %v455 = vadd.f32 %v303, %v454
      %v456 = vpop.f32.mrf.mxu0
      %457 = vmatprep.mubr.f32.mxu0 %v200
      %458 = vmatmul.mubr.f32.gmra.mxu0 %v199
      %v459 = vpop.f32.mrf.mxu0
      %v460 = vadd.f32 %v303, %v459
      %v461 = vpop.f32.mrf.mxu0
      %462 = vmatprep.mubr.f32.mxu0 %v204
      %463 = vmatmul.mubr.f32.gmra.mxu0 %v203
      %v464 = vpop.f32.mrf.mxu0
      %v465 = vadd.f32 %v303, %v464
      %v466 = vpop.f32.mrf.mxu0
      %467 = vmatprep.mubr.f32.mxu0 %v208
      %468 = vmatmul.mubr.f32.gmra.mxu0 %v207
      %v469 = vpop.f32.mrf.mxu0
      %v470 = vadd.f32 %v303, %v469
      %v471 = vpop.f32.mrf.mxu0
      %472 = vmatprep.mubr.f32.mxu0 %v212
      %473 = vmatmul.mubr.f32.gmra.mxu0 %v211
      %v474 = vpop.f32.mrf.mxu0
      %v475 = vadd.f32 %v303, %v474
      %v476 = vpop.f32.mrf.mxu0
      %477 = vmatprep.mubr.f32.mxu0 %v216
      %478 = vmatmul.mubr.f32.gmra.mxu0 %v215
      %v479 = vpop.f32.mrf.mxu0
      %v480 = vadd.f32 %v303, %v479
      %v481 = vpop.f32.mrf.mxu0
      %482 = vmatprep.mubr.f32.mxu0 %v220
      %483 = vmatmul.mubr.f32.gmra.mxu0 %v219
      %v484 = vpop.f32.mrf.mxu0
      %v485 = vadd.f32 %v303, %v484
      %v486 = vpop.f32.mrf.mxu0
      %487 = vmatprep.mubr.f32.mxu0 %v224
      %488 = vmatmul.mubr.f32.gmra.mxu0 %v223
      %v489 = vpop.f32.mrf.mxu0
      %v490 = vadd.f32 %v303, %v489
      %v491 = vpop.f32.mrf.mxu0
      %492 = vmatprep.mubr.f32.mxu0 %v228
      %493 = vmatmul.mubr.f32.gmra.mxu0 %v227
      %v494 = vpop.f32.mrf.mxu0
      %v495 = vadd.f32 %v303, %v494
      %v496 = vpop.f32.mrf.mxu0
      %497 = vmatprep.mubr.f32.mxu0 %v232
      %498 = vmatmul.mubr.f32.gmra.mxu0 %v231
      %v499 = vpop.f32.mrf.mxu0
      %v500 = vadd.f32 %v303, %v499
      %v501 = vpop.f32.mrf.mxu0
      %502 = vdwg.mxu0
      %503 = vmatprep.subr.mxu0 0.0
      %504 = vmatpush1.msra.mxu0 %v282
      %505 = vmatprep.subr.mxu0 0.0
      %506 = vmatpush1.msra.mxu0 %v281
      %507 = vmatprep.subr.mxu0 0.0
      %508 = vmatpush1.msra.mxu0 %v280
      %509 = vmatprep.subr.mxu0 0.0
      %510 = vmatpush1.msra.mxu0 %v279
      %511 = vmatprep.subr.mxu0 0.0
      %512 = vmatpush1.msra.mxu0 %v278
      %513 = vmatprep.subr.mxu0 0.0
      %514 = vmatpush1.msra.mxu0 %v277
      %515 = vmatprep.subr.mxu0 0.0
      %516 = vmatpush1.msra.mxu0 %v276
      %517 = vmatprep.subr.mxu0 0.0
      %518 = vmatpush1.msra.mxu0 %v275
      %519 = vmatprep.subr.mxu0 0.0
      %520 = vmatpush1.msra.mxu0 %v274
      %521 = vmatprep.subr.mxu0 0.0
      %522 = vmatpush1.msra.mxu0 %v273
      %523 = vmatprep.subr.mxu0 0.0
      %524 = vmatpush1.msra.mxu0 %v272
      %525 = vmatprep.subr.mxu0 0.0
      %526 = vmatpush1.msra.mxu0 %v271
      %527 = vmatprep.subr.mxu0 0.0
      %528 = vmatpush1.msra.mxu0 %v270
      %529 = vmatprep.subr.mxu0 0.0
      %530 = vmatpush1.msra.mxu0 %v269
      %531 = vmatprep.subr.mxu0 0.0
      %532 = vmatpush1.msra.mxu0 %v268
      %533 = vmatprep.subr.mxu0 0.0
      %534 = vmatpush1.msra.mxu0 %v267
      %535 = vmatprep.subr.mxu0 0.0
      %536 = vmatpush2.msra.mxu0 0.0
      %537 = vmatprep.subr.mxu0 0.0
      %538 = vmatpush2.msra.mxu0 %v356
      %539 = vmatprep.subr.mxu0 0.0
      %540 = vmatpush2.msra.mxu0 %v296
      %541 = vmatprep.subr.mxu0 0.0
      %542 = vmatpush2.msra.mxu0 %v295
      %543 = vmatprep.subr.mxu0 0.0
      %544 = vmatpush2.msra.mxu0 %v294
      %545 = vmatprep.subr.mxu0 0.0
      %546 = vmatpush2.msra.mxu0 %v293
      %547 = vmatprep.subr.mxu0 0.0
      %548 = vmatpush2.msra.mxu0 %v292
      %549 = vmatprep.subr.mxu0 0.0
      %550 = vmatpush2.msra.mxu0 %v291
      %551 = vmatprep.subr.mxu0 0.0
      %552 = vmatpush2.msra.mxu0 %v290
      %553 = vmatprep.subr.mxu0 0.0
      %554 = vmatpush2.msra.mxu0 %v289
      %555 = vmatprep.subr.mxu0 0.0
      %556 = vmatpush2.msra.mxu0 %v288
      %557 = vmatprep.subr.mxu0 0.0
      %558 = vmatpush2.msra.mxu0 %v287
      %559 = vmatprep.subr.mxu0 0.0
      %560 = vmatpush2.msra.mxu0 %v286
      %561 = vmatprep.subr.mxu0 0.0
      %562 = vmatpush2.msra.mxu0 %v285
      %563 = vmatprep.subr.mxu0 0.0
      %564 = vmatpush2.msra.mxu0 %v284
      %565 = vmatprep.subr.mxu0 0.0
      %566 = vmatpush2.msra.mxu0 %v283
      %567 = vmatprep.mubr.f32.mxu0 %v307
      %568 = vmatmul.mubr.f32.gmra.mxu0 %v173
      %v569 = vpop.f32.mrf.mxu0
      %v570 = vadd.f32 %v425, %v569
      %v571 = vpop.f32.mrf.mxu0
      %572 = vmatprep.mubr.f32.mxu0 %v310
      %573 = vmatmul.mubr.f32.gmra.mxu0 %v177
      %v574 = vpop.f32.mrf.mxu0
      %v575 = vadd.f32 %v430, %v574
      %v576 = vpop.f32.mrf.mxu0
      %577 = vmatprep.mubr.f32.mxu0 %v313
      %578 = vmatmul.mubr.f32.gmra.mxu0 %v181
      %v579 = vpop.f32.mrf.mxu0
      %v580 = vadd.f32 %v435, %v579
      %v581 = vpop.f32.mrf.mxu0
      %582 = vmatprep.mubr.f32.mxu0 %v316
      %583 = vmatmul.mubr.f32.gmra.mxu0 %v185
      %v584 = vpop.f32.mrf.mxu0
      %v585 = vadd.f32 %v440, %v584
      %v586 = vpop.f32.mrf.mxu0
      %587 = vmatprep.mubr.f32.mxu0 %v319
      %588 = vmatmul.mubr.f32.gmra.mxu0 %v189
      %v589 = vpop.f32.mrf.mxu0
      %v590 = vadd.f32 %v445, %v589
      %v591 = vpop.f32.mrf.mxu0
      %592 = vmatprep.mubr.f32.mxu0 %v322
      %593 = vmatmul.mubr.f32.gmra.mxu0 %v193
      %v594 = vpop.f32.mrf.mxu0
      %v595 = vadd.f32 %v450, %v594
      %v596 = vpop.f32.mrf.mxu0
      %597 = vmatprep.mubr.f32.mxu0 %v325
      %598 = vmatmul.mubr.f32.gmra.mxu0 %v197
      %v599 = vpop.f32.mrf.mxu0
      %v600 = vadd.f32 %v455, %v599
      %v601 = vpop.f32.mrf.mxu0
      %602 = vmatprep.mubr.f32.mxu0 %v328
      %603 = vmatmul.mubr.f32.gmra.mxu0 %v201
      %v604 = vpop.f32.mrf.mxu0
      %v605 = vadd.f32 %v460, %v604
      %v606 = vpop.f32.mrf.mxu0
      %607 = vmatprep.mubr.f32.mxu0 %v331
      %608 = vmatmul.mubr.f32.gmra.mxu0 %v205
      %v609 = vpop.f32.mrf.mxu0
      %v610 = vadd.f32 %v465, %v609
      %v611 = vpop.f32.mrf.mxu0
      %612 = vmatprep.mubr.f32.mxu0 %v334
      %613 = vmatmul.mubr.f32.gmra.mxu0 %v209
      %v614 = vpop.f32.mrf.mxu0
      %v615 = vadd.f32 %v470, %v614
      %v616 = vpop.f32.mrf.mxu0
      %617 = vmatprep.mubr.f32.mxu0 %v337
      %618 = vmatmul.mubr.f32.gmra.mxu0 %v213
      %v619 = vpop.f32.mrf.mxu0
      %v620 = vadd.f32 %v475, %v619
      %v621 = vpop.f32.mrf.mxu0
      %622 = vmatprep.mubr.f32.mxu0 %v340
      %623 = vmatmul.mubr.f32.gmra.mxu0 %v217
      %v624 = vpop.f32.mrf.mxu0
      %v625 = vadd.f32 %v480, %v624
      %v626 = vpop.f32.mrf.mxu0
      %627 = vmatprep.mubr.f32.mxu0 %v343
      %628 = vmatmul.mubr.f32.gmra.mxu0 %v221
      %v629 = vpop.f32.mrf.mxu0
      %v630 = vadd.f32 %v485, %v629
      %v631 = vpop.f32.mrf.mxu0
      %632 = vmatprep.mubr.f32.mxu0 %v346
      %633 = vmatmul.mubr.f32.gmra.mxu0 %v225
      %v634 = vpop.f32.mrf.mxu0
      %v635 = vadd.f32 %v490, %v634
      %v636 = vpop.f32.mrf.mxu0
      %637 = vmatprep.mubr.f32.mxu0 %v349
      %638 = vmatmul.mubr.f32.gmra.mxu0 %v229
      %v639 = vpop.f32.mrf.mxu0
      %v640 = vadd.f32 %v495, %v639
      %v641 = vpop.f32.mrf.mxu0
      %642 = vmatprep.mubr.f32.mxu0 %v352
      %643 = vmatmul.mubr.f32.gmra.mxu0 %v233
      %v644 = vpop.f32.mrf.mxu0
      %v645 = vadd.f32 %v500, %v644
      %v646 = vpop.f32.mrf.mxu0
      %647 = vdwg.mxu0
      %v648 = vmax.f32 %v570, %v590
      %v649 = vmax.f32 %v575, %v595
      %v650 = vmax.f32 %v580, %v600
      %v651 = vmax.f32 %v585, %v605
      %v652 = vmax.f32 %v610, %v630
      %v653 = vmax.f32 %v615, %v635
      %v654 = vmax.f32 %v620, %v640
      %v655 = vmax.f32 %v625, %v645
      %v656 = vmax.f32 %v648, %v652
      %v657 = vmax.f32 %v649, %v653
      %v658 = vmax.f32 %v650, %v654
      %v659 = vmax.f32 %v651, %v655
      %vm660 = vcmask 408576
      %661 = vst.msk [vmem:[%s170] sm:$0xff] %vm660, %v656
      %662 = vst.msk [vmem:[%s170 + $0x8] sm:$0xff] %vm660, %v657
      %663 = vst.msk [vmem:[%s170 + $0x10] sm:$0xff] %vm660, %v658
      %664 = vst.msk [vmem:[%s170 + $0x18] sm:$0xff] %vm660, %v659
      %p665 = scmp.lt.s32.totalorder %s14, 1
      %s666 = scalar_select %p665, %s14, 1
      %s667 = smul.addr %s666, 4
      %s668 = smul.addr %s667, 8
      %s669 = scalar_lea.vmem %s3, %s668
      // Predicated region
      $region33: #{forward.4} parent=31 // pred_check
        %p670 = pneg %p100
      $region34: #{forward.4} parent=31 // pred_check_branch
        %672 = sbr.rel (%p670) target = $region36
      $region35: #{forward.4} parent=31 // pred_region
        _
      $region36: #{forward.4} parent=31 // pred_fallthru
        _
    $region32: #{forward.4} parent=5 // pred_fallthru
      _
    %p673 = scmp.le.s32.totalorder 2, %s9
    // Predicated region
    $region37: #{forward.4} parent=5 // pred_check
      %p674 = pneg %p673
    $region38: #{forward.4} parent=5 // pred_check_branch
      %676 = sbr.rel (%p674) target = $region40
    $region39: #{forward.4} parent=5 // pred_region
      %s677 = ssub.s32 %s9, 2
      // Predicated region
      $region41: #{forward.4} parent=39 // pred_check
        %p678 = pneg %p106
      $region42: #{forward.4} parent=39 // pred_check_branch
        %680 = sbr.rel (%p678) target = $region44
      $region43: #{forward.4} parent=39 // pred_region
        %p681 = scmp.lt.s32.totalorder %s15, 1
        %s682 = scalar_select %p681, %s15, 1
        %s683 = smul.addr %s682, 4
        %s684 = smul.addr %s683, 8
        %s685 = scalar_lea.vmem %s3, %s684
      $region44: #{forward.4} parent=39 // pred_fallthru
        _
    $region40: #{forward.4} parent=5 // pred_fallthru
      _
  $region6: #{forward.4} parent=0 // loop_footer
    %s13 = sadd.s32 1, %s9
  $region7: #{forward.4} parent=0 // loop_footer_branch
    %8 = sbr.rel target = $region3
  $region8: #{forward.4} parent=0 // loop_exit
    _

// kernel: forward.5
$region0: #{forward.5}
  #allocation0 [shape = 'u32[]', space=smem, size = 0x4, offset = 0x4, fixed_abs, tag = 'smem constant byte address 0x4 - core index']
  #allocation1 [shape = 'u32[144,128]{1,0:T(1,128)}', space=vmem, size = 0x12000, scoped, tag = 'internal scratch']
  %s0 = inlined_call_operand.vmem [shape: f32[2,2,800], index: 0, kind: input, shape index: {}]
  %s1 = inlined_call_operand.vmem [shape: f32[800,500], index: 1, kind: input, shape index: {}]
  %s2 = inlined_call_operand.vmem [shape: f32[1,500], index: 2, kind: input, shape index: {}]
  %s3 = inlined_call_operand.vmem [shape: f32[500,10], index: 3, kind: input, shape index: {}]
  %s4 = inlined_call_operand.vmem [shape: f32[1,10], index: 4, kind: input, shape index: {}]
  %s5 = inlined_call_operand.vmem [shape: f32[10,2], index: 5, kind: input, shape index: {}]
  %s6 = inlined_call_operand.vmem [shape: f32[1,2], index: 6, kind: input, shape index: {}]
  %s7 = inlined_call_operand.vmem [shape: f32[2,2,2], index: 7, kind: output, shape index: {}]
  %s8 = sld [smem:[#allocation0]]
  $region61: #{forward.5} parent=0
    _
  %s10 = ssub.s32 1, %s8
  %s11 = scalar_select 0, %s10, %s8
  loop: start=0, step=1, limit=4
  $region2: #{forward.5} parent=0 // loop_pre_header
    _
  $region3: #{forward.5} parent=0 // loop_header
    %s13 = sphi 0, %s17
    %p14 = scmp.ge.s32.totalorder %s13, 4
    %s23 = sphi 0, %s25
    %s26 = sphi 0, %s23
    %s27 = sphi 0, %s26
    %s43 = sphi 0, %s27
    %s47 = sphi 0, %s47
    %s49 = sphi 0, %s47
    %s50 = sphi 0, %s49
    %s64 = sphi 0, %s50
    %s68 = sphi 0, %s68
    %s70 = sphi 0, %s68
    %s71 = sphi 0, %s70
    %s85 = sphi 0, %s71
    %s89 = sphi 0, %s89
    %s91 = sphi 0, %s89
    %s92 = sphi 0, %s91
    %s106 = sphi 0, %s92
    %s110 = sphi 0, %s110
    %s112 = sphi 0, %s110
    %s113 = sphi 0, %s112
    %s127 = sphi 0, %s113
    %s131 = sphi 0, %s131
    %s133 = sphi 0, %s131
    %s134 = sphi 0, %s133
    %s148 = sphi 0, %s134
    %s152 = sphi 0, %s152
    %s154 = sphi 0, %s152
    %s155 = sphi 0, %s154
    %s169 = sphi 0, %s155
    %s175 = sphi 0, %s177
    %s178 = sphi 0, %s175
    %s179 = sphi 0, %s178
    %s195 = sphi 0, %s179
  $region4: #{forward.5} parent=0 // loop_header_branch
    %16 = sbr.rel (%p14) target = $region8
  $region5: #{forward.5} parent=0 // loop_body
    %s18 = ssub.s32 %s13, 1
    %s19 = ssub.s32 %s13, 2
    %s20 = sadd.s32 %s13, 1
    %s21 = ssub.s32 %s13, %s20
    %p22 = scmp.eq.s32.totalorder %s21, 0
    %s24 = sadd.s32 %s23, 1
    %s25 = scalar_select %p22, %s23, %s24
    %p28 = pneg %p22
    %p29 = scmp.eq.s32.totalorder %s13, 1
    %p30 = por %p28, %p29
    %p31 = scmp.ne.s32.totalorder %s23, %s26
    %p32 = scmp.eq.s32.totalorder %s13, 0
    %p33 = por %p31, %p32
    %p34 = scmp.ne.s32.totalorder %s23, %s26
    %p35 = scmp.eq.s32.totalorder %s18, 1
    %p36 = por %p34, %p35
    %p37 = scmp.ne.s32.totalorder %s26, %s27
    %p38 = scmp.eq.s32.totalorder %s18, 0
    %p39 = por %p37, %p38
    %p40 = scmp.ne.s32.totalorder %s26, %s27
    %p41 = scmp.eq.s32.totalorder %s19, 1
    %p42 = por %p40, %p41
    %p44 = scmp.ne.s32.totalorder %s27, %s43
    %p45 = scmp.eq.s32.totalorder %s19, 0
    %p46 = por %p44, %p45
    %s48 = sadd.s32 %s47, 1
    %p51 = scmp.eq.s32.totalorder %s13, 1
    %p52 = scmp.ne.s32.totalorder %s47, %s49
    %p53 = scmp.eq.s32.totalorder %s13, 0
    %p54 = por %p52, %p53
    %p55 = scmp.ne.s32.totalorder %s47, %s49
    %p56 = scmp.eq.s32.totalorder %s18, 1
    %p57 = por %p55, %p56
    %p58 = scmp.ne.s32.totalorder %s49, %s50
    %p59 = scmp.eq.s32.totalorder %s18, 0
    %p60 = por %p58, %p59
    %p61 = scmp.ne.s32.totalorder %s49, %s50
    %p62 = scmp.eq.s32.totalorder %s19, 1
    %p63 = por %p61, %p62
    %p65 = scmp.ne.s32.totalorder %s50, %s64
    %p66 = scmp.eq.s32.totalorder %s19, 0
    %p67 = por %p65, %p66
    %s69 = sadd.s32 %s68, 1
    %p72 = scmp.eq.s32.totalorder %s13, 1
    %p73 = scmp.ne.s32.totalorder %s68, %s70
    %p74 = scmp.eq.s32.totalorder %s13, 0
    %p75 = por %p73, %p74
    %p76 = scmp.ne.s32.totalorder %s68, %s70
    %p77 = scmp.eq.s32.totalorder %s18, 1
    %p78 = por %p76, %p77
    %p79 = scmp.ne.s32.totalorder %s70, %s71
    %p80 = scmp.eq.s32.totalorder %s18, 0
    %p81 = por %p79, %p80
    %p82 = scmp.ne.s32.totalorder %s70, %s71
    %p83 = scmp.eq.s32.totalorder %s19, 1
    %p84 = por %p82, %p83
    %p86 = scmp.ne.s32.totalorder %s71, %s85
    %p87 = scmp.eq.s32.totalorder %s19, 0
    %p88 = por %p86, %p87
    %s90 = sadd.s32 %s89, 1
    %p93 = scmp.eq.s32.totalorder %s13, 1
    %p94 = scmp.ne.s32.totalorder %s89, %s91
    %p95 = scmp.eq.s32.totalorder %s13, 0
    %p96 = por %p94, %p95
    %p97 = scmp.ne.s32.totalorder %s89, %s91
    %p98 = scmp.eq.s32.totalorder %s18, 1
    %p99 = por %p97, %p98
    %p100 = scmp.ne.s32.totalorder %s91, %s92
    %p101 = scmp.eq.s32.totalorder %s18, 0
    %p102 = por %p100, %p101
    %p103 = scmp.ne.s32.totalorder %s91, %s92
    %p104 = scmp.eq.s32.totalorder %s19, 1
    %p105 = por %p103, %p104
    %p107 = scmp.ne.s32.totalorder %s92, %s106
    %p108 = scmp.eq.s32.totalorder %s19, 0
    %p109 = por %p107, %p108
    %s111 = sadd.s32 %s110, 1
    %p114 = scmp.eq.s32.totalorder %s13, 1
    %p115 = scmp.ne.s32.totalorder %s110, %s112
    %p116 = scmp.eq.s32.totalorder %s13, 0
    %p117 = por %p115, %p116
    %p118 = scmp.ne.s32.totalorder %s110, %s112
    %p119 = scmp.eq.s32.totalorder %s18, 1
    %p120 = por %p118, %p119
    %p121 = scmp.ne.s32.totalorder %s112, %s113
    %p122 = scmp.eq.s32.totalorder %s18, 0
    %p123 = por %p121, %p122
    %p124 = scmp.ne.s32.totalorder %s112, %s113
    %p125 = scmp.eq.s32.totalorder %s19, 1
    %p126 = por %p124, %p125
    %p128 = scmp.ne.s32.totalorder %s113, %s127
    %p129 = scmp.eq.s32.totalorder %s19, 0
    %p130 = por %p128, %p129
    %s132 = sadd.s32 %s131, 1
    %p135 = scmp.eq.s32.totalorder %s13, 1
    %p136 = scmp.ne.s32.totalorder %s131, %s133
    %p137 = scmp.eq.s32.totalorder %s13, 0
    %p138 = por %p136, %p137
    %p139 = scmp.ne.s32.totalorder %s131, %s133
    %p140 = scmp.eq.s32.totalorder %s18, 1
    %p141 = por %p139, %p140
    %p142 = scmp.ne.s32.totalorder %s133, %s134
    %p143 = scmp.eq.s32.totalorder %s18, 0
    %p144 = por %p142, %p143
    %p145 = scmp.ne.s32.totalorder %s133, %s134
    %p146 = scmp.eq.s32.totalorder %s19, 1
    %p147 = por %p145, %p146
    %p149 = scmp.ne.s32.totalorder %s134, %s148
    %p150 = scmp.eq.s32.totalorder %s19, 0
    %p151 = por %p149, %p150
    %s153 = sadd.s32 %s152, 1
    %p156 = scmp.eq.s32.totalorder %s13, 1
    %p157 = scmp.ne.s32.totalorder %s152, %s154
    %p158 = scmp.eq.s32.totalorder %s13, 0
    %p159 = por %p157, %p158
    %p160 = scmp.ne.s32.totalorder %s152, %s154
    %p161 = scmp.eq.s32.totalorder %s18, 1
    %p162 = por %p160, %p161
    %p163 = scmp.ne.s32.totalorder %s154, %s155
    %p164 = scmp.eq.s32.totalorder %s18, 0
    %p165 = por %p163, %p164
    %p166 = scmp.ne.s32.totalorder %s154, %s155
    %p167 = scmp.eq.s32.totalorder %s19, 1
    %p168 = por %p166, %p167
    %p170 = scmp.ne.s32.totalorder %s155, %s169
    %p171 = scmp.eq.s32.totalorder %s19, 0
    %p172 = por %p170, %p171
    %s173 = ssub.s32 %s13, %s20
    %p174 = scmp.eq.s32.totalorder %s173, 0
    %s176 = sadd.s32 %s175, 1
    %s177 = scalar_select %p174, %s175, %s176
    %p180 = pneg %p174
    %p181 = scmp.eq.s32.totalorder %s13, 1
    %p182 = por %p180, %p181
    %p183 = scmp.ne.s32.totalorder %s175, %s178
    %p184 = scmp.eq.s32.totalorder %s13, 0
    %p185 = por %p183, %p184
    %p186 = scmp.ne.s32.totalorder %s175, %s178
    %p187 = scmp.eq.s32.totalorder %s18, 1
    %p188 = por %p186, %p187
    %p189 = scmp.ne.s32.totalorder %s178, %s179
    %p190 = scmp.eq.s32.totalorder %s18, 0
    %p191 = por %p189, %p190
    %p192 = scmp.ne.s32.totalorder %s178, %s179
    %p193 = scmp.eq.s32.totalorder %s19, 1
    %p194 = por %p192, %p193
    %p196 = scmp.ne.s32.totalorder %s179, %s195
    %p197 = scmp.eq.s32.totalorder %s19, 0
    %p198 = por %p196, %p197
    %p199 = scmp.le.s32.totalorder 1, %s13
    %p200 = scmp.lt.s32.totalorder %s13, 3
    %p201 = pnand %p199, %p200
    %p202 = pneg %p201
    // Predicated region
    $region9: #{forward.5} parent=5 // pred_check
      _
    $region10: #{forward.5} parent=5 // pred_check_branch
      %204 = sbr.rel (%p201) target = $region12
    $region11: #{forward.5} parent=5 // pred_region
      %s205 = ssub.s32 %s13, 1
      // Predicated region
      $region13: #{forward.5} parent=11 // pred_check
        %p206 = pneg %p60
      $region14: #{forward.5} parent=11 // pred_check_branch
        %208 = sbr.rel (%p206) target = $region16
      $region15: #{forward.5} parent=11 // pred_region
        _
      $region16: #{forward.5} parent=11 // pred_fallthru
        _
      // Predicated region
      $region17: #{forward.5} parent=11 // pred_check
        %p209 = pneg %p81
      $region18: #{forward.5} parent=11 // pred_check_branch
        %211 = sbr.rel (%p209) target = $region20
      $region19: #{forward.5} parent=11 // pred_region
        _
      $region20: #{forward.5} parent=11 // pred_fallthru
        _
      // Predicated region
      $region21: #{forward.5} parent=11 // pred_check
        %p212 = pneg %p102
      $region22: #{forward.5} parent=11 // pred_check_branch
        %214 = sbr.rel (%p212) target = $region24
      $region23: #{forward.5} parent=11 // pred_region
        _
      $region24: #{forward.5} parent=11 // pred_fallthru
        _
      // Predicated region
      $region25: #{forward.5} parent=11 // pred_check
        %p215 = pneg %p123
      $region26: #{forward.5} parent=11 // pred_check_branch
        %217 = sbr.rel (%p215) target = $region28
      $region27: #{forward.5} parent=11 // pred_region
        _
      $region28: #{forward.5} parent=11 // pred_fallthru
        _
      // Predicated region
      $region29: #{forward.5} parent=11 // pred_check
        %p218 = pneg %p144
      $region30: #{forward.5} parent=11 // pred_check_branch
        %220 = sbr.rel (%p218) target = $region32
      $region31: #{forward.5} parent=11 // pred_region
        _
      $region32: #{forward.5} parent=11 // pred_fallthru
        _
      // Predicated region
      $region33: #{forward.5} parent=11 // pred_check
        %p221 = pneg %p165
      $region34: #{forward.5} parent=11 // pred_check_branch
        %223 = sbr.rel (%p221) target = $region36
      $region35: #{forward.5} parent=11 // pred_region
        _
      $region36: #{forward.5} parent=11 // pred_fallthru
        _
    $region12: #{forward.5} parent=5 // pred_fallthru
      _
    %p224 = scmp.lt.s32.totalorder %s13, 2
    // Predicated region
    $region37: #{forward.5} parent=5 // pred_check
      %p225 = pneg %p224
    $region38: #{forward.5} parent=5 // pred_check_branch
      %227 = sbr.rel (%p225) target = $region40
    $region39: #{forward.5} parent=5 // pred_region
      // Predicated region
      $region41: #{forward.5} parent=39 // pred_check
        %p228 = pneg %p33
      $region42: #{forward.5} parent=39 // pred_check_branch
        %230 = sbr.rel (%p228) target = $region44
      $region43: #{forward.5} parent=39 // pred_region
        %p231 = scmp.lt.s32.totalorder %s13, 1
        %s232 = scalar_select %p231, %s13, 1
        %s233 = smul.addr %s232, 7
        %s234 = smul.addr %s233, 2
        %s235 = scalar_lea.vmem %s0, %s234
      $region44: #{forward.5} parent=39 // pred_fallthru
        _
    $region40: #{forward.5} parent=5 // pred_fallthru
      _
    %p236 = scmp.le.s32.totalorder 1, %s13
    %p237 = scmp.lt.s32.totalorder %s13, 3
    %p238 = pnand %p236, %p237
    %p239 = pneg %p238
    // Predicated region
    $region45: #{forward.5} parent=5 // pred_check
      _
    $region46: #{forward.5} parent=5 // pred_check_branch
      %241 = sbr.rel (%p238) target = $region48
    $region47: #{forward.5} parent=5 // pred_region
      %s242 = ssub.s32 %s13, 1
      %p243 = scmp.lt.s32.totalorder %s18, 1
      %s244 = scalar_select %p243, %s18, 1
      %s245 = smul.addr %s244, 7
      %s246 = smul.addr %s245, 2
      %s247 = scalar_lea.vmem %s0, %s246
      %p248 = pneg %p39
      %p249 = pneg %p36
      %p250 = pneg %p60
      %p251 = pneg %p57
      %p252 = pneg %p81
      %p253 = pneg %p78
      %p254 = pneg %p102
      %p255 = pneg %p99
      %p256 = pneg %p123
      %p257 = pneg %p120
      %p258 = pneg %p144
      %p259 = pneg %p141
      %p260 = pneg %p165
      %p261 = pneg %p162
      %p262 = pneg %p191
      %p263 = pneg %p188
      %p264 = scmp.lt.s32.totalorder %s18, 1
      %s265 = scalar_select %p264, %s18, 1
      %s266 = smul.addr %s265, 2
      %s267 = scalar_lea.vmem %s7, %s266
      %p268 = scmp.lt.s32.totalorder %s18, 1
      %s269 = scalar_select %p268, %s18, 1
      %s270 = smul.addr %s269, 7
      %s271 = smul.addr %s270, 2
      %s272 = scalar_lea.vmem %s0, %s271
      %p273 = scmp.lt.s32.totalorder %s18, 1
      %s274 = scalar_select %p273, %s18, 1
      %s275 = smul.addr %s274, 2
      %s276 = scalar_lea.vmem %s7, %s275
      %v277 = vld [vmem:[%s272] sm:$0xff]
      %v278 = vld [vmem:[%s272 + $0x8] sm:$0x3f]
      %v279 = vld [vmem:[%s1] sm:$0xff]
      %v280 = vld [vmem:[%s1 + $0x8] sm:$0xff]
      %v281 = vld [vmem:[%s1 + $0x10] sm:$0xff]
      %v282 = vld [vmem:[%s1 + $0x18] sm:$0xff]
      %v283 = vld [vmem:[%s1 + $0x20] sm:$0xff]
      %v284 = vld [vmem:[%s1 + $0x28] sm:$0xff]
      %v285 = vld [vmem:[%s1 + $0x30] sm:$0xff]
      %v286 = vld [vmem:[%s1 + $0x38] sm:$0xff]
      %v287 = vld [vmem:[%s1 + $0x40] sm:$0xff]
      %v288 = vld [vmem:[%s1 + $0x48] sm:$0xff]
      %v289 = vld [vmem:[%s1 + $0x50] sm:$0xff]
      %v290 = vld [vmem:[%s1 + $0x58] sm:$0xff]
      %v291 = vld [vmem:[%s1 + $0x60] sm:$0xff]
      %v292 = vld [vmem:[%s1 + $0x68] sm:$0xff]
      %v293 = vld [vmem:[%s1 + $0x70] sm:$0xff]
      %v294 = vld [vmem:[%s1 + $0x78] sm:$0xff]
      %v295 = vld [vmem:[%s1 + $0x80] sm:$0xff]
      %v296 = vld [vmem:[%s1 + $0x88] sm:$0xff]
      %v297 = vld [vmem:[%s1 + $0x90] sm:$0xff]
      %v298 = vld [vmem:[%s1 + $0x98] sm:$0xff]
      %v299 = vld [vmem:[%s1 + $0xa0] sm:$0xff]
      %v300 = vld [vmem:[%s1 + $0xa8] sm:$0xff]
      %v301 = vld [vmem:[%s1 + $0xb0] sm:$0xff]
      %v302 = vld [vmem:[%s1 + $0xb8] sm:$0xff]
      %v303 = vld [vmem:[%s1 + $0xc0] sm:$0xff]
      %v304 = vld [vmem:[%s1 + $0xc8] sm:$0xff]
      %v305 = vld [vmem:[%s1 + $0xd0] sm:$0xff]
      %v306 = vld [vmem:[%s1 + $0xd8] sm:$0xff]
      %v307 = vld [vmem:[%s1 + $0xe0] sm:$0xff]
      %v308 = vld [vmem:[%s1 + $0xe8] sm:$0xff]
      %v309 = vld [vmem:[%s1 + $0xf0] sm:$0xff]
      %v310 = vld [vmem:[%s1 + $0xf8] sm:$0xff]
      %v311 = vld [vmem:[%s1 + $0x100] sm:$0xff]
      %v312 = vld [vmem:[%s1 + $0x108] sm:$0xff]
      %v313 = vld [vmem:[%s1 + $0x110] sm:$0xff]
      %v314 = vld [vmem:[%s1 + $0x118] sm:$0xff]
      %v315 = vld [vmem:[%s1 + $0x120] sm:$0xff]
      %v316 = vld [vmem:[%s1 + $0x128] sm:$0xff]
      %v317 = vld [vmem:[%s1 + $0x130] sm:$0xff]
      %v318 = vld [vmem:[%s1 + $0x138] sm:$0xff]
      %v319 = vld [vmem:[%s1 + $0x140] sm:$0xff]
      %v320 = vld [vmem:[%s1 + $0x148] sm:$0xff]
      %v321 = vld [vmem:[%s1 + $0x150] sm:$0xff]
      %v322 = vld [vmem:[%s1 + $0x158] sm:$0xff]
      %v323 = vld [vmem:[%s1 + $0x160] sm:$0xff]
      %v324 = vld [vmem:[%s1 + $0x168] sm:$0xff]
      %v325 = vld [vmem:[%s1 + $0x170] sm:$0xff]
      %v326 = vld [vmem:[%s1 + $0x178] sm:$0xff]
      %v327 = vld [vmem:[%s1 + $0x180] sm:$0xff]
      %v328 = vld [vmem:[%s1 + $0x188] sm:$0xff]
      %v329 = vld [vmem:[%s1 + $0x190] sm:$0xff]
      %v330 = vld [vmem:[%s1 + $0x198] sm:$0xff]
      %v331 = vld [vmem:[%s1 + $0x1a0] sm:$0xff]
      %v332 = vld [vmem:[%s1 + $0x1a8] sm:$0xff]
      %v333 = vld [vmem:[%s1 + $0x1b0] sm:$0xff]
      %v334 = vld [vmem:[%s1 + $0x1b8] sm:$0xff]
      %v335 = vld [vmem:[%s1 + $0x1c0] sm:$0xff]
      %v336 = vld [vmem:[%s1 + $0x1c8] sm:$0xff]
      %v337 = vld [vmem:[%s1 + $0x1d0] sm:$0xff]
      %v338 = vld [vmem:[%s1 + $0x1d8] sm:$0xff]
      %v339 = vld [vmem:[%s1 + $0x1e0] sm:$0xff]
      %v340 = vld [vmem:[%s1 + $0x1e8] sm:$0xff]
      %v341 = vld [vmem:[%s1 + $0x1f0] sm:$0xff]
      %v342 = vld [vmem:[%s1 + $0x1f8] sm:$0xff]
      %v343 = vld [vmem:[%s1 + $0x200] sm:$0xff]
      %v344 = vld [vmem:[%s1 + $0x208] sm:$0xff]
      %v345 = vld [vmem:[%s1 + $0x210] sm:$0xff]
      %v346 = vld [vmem:[%s1 + $0x218] sm:$0xff]
      %v347 = vld [vmem:[%s1 + $0x220] sm:$0xff]
      %v348 = vld [vmem:[%s1 + $0x228] sm:$0xff]
      %v349 = vld [vmem:[%s1 + $0x230] sm:$0xff]
      %v350 = vld [vmem:[%s1 + $0x238] sm:$0xff]
      %v351 = vld [vmem:[%s1 + $0x240] sm:$0xff]
      %v352 = vld [vmem:[%s1 + $0x248] sm:$0xff]
      %v353 = vld [vmem:[%s1 + $0x250] sm:$0xff]
      %v354 = vld [vmem:[%s1 + $0x258] sm:$0xff]
      %v355 = vld [vmem:[%s1 + $0x260] sm:$0xff]
      %v356 = vld [vmem:[%s1 + $0x268] sm:$0xff]
      %v357 = vld [vmem:[%s1 + $0x270] sm:$0xff]
      %v358 = vld [vmem:[%s1 + $0x278] sm:$0xff]
      %v359 = vld [vmem:[%s1 + $0x280] sm:$0xff]
      %v360 = vld [vmem:[%s1 + $0x288] sm:$0xff]
      %v361 = vld [vmem:[%s1 + $0x290] sm:$0xff]
      %v362 = vld [vmem:[%s1 + $0x298] sm:$0xff]
      %v363 = vld [vmem:[%s1 + $0x2a0] sm:$0xff]
      %v364 = vld [vmem:[%s1 + $0x2a8] sm:$0xff]
      %v365 = vld [vmem:[%s1 + $0x2b0] sm:$0xff]
      %v366 = vld [vmem:[%s1 + $0x2b8] sm:$0xff]
      %v367 = vld [vmem:[%s1 + $0x2c0] sm:$0xff]
      %v368 = vld [vmem:[%s1 + $0x2c8] sm:$0xff]
      %v369 = vld [vmem:[%s1 + $0x2d0] sm:$0xff]
      %v370 = vld [vmem:[%s1 + $0x2d8] sm:$0xff]
      %v371 = vld [vmem:[%s1 + $0x2e0] sm:$0xff]
      %v372 = vld [vmem:[%s1 + $0x2e8] sm:$0xff]
      %v373 = vld [vmem:[%s1 + $0x2f0] sm:$0xff]
      %v374 = vld [vmem:[%s1 + $0x2f8] sm:$0xff]
      %v375 = vld [vmem:[%s1 + $0x300] sm:$0xff]
      %v376 = vld [vmem:[%s1 + $0x308] sm:$0xff]
      %v377 = vld [vmem:[%s1 + $0x310] sm:$0xff]
      %v378 = vld [vmem:[%s1 + $0x318] sm:$0xff]
      %v379 = vld [vmem:[%s1 + $0x320] sm:$0xff]
      %v380 = vld [vmem:[%s1 + $0x328] sm:$0xff]
      %v381 = vld [vmem:[%s1 + $0x330] sm:$0xff]
      %v382 = vld [vmem:[%s1 + $0x338] sm:$0xff]
      %v383 = vld [vmem:[%s1 + $0x340] sm:$0xff]
      %v384 = vld [vmem:[%s1 + $0x348] sm:$0xff]
      %v385 = vld [vmem:[%s1 + $0x350] sm:$0xff]
      %v386 = vld [vmem:[%s1 + $0x358] sm:$0xff]
      %v387 = vld [vmem:[%s1 + $0x360] sm:$0xff]
      %v388 = vld [vmem:[%s1 + $0x368] sm:$0xff]
      %v389 = vld [vmem:[%s1 + $0x370] sm:$0xff]
      %v390 = vld [vmem:[%s1 + $0x378] sm:$0xff]
      %v391 = vld [vmem:[%s1 + $0x380] sm:$0xff]
      %v392 = vld [vmem:[%s1 + $0x388] sm:$0xff]
      %v393 = vld [vmem:[%s1 + $0x390] sm:$0xff]
      %v394 = vld [vmem:[%s1 + $0x398] sm:$0xff]
      %v395 = vld [vmem:[%s1 + $0x3a0] sm:$0xff]
      %v396 = vld [vmem:[%s1 + $0x3a8] sm:$0xff]
      %v397 = vld [vmem:[%s1 + $0x3b0] sm:$0xff]
      %v398 = vld [vmem:[%s1 + $0x3b8] sm:$0xff]
      %v399 = vld [vmem:[%s1 + $0x3c0] sm:$0xff]
      %v400 = vld [vmem:[%s1 + $0x3c8] sm:$0xff]
      %v401 = vld [vmem:[%s1 + $0x3d0] sm:$0xff]
      %v402 = vld [vmem:[%s1 + $0x3d8] sm:$0xff]
      %v403 = vld [vmem:[%s1 + $0x3e0] sm:$0xff]
      %v404 = vld [vmem:[%s1 + $0x3e8] sm:$0xff]
      %v405 = vld [vmem:[%s1 + $0x3f0] sm:$0xff]
      %v406 = vld [vmem:[%s1 + $0x3f8] sm:$0xff]
      %v407 = vld [vmem:[%s1 + $0x400] sm:$0xff]
      %v408 = vld [vmem:[%s1 + $0x408] sm:$0xff]
      %v409 = vld [vmem:[%s1 + $0x410] sm:$0xff]
      %v410 = vld [vmem:[%s1 + $0x418] sm:$0xff]
      %v411 = vld [vmem:[%s1 + $0x420] sm:$0xff]
      %v412 = vld [vmem:[%s1 + $0x428] sm:$0xff]
      %v413 = vld [vmem:[%s1 + $0x430] sm:$0xff]
      %v414 = vld [vmem:[%s1 + $0x438] sm:$0xff]
      %v415 = vld [vmem:[%s1 + $0x440] sm:$0xff]
      %v416 = vld [vmem:[%s1 + $0x448] sm:$0xff]
      %v417 = vld [vmem:[%s1 + $0x450] sm:$0xff]
      %v418 = vld [vmem:[%s1 + $0x458] sm:$0xff]
      %v419 = vld [vmem:[%s1 + $0x460] sm:$0xff]
      %v420 = vld [vmem:[%s1 + $0x468] sm:$0xff]
      %v421 = vld [vmem:[%s1 + $0x470] sm:$0xff]
      %v422 = vld [vmem:[%s1 + $0x478] sm:$0xff]
      %v423 = vld [vmem:[%s1 + $0x480] sm:$0xff]
      %v424 = vld [vmem:[%s1 + $0x488] sm:$0xff]
      %v425 = vld [vmem:[%s1 + $0x490] sm:$0xff]
      %v426 = vld [vmem:[%s1 + $0x498] sm:$0xff]
      %v427 = vld [vmem:[%s1 + $0x4a0] sm:$0xff]
      %v428 = vld [vmem:[%s1 + $0x4a8] sm:$0xff]
      %v429 = vld [vmem:[%s1 + $0x4b0] sm:$0xff]
      %v430 = vld [vmem:[%s1 + $0x4b8] sm:$0xff]
      %v431 = vld [vmem:[%s1 + $0x4c0] sm:$0xff]
      %v432 = vld [vmem:[%s1 + $0x4c8] sm:$0xff]
      %v433 = vld [vmem:[%s1 + $0x4d0] sm:$0xff]
      %v434 = vld [vmem:[%s1 + $0x4d8] sm:$0xff]
      %v435 = vld [vmem:[%s1 + $0x4e0] sm:$0xff]
      %v436 = vld [vmem:[%s1 + $0x4e8] sm:$0xff]
      %v437 = vld [vmem:[%s1 + $0x4f0] sm:$0xff]
      %v438 = vld [vmem:[%s1 + $0x4f8] sm:$0xff]
      %v439 = vld [vmem:[%s1 + $0x500] sm:$0xff]
      %v440 = vld [vmem:[%s1 + $0x508] sm:$0xff]
      %v441 = vld [vmem:[%s1 + $0x510] sm:$0xff]
      %v442 = vld [vmem:[%s1 + $0x518] sm:$0xff]
      %v443 = vld [vmem:[%s1 + $0x520] sm:$0xff]
      %v444 = vld [vmem:[%s1 + $0x528] sm:$0xff]
      %v445 = vld [vmem:[%s1 + $0x530] sm:$0xff]
      %v446 = vld [vmem:[%s1 + $0x538] sm:$0xff]
      %v447 = vld [vmem:[%s1 + $0x540] sm:$0xff]
      %v448 = vld [vmem:[%s1 + $0x548] sm:$0xff]
      %v449 = vld [vmem:[%s1 + $0x550] sm:$0xff]
      %v450 = vld [vmem:[%s1 + $0x558] sm:$0xff]
      %v451 = vld [vmem:[%s1 + $0x560] sm:$0xff]
      %v452 = vld [vmem:[%s1 + $0x568] sm:$0xff]
      %v453 = vld [vmem:[%s1 + $0x570] sm:$0xff]
      %v454 = vld [vmem:[%s1 + $0x578] sm:$0xff]
      %v455 = vld [vmem:[%s1 + $0x580] sm:$0xff]
      %v456 = vld [vmem:[%s1 + $0x588] sm:$0xff]
      %v457 = vld [vmem:[%s1 + $0x590] sm:$0xff]
      %v458 = vld [vmem:[%s1 + $0x598] sm:$0xff]
      %v459 = vld [vmem:[%s1 + $0x5a0] sm:$0xff]
      %v460 = vld [vmem:[%s1 + $0x5a8] sm:$0xff]
      %v461 = vld [vmem:[%s1 + $0x5b0] sm:$0xff]
      %v462 = vld [vmem:[%s1 + $0x5b8] sm:$0xff]
      %v463 = vld [vmem:[%s1 + $0x5c0] sm:$0xff]
      %v464 = vld [vmem:[%s1 + $0x5c8] sm:$0xff]
      %v465 = vld [vmem:[%s1 + $0x5d0] sm:$0xff]
      %v466 = vld [vmem:[%s1 + $0x5d8] sm:$0xff]
      %v467 = vld [vmem:[%s1 + $0x5e0] sm:$0xff]
      %v468 = vld [vmem:[%s1 + $0x5e8] sm:$0xff]
      %v469 = vld [vmem:[%s1 + $0x5f0] sm:$0xff]
      %v470 = vld [vmem:[%s1 + $0x5f8] sm:$0xff]
      %v471 = vld [vmem:[%s1 + $0x600] sm:$0xff]
      %v472 = vld [vmem:[%s1 + $0x608] sm:$0xff]
      %v473 = vld [vmem:[%s1 + $0x610] sm:$0xff]
      %v474 = vld [vmem:[%s1 + $0x618] sm:$0xff]
      %v475 = vld [vmem:[%s1 + $0x620] sm:$0xff]
      %v476 = vld [vmem:[%s1 + $0x628] sm:$0xff]
      %v477 = vld [vmem:[%s1 + $0x630] sm:$0xff]
      %v478 = vld [vmem:[%s1 + $0x638] sm:$0xff]
      %v479 = vld [vmem:[%s1 + $0x640] sm:$0xff]
      %v480 = vld [vmem:[%s1 + $0x648] sm:$0xff]
      %v481 = vld [vmem:[%s1 + $0x650] sm:$0xff]
      %v482 = vld [vmem:[%s1 + $0x658] sm:$0xff]
      %v483 = vld [vmem:[%s1 + $0x660] sm:$0xff]
      %v484 = vld [vmem:[%s1 + $0x668] sm:$0xff]
      %v485 = vld [vmem:[%s1 + $0x670] sm:$0xff]
      %v486 = vld [vmem:[%s1 + $0x678] sm:$0xff]
      %v487 = vld [vmem:[%s1 + $0x680] sm:$0xff]
      %v488 = vld [vmem:[%s1 + $0x688] sm:$0xff]
      %v489 = vld [vmem:[%s1 + $0x690] sm:$0xff]
      %v490 = vld [vmem:[%s1 + $0x698] sm:$0xff]
      %v491 = vld [vmem:[%s1 + $0x6a0] sm:$0xff]
      %v492 = vld [vmem:[%s1 + $0x6a8] sm:$0xff]
      %v493 = vld [vmem:[%s1 + $0x6b0] sm:$0xff]
      %v494 = vld [vmem:[%s1 + $0x6b8] sm:$0xff]
      %v495 = vld [vmem:[%s1 + $0x6c0] sm:$0xff]
      %v496 = vld [vmem:[%s1 + $0x6c8] sm:$0xff]
      %v497 = vld [vmem:[%s1 + $0x6d0] sm:$0xff]
      %v498 = vld [vmem:[%s1 + $0x6d8] sm:$0xff]
      %v499 = vld [vmem:[%s1 + $0x6e0] sm:$0xff]
      %v500 = vld [vmem:[%s1 + $0x6e8] sm:$0xff]
      %v501 = vld [vmem:[%s1 + $0x6f0] sm:$0xff]
      %v502 = vld [vmem:[%s1 + $0x6f8] sm:$0xff]
      %v503 = vld [vmem:[%s1 + $0x700] sm:$0xff]
      %v504 = vld [vmem:[%s1 + $0x708] sm:$0xff]
      %v505 = vld [vmem:[%s1 + $0x710] sm:$0xff]
      %v506 = vld [vmem:[%s1 + $0x718] sm:$0xff]
      %v507 = vld [vmem:[%s1 + $0x720] sm:$0xff]
      %v508 = vld [vmem:[%s1 + $0x728] sm:$0xff]
      %v509 = vld [vmem:[%s1 + $0x730] sm:$0xff]
      %v510 = vld [vmem:[%s1 + $0x738] sm:$0xff]
      %v511 = vld [vmem:[%s1 + $0x740] sm:$0xff]
      %v512 = vld [vmem:[%s1 + $0x748] sm:$0xff]
      %v513 = vld [vmem:[%s1 + $0x750] sm:$0xff]
      %v514 = vld [vmem:[%s1 + $0x758] sm:$0xff]
      %v515 = vld [vmem:[%s1 + $0x760] sm:$0xff]
      %v516 = vld [vmem:[%s1 + $0x768] sm:$0xff]
      %v517 = vld [vmem:[%s1 + $0x770] sm:$0xff]
      %v518 = vld [vmem:[%s1 + $0x778] sm:$0xff]
      %v519 = vld [vmem:[%s1 + $0x780] sm:$0xff]
      %v520 = vld [vmem:[%s1 + $0x788] sm:$0xff]
      %v521 = vld [vmem:[%s1 + $0x790] sm:$0xff]
      %v522 = vld [vmem:[%s1 + $0x798] sm:$0xff]
      %v523 = vld [vmem:[%s1 + $0x7a0] sm:$0xff]
      %v524 = vld [vmem:[%s1 + $0x7a8] sm:$0xff]
      %v525 = vld [vmem:[%s1 + $0x7b0] sm:$0xff]
      %v526 = vld [vmem:[%s1 + $0x7b8] sm:$0xff]
      %v527 = vld [vmem:[%s1 + $0x7c0] sm:$0xff]
      %v528 = vld [vmem:[%s1 + $0x7c8] sm:$0xff]
      %v529 = vld [vmem:[%s1 + $0x7d0] sm:$0xff]
      %v530 = vld [vmem:[%s1 + $0x7d8] sm:$0xff]
      %v531 = vld [vmem:[%s1 + $0x7e0] sm:$0xff]
      %v532 = vld [vmem:[%s1 + $0x7e8] sm:$0xff]
      %v533 = vld [vmem:[%s1 + $0x7f0] sm:$0xff]
      %v534 = vld [vmem:[%s1 + $0x7f8] sm:$0xff]
      %v535 = vld [vmem:[%s1 + $0x800] sm:$0xff]
      %v536 = vld [vmem:[%s1 + $0x808] sm:$0xff]
      %v537 = vld [vmem:[%s1 + $0x810] sm:$0xff]
      %v538 = vld [vmem:[%s1 + $0x818] sm:$0xff]
      %v539 = vld [vmem:[%s1 + $0x820] sm:$0xff]
      %v540 = vld [vmem:[%s1 + $0x828] sm:$0xff]
      %v541 = vld [vmem:[%s1 + $0x830] sm:$0xff]
      %v542 = vld [vmem:[%s1 + $0x838] sm:$0xff]
      %v543 = vld [vmem:[%s1 + $0x840] sm:$0xff]
      %v544 = vld [vmem:[%s1 + $0x848] sm:$0xff]
      %v545 = vld [vmem:[%s1 + $0x850] sm:$0xff]
      %v546 = vld [vmem:[%s1 + $0x858] sm:$0xff]
      %v547 = vld [vmem:[%s1 + $0x860] sm:$0xff]
      %v548 = vld [vmem:[%s1 + $0x868] sm:$0xff]
      %v549 = vld [vmem:[%s1 + $0x870] sm:$0xff]
      %v550 = vld [vmem:[%s1 + $0x878] sm:$0xff]
      %v551 = vld [vmem:[%s1 + $0x880] sm:$0xff]
      %v552 = vld [vmem:[%s1 + $0x888] sm:$0xff]
      %v553 = vld [vmem:[%s1 + $0x890] sm:$0xff]
      %v554 = vld [vmem:[%s1 + $0x898] sm:$0xff]
      %v555 = vld [vmem:[%s1 + $0x8a0] sm:$0xff]
      %v556 = vld [vmem:[%s1 + $0x8a8] sm:$0xff]
      %v557 = vld [vmem:[%s1 + $0x8b0] sm:$0xff]
      %v558 = vld [vmem:[%s1 + $0x8b8] sm:$0xff]
      %v559 = vld [vmem:[%s1 + $0x8c0] sm:$0xff]
      %v560 = vld [vmem:[%s1 + $0x8c8] sm:$0xff]
      %v561 = vld [vmem:[%s1 + $0x8d0] sm:$0xff]
      %v562 = vld [vmem:[%s1 + $0x8d8] sm:$0xff]
      %v563 = vld [vmem:[%s1 + $0x8e0] sm:$0xff]
      %v564 = vld [vmem:[%s1 + $0x8e8] sm:$0xff]
      %v565 = vld [vmem:[%s1 + $0x8f0] sm:$0xff]
      %v566 = vld [vmem:[%s1 + $0x8f8] sm:$0xff]
      %v567 = vld [vmem:[%s1 + $0x900] sm:$0xff]
      %v568 = vld [vmem:[%s1 + $0x908] sm:$0xff]
      %v569 = vld [vmem:[%s1 + $0x910] sm:$0xff]
      %v570 = vld [vmem:[%s1 + $0x918] sm:$0xff]
      %v571 = vld [vmem:[%s1 + $0x920] sm:$0xff]
      %v572 = vld [vmem:[%s1 + $0x928] sm:$0xff]
      %v573 = vld [vmem:[%s1 + $0x930] sm:$0xff]
      %v574 = vld [vmem:[%s1 + $0x938] sm:$0xff]
      %v575 = vld [vmem:[%s1 + $0x940] sm:$0xff]
      %v576 = vld [vmem:[%s1 + $0x948] sm:$0xff]
      %v577 = vld [vmem:[%s1 + $0x950] sm:$0xff]
      %v578 = vld [vmem:[%s1 + $0x958] sm:$0xff]
      %v579 = vld [vmem:[%s1 + $0x960] sm:$0xff]
      %v580 = vld [vmem:[%s1 + $0x968] sm:$0xff]
      %v581 = vld [vmem:[%s1 + $0x970] sm:$0xff]
      %v582 = vld [vmem:[%s1 + $0x978] sm:$0xff]
      %v583 = vld [vmem:[%s1 + $0x980] sm:$0xff]
      %v584 = vld [vmem:[%s1 + $0x988] sm:$0xff]
      %v585 = vld [vmem:[%s1 + $0x990] sm:$0xff]
      %v586 = vld [vmem:[%s1 + $0x998] sm:$0xff]
      %v587 = vld [vmem:[%s1 + $0x9a0] sm:$0xff]
      %v588 = vld [vmem:[%s1 + $0x9a8] sm:$0xff]
      %v589 = vld [vmem:[%s1 + $0x9b0] sm:$0xff]
      %v590 = vld [vmem:[%s1 + $0x9b8] sm:$0xff]
      %v591 = vld [vmem:[%s1 + $0x9c0] sm:$0xff]
      %v592 = vld [vmem:[%s1 + $0x9c8] sm:$0xff]
      %v593 = vld [vmem:[%s1 + $0x9d0] sm:$0xff]
      %v594 = vld [vmem:[%s1 + $0x9d8] sm:$0xff]
      %v595 = vld [vmem:[%s1 + $0x9e0] sm:$0xff]
      %v596 = vld [vmem:[%s1 + $0x9e8] sm:$0xff]
      %v597 = vld [vmem:[%s1 + $0x9f0] sm:$0xff]
      %v598 = vld [vmem:[%s1 + $0x9f8] sm:$0xff]
      %v599 = vld [vmem:[%s1 + $0xa00] sm:$0xff]
      %v600 = vld [vmem:[%s1 + $0xa08] sm:$0xff]
      %v601 = vld [vmem:[%s1 + $0xa10] sm:$0xff]
      %v602 = vld [vmem:[%s1 + $0xa18] sm:$0xff]
      %v603 = vld [vmem:[%s1 + $0xa20] sm:$0xff]
      %v604 = vld [vmem:[%s1 + $0xa28] sm:$0xff]
      %v605 = vld [vmem:[%s1 + $0xa30] sm:$0xff]
      %v606 = vld [vmem:[%s1 + $0xa38] sm:$0xff]
      %v607 = vld [vmem:[%s1 + $0xa40] sm:$0xff]
      %v608 = vld [vmem:[%s1 + $0xa48] sm:$0xff]
      %v609 = vld [vmem:[%s1 + $0xa50] sm:$0xff]
      %v610 = vld [vmem:[%s1 + $0xa58] sm:$0xff]
      %v611 = vld [vmem:[%s1 + $0xa60] sm:$0xff]
      %v612 = vld [vmem:[%s1 + $0xa68] sm:$0xff]
      %v613 = vld [vmem:[%s1 + $0xa70] sm:$0xff]
      %v614 = vld [vmem:[%s1 + $0xa78] sm:$0xff]
      %v615 = vld [vmem:[%s1 + $0xa80] sm:$0xff]
      %v616 = vld [vmem:[%s1 + $0xa88] sm:$0xff]
      %v617 = vld [vmem:[%s1 + $0xa90] sm:$0xff]
      %v618 = vld [vmem:[%s1 + $0xa98] sm:$0xff]
      %v619 = vld [vmem:[%s1 + $0xaa0] sm:$0xff]
      %v620 = vld [vmem:[%s1 + $0xaa8] sm:$0xff]
      %v621 = vld [vmem:[%s1 + $0xab0] sm:$0xff]
      %v622 = vld [vmem:[%s1 + $0xab8] sm:$0xff]
      %v623 = vld [vmem:[%s1 + $0xac0] sm:$0xff]
      %v624 = vld [vmem:[%s1 + $0xac8] sm:$0xff]
      %v625 = vld [vmem:[%s1 + $0xad0] sm:$0xff]
      %v626 = vld [vmem:[%s1 + $0xad8] sm:$0xff]
      %v627 = vld [vmem:[%s1 + $0xae0] sm:$0xff]
      %v628 = vld [vmem:[%s1 + $0xae8] sm:$0xff]
      %v629 = vld [vmem:[%s1 + $0xaf0] sm:$0xff]
      %v630 = vld [vmem:[%s1 + $0xaf8] sm:$0xff]
      %v631 = vld [vmem:[%s1 + $0xb00] sm:$0xff]
      %v632 = vld [vmem:[%s1 + $0xb08] sm:$0xff]
      %v633 = vld [vmem:[%s1 + $0xb10] sm:$0xff]
      %v634 = vld [vmem:[%s1 + $0xb18] sm:$0xff]
      %v635 = vld [vmem:[%s1 + $0xb20] sm:$0xff]
      %v636 = vld [vmem:[%s1 + $0xb28] sm:$0xff]
      %v637 = vld [vmem:[%s1 + $0xb30] sm:$0xff]
      %v638 = vld [vmem:[%s1 + $0xb38] sm:$0xff]
      %v639 = vld [vmem:[%s1 + $0xb40] sm:$0xff]
      %v640 = vld [vmem:[%s1 + $0xb48] sm:$0xff]
      %v641 = vld [vmem:[%s1 + $0xb50] sm:$0xff]
      %v642 = vld [vmem:[%s1 + $0xb58] sm:$0xff]
      %v643 = vld [vmem:[%s1 + $0xb60] sm:$0xff]
      %v644 = vld [vmem:[%s1 + $0xb68] sm:$0xff]
      %v645 = vld [vmem:[%s1 + $0xb70] sm:$0xff]
      %v646 = vld [vmem:[%s1 + $0xb78] sm:$0xff]
      %v647 = vld [vmem:[%s1 + $0xb80] sm:$0xff]
      %v648 = vld [vmem:[%s1 + $0xb88] sm:$0xff]
      %v649 = vld [vmem:[%s1 + $0xb90] sm:$0xff]
      %v650 = vld [vmem:[%s1 + $0xb98] sm:$0xff]
      %v651 = vld [vmem:[%s1 + $0xba0] sm:$0xff]
      %v652 = vld [vmem:[%s1 + $0xba8] sm:$0xff]
      %v653 = vld [vmem:[%s1 + $0xbb0] sm:$0xff]
      %v654 = vld [vmem:[%s1 + $0xbb8] sm:$0xff]
      %v655 = vld [vmem:[%s1 + $0xbc0] sm:$0xff]
      %v656 = vld [vmem:[%s1 + $0xbc8] sm:$0xff]
      %v657 = vld [vmem:[%s1 + $0xbd0] sm:$0xff]
      %v658 = vld [vmem:[%s1 + $0xbd8] sm:$0xff]
      %v659 = vld [vmem:[%s1 + $0xbe0] sm:$0xff]
      %v660 = vld [vmem:[%s1 + $0xbe8] sm:$0xff]
      %v661 = vld [vmem:[%s1 + $0xbf0] sm:$0xff]
      %v662 = vld [vmem:[%s1 + $0xbf8] sm:$0xff]
      %v663 = vld [vmem:[%s1 + $0xc00] sm:$0xff]
      %v664 = vld [vmem:[%s1 + $0xc08] sm:$0xff]
      %v665 = vld [vmem:[%s1 + $0xc10] sm:$0xff]
      %v666 = vld [vmem:[%s1 + $0xc18] sm:$0xff]
      %v667 = vld [vmem:[%s1 + $0xc20] sm:$0xff]
      %v668 = vld [vmem:[%s1 + $0xc28] sm:$0xff]
      %v669 = vld [vmem:[%s1 + $0xc30] sm:$0xff]
      %v670 = vld [vmem:[%s1 + $0xc38] sm:$0xff]
      %v671 = vld [vmem:[%s1 + $0xc40] sm:$0xff]
      %v672 = vld [vmem:[%s1 + $0xc48] sm:$0xff]
      %v673 = vld [vmem:[%s1 + $0xc50] sm:$0xff]
      %v674 = vld [vmem:[%s1 + $0xc58] sm:$0xff]
      %v675 = vld [vmem:[%s1 + $0xc60] sm:$0xff]
      %v676 = vld [vmem:[%s1 + $0xc68] sm:$0xff]
      %v677 = vld [vmem:[%s1 + $0xc70] sm:$0xff]
      %v678 = vld [vmem:[%s1 + $0xc78] sm:$0xff]
      %v679 = vld [vmem:[%s2] sm:$0xf]
      %v681 = vlaneseq
      %v682 = vshrl.u32 %v681, 7
      %v683 = vsub.s32 0, %v682
      %v684 = vrot.slane %v679, %v683
      %v685 = vlaneseq
      %v686 = vshrl.u32 %v685, 7
      %v687 = vsub.s32 1, %v686
      %v688 = vrot.slane %v679, %v687
      %v689 = vlaneseq
      %v690 = vshrl.u32 %v689, 7
      %v691 = vsub.s32 2, %v690
      %v692 = vrot.slane %v679, %v691
      %v693 = vlaneseq
      %v694 = vshrl.u32 %v693, 7
      %v695 = vsub.s32 3, %v694
      %v696 = vrot.slane %v679, %v695
      %v703 = vcombine.high %v277, %v277
      %v705 = vunpack.c.l.s4 1983009808
      %v706 = vunpack.c.0.s8 %v705
      %v707 = vlaneseq
      %v708 = vshrl.u32 %v707, 7
      %v709 = vsub.s32 %v706, %v708
      %v710 = vrot.slane %v277, %v709
      %v712 = vunpack.c.l.s4 1983009808
      %v713 = vunpack.c.0.s8 %v712
      %v714 = vlaneseq
      %v715 = vshrl.u32 %v714, 7
      %v716 = vsub.s32 %v713, %v715
      %v717 = vrot.slane %v703, %v716
      %v718 = vcombine.high %v710, %v710
      %v719 = vcombine.high %v717, %v717
      %v720 = vcombine.high %v278, %v278
      %v722 = vunpack.c.l.s4 1983009808
      %v723 = vunpack.c.0.s8 %v722
      %v724 = vlaneseq
      %v725 = vshrl.u32 %v724, 7
      %v726 = vsub.s32 %v723, %v725
      %v727 = vrot.slane %v278, %v726
      %v729 = vunpack.c.l.s4 1983009808
      %v730 = vunpack.c.0.s8 %v729
      %v731 = vlaneseq
      %v732 = vshrl.u32 %v731, 7
      %v733 = vsub.s32 %v730, %v732
      %v734 = vrot.slane %v720, %v733
      %v735 = vcombine.high %v727, %v727
      %vm742 = vcmask 261120
      %v743 = vsel %vm742, %v734, 0
      %745 = vmatprep.subr.mxu0 %v340
      %746 = vmatpush1.msra.mxu0 %v339
      %747 = vmatprep.subr.mxu0 %v336
      %748 = vmatpush1.msra.mxu0 %v335
      %749 = vmatprep.subr.mxu0 %v332
      %750 = vmatpush1.msra.mxu0 %v331
      %751 = vmatprep.subr.mxu0 %v328
      %752 = vmatpush1.msra.mxu0 %v327
      %753 = vmatprep.subr.mxu0 %v324
      %754 = vmatpush1.msra.mxu0 %v323
      %755 = vmatprep.subr.mxu0 %v320
      %756 = vmatpush1.msra.mxu0 %v319
      %757 = vmatprep.subr.mxu0 %v316
      %758 = vmatpush1.msra.mxu0 %v315
      %759 = vmatprep.subr.mxu0 %v312
      %760 = vmatpush1.msra.mxu0 %v311
      %761 = vmatprep.subr.mxu0 %v308
      %762 = vmatpush1.msra.mxu0 %v307
      %763 = vmatprep.subr.mxu0 %v304
      %764 = vmatpush1.msra.mxu0 %v303
      %765 = vmatprep.subr.mxu0 %v300
      %766 = vmatpush1.msra.mxu0 %v299
      %767 = vmatprep.subr.mxu0 %v296
      %768 = vmatpush1.msra.mxu0 %v295
      %769 = vmatprep.subr.mxu0 %v292
      %770 = vmatpush1.msra.mxu0 %v291
      %771 = vmatprep.subr.mxu0 %v288
      %772 = vmatpush1.msra.mxu0 %v287
      %773 = vmatprep.subr.mxu0 %v284
      %774 = vmatpush1.msra.mxu0 %v283
      %775 = vmatprep.subr.mxu0 %v280
      %776 = vmatpush1.msra.mxu0 %v279
      %777 = vmatprep.subr.mxu0 %v404
      %778 = vmatpush2.msra.mxu0 %v403
      %779 = vmatprep.subr.mxu0 %v400
      %780 = vmatpush2.msra.mxu0 %v399
      %781 = vmatprep.subr.mxu0 %v396
      %782 = vmatpush2.msra.mxu0 %v395
      %783 = vmatprep.subr.mxu0 %v392
      %784 = vmatpush2.msra.mxu0 %v391
      %785 = vmatprep.subr.mxu0 %v388
      %786 = vmatpush2.msra.mxu0 %v387
      %787 = vmatprep.subr.mxu0 %v384
      %788 = vmatpush2.msra.mxu0 %v383
      %789 = vmatprep.subr.mxu0 %v380
      %790 = vmatpush2.msra.mxu0 %v379
      %791 = vmatprep.subr.mxu0 %v376
      %792 = vmatpush2.msra.mxu0 %v375
      %793 = vmatprep.subr.mxu0 %v372
      %794 = vmatpush2.msra.mxu0 %v371
      %795 = vmatprep.subr.mxu0 %v368
      %796 = vmatpush2.msra.mxu0 %v367
      %797 = vmatprep.subr.mxu0 %v364
      %798 = vmatpush2.msra.mxu0 %v363
      %799 = vmatprep.subr.mxu0 %v360
      %800 = vmatpush2.msra.mxu0 %v359
      %801 = vmatprep.subr.mxu0 %v356
      %802 = vmatpush2.msra.mxu0 %v355
      %803 = vmatprep.subr.mxu0 %v352
      %804 = vmatpush2.msra.mxu0 %v351
      %805 = vmatprep.subr.mxu0 %v348
      %806 = vmatpush2.msra.mxu0 %v347
      %807 = vmatprep.subr.mxu0 %v344
      %808 = vmatpush2.msra.mxu0 %v343
      %809 = vmatprep.mubr.f32.mxu0 %v718
      %810 = vmatmul.mubr.f32.gmra.mxu0 %v710
      %v811 = vpop.f32.mrf.mxu0
      %v812 = vadd.f32 %v684, %v811
      %v813 = vpop.f32.mrf.mxu0
      %v814 = vadd.f32 %v688, %v813
      %815 = vdwg.mxu0
      %816 = vmatprep.subr.mxu0 %v468
      %817 = vmatpush1.msra.mxu0 %v467
      %818 = vmatprep.subr.mxu0 %v464
      %819 = vmatpush1.msra.mxu0 %v463
      %820 = vmatprep.subr.mxu0 %v460
      %821 = vmatpush1.msra.mxu0 %v459
      %822 = vmatprep.subr.mxu0 %v456
      %823 = vmatpush1.msra.mxu0 %v455
      %824 = vmatprep.subr.mxu0 %v452
      %825 = vmatpush1.msra.mxu0 %v451
      %826 = vmatprep.subr.mxu0 %v448
      %827 = vmatpush1.msra.mxu0 %v447
      %828 = vmatprep.subr.mxu0 %v444
      %829 = vmatpush1.msra.mxu0 %v443
      %830 = vmatprep.subr.mxu0 %v440
      %831 = vmatpush1.msra.mxu0 %v439
      %832 = vmatprep.subr.mxu0 %v436
      %833 = vmatpush1.msra.mxu0 %v435
      %834 = vmatprep.subr.mxu0 %v432
      %835 = vmatpush1.msra.mxu0 %v431
      %836 = vmatprep.subr.mxu0 %v428
      %837 = vmatpush1.msra.mxu0 %v427
      %838 = vmatprep.subr.mxu0 %v424
      %839 = vmatpush1.msra.mxu0 %v423
      %840 = vmatprep.subr.mxu0 %v420
      %841 = vmatpush1.msra.mxu0 %v419
      %842 = vmatprep.subr.mxu0 %v416
      %843 = vmatpush1.msra.mxu0 %v415
      %844 = vmatprep.subr.mxu0 %v412
      %845 = vmatpush1.msra.mxu0 %v411
      %846 = vmatprep.subr.mxu0 %v408
      %847 = vmatpush1.msra.mxu0 %v407
      %848 = vmatprep.subr.mxu0 %v532
      %849 = vmatpush2.msra.mxu0 %v531
      %850 = vmatprep.subr.mxu0 %v528
      %851 = vmatpush2.msra.mxu0 %v527
      %852 = vmatprep.subr.mxu0 %v524
      %853 = vmatpush2.msra.mxu0 %v523
      %854 = vmatprep.subr.mxu0 %v520
      %855 = vmatpush2.msra.mxu0 %v519
      %856 = vmatprep.subr.mxu0 %v516
      %857 = vmatpush2.msra.mxu0 %v515
      %858 = vmatprep.subr.mxu0 %v512
      %859 = vmatpush2.msra.mxu0 %v511
      %860 = vmatprep.subr.mxu0 %v508
      %861 = vmatpush2.msra.mxu0 %v507
      %862 = vmatprep.subr.mxu0 %v504
      %863 = vmatpush2.msra.mxu0 %v503
      %864 = vmatprep.subr.mxu0 %v500
      %865 = vmatpush2.msra.mxu0 %v499
      %866 = vmatprep.subr.mxu0 %v496
      %867 = vmatpush2.msra.mxu0 %v495
      %868 = vmatprep.subr.mxu0 %v492
      %869 = vmatpush2.msra.mxu0 %v491
      %870 = vmatprep.subr.mxu0 %v488
      %871 = vmatpush2.msra.mxu0 %v487
      %872 = vmatprep.subr.mxu0 %v484
      %873 = vmatpush2.msra.mxu0 %v483
      %874 = vmatprep.subr.mxu0 %v480
      %875 = vmatpush2.msra.mxu0 %v479
      %876 = vmatprep.subr.mxu0 %v476
      %877 = vmatpush2.msra.mxu0 %v475
      %878 = vmatprep.subr.mxu0 %v472
      %879 = vmatpush2.msra.mxu0 %v471
      %880 = vmatprep.mubr.f32.mxu0 %v719
      %881 = vmatmul.mubr.f32.gmra.mxu0 %v717
      %v882 = vpop.f32.mrf.mxu0
      %v883 = vadd.f32 %v812, %v882
      %v884 = vpop.f32.mrf.mxu0
      %v885 = vadd.f32 %v814, %v884
      %886 = vdwg.mxu0
      %887 = vmatprep.subr.mxu0 %v596
      %888 = vmatpush1.msra.mxu0 %v595
      %889 = vmatprep.subr.mxu0 %v592
      %890 = vmatpush1.msra.mxu0 %v591
      %891 = vmatprep.subr.mxu0 %v588
      %892 = vmatpush1.msra.mxu0 %v587
      %893 = vmatprep.subr.mxu0 %v584
      %894 = vmatpush1.msra.mxu0 %v583
      %895 = vmatprep.subr.mxu0 %v580
      %896 = vmatpush1.msra.mxu0 %v579
      %897 = vmatprep.subr.mxu0 %v576
      %898 = vmatpush1.msra.mxu0 %v575
      %899 = vmatprep.subr.mxu0 %v572
      %900 = vmatpush1.msra.mxu0 %v571
      %901 = vmatprep.subr.mxu0 %v568
      %902 = vmatpush1.msra.mxu0 %v567
      %903 = vmatprep.subr.mxu0 %v564
      %904 = vmatpush1.msra.mxu0 %v563
      %905 = vmatprep.subr.mxu0 %v560
      %906 = vmatpush1.msra.mxu0 %v559
      %907 = vmatprep.subr.mxu0 %v556
      %908 = vmatpush1.msra.mxu0 %v555
      %909 = vmatprep.subr.mxu0 %v552
      %910 = vmatpush1.msra.mxu0 %v551
      %911 = vmatprep.subr.mxu0 %v548
      %912 = vmatpush1.msra.mxu0 %v547
      %913 = vmatprep.subr.mxu0 %v544
      %914 = vmatpush1.msra.mxu0 %v543
      %915 = vmatprep.subr.mxu0 %v540
      %916 = vmatpush1.msra.mxu0 %v539
      %917 = vmatprep.subr.mxu0 %v536
      %918 = vmatpush1.msra.mxu0 %v535
      %919 = vmatprep.subr.mxu0 %v660
      %920 = vmatpush2.msra.mxu0 %v659
      %921 = vmatprep.subr.mxu0 %v656
      %922 = vmatpush2.msra.mxu0 %v655
      %923 = vmatprep.subr.mxu0 %v652
      %924 = vmatpush2.msra.mxu0 %v651
      %925 = vmatprep.subr.mxu0 %v648
      %926 = vmatpush2.msra.mxu0 %v647
      %927 = vmatprep.subr.mxu0 %v644
      %928 = vmatpush2.msra.mxu0 %v643
      %929 = vmatprep.subr.mxu0 %v640
      %930 = vmatpush2.msra.mxu0 %v639
      %931 = vmatprep.subr.mxu0 %v636
      %932 = vmatpush2.msra.mxu0 %v635
      %933 = vmatprep.subr.mxu0 %v632
      %934 = vmatpush2.msra.mxu0 %v631
      %935 = vmatprep.subr.mxu0 %v628
      %936 = vmatpush2.msra.mxu0 %v627
      %937 = vmatprep.subr.mxu0 %v624
      %938 = vmatpush2.msra.mxu0 %v623
      %939 = vmatprep.subr.mxu0 %v620
      %940 = vmatpush2.msra.mxu0 %v619
      %941 = vmatprep.subr.mxu0 %v616
      %942 = vmatpush2.msra.mxu0 %v615
      %943 = vmatprep.subr.mxu0 %v612
      %944 = vmatpush2.msra.mxu0 %v611
      %945 = vmatprep.subr.mxu0 %v608
      %946 = vmatpush2.msra.mxu0 %v607
      %947 = vmatprep.subr.mxu0 %v604
      %948 = vmatpush2.msra.mxu0 %v603
      %949 = vmatprep.subr.mxu0 %v600
      %950 = vmatpush2.msra.mxu0 %v599
      %951 = vmatprep.mubr.f32.mxu0 %v735
      %952 = vmatmul.mubr.f32.gmra.mxu0 %v727
      %v953 = vpop.f32.mrf.mxu0
      %v954 = vadd.f32 %v883, %v953
      %v955 = vpop.f32.mrf.mxu0
      %v956 = vadd.f32 %v885, %v955
      %957 = vdwg.mxu0
      %958 = vmatprep.subr.mxu0 0.0
      %959 = vmatpush1.msra.mxu0 0.0
      %960 = vmatprep.subr.mxu0 0.0
      %961 = vmatpush1.msra.mxu0 0.0
      %962 = vmatprep.subr.mxu0 0.0
      %963 = vmatpush1.msra.mxu0 0.0
      %964 = vmatprep.subr.mxu0 0.0
      %965 = vmatpush1.msra.mxu0 0.0
      %966 = vmatprep.subr.mxu0 0.0
      %967 = vmatpush1.msra.mxu0 0.0
      %968 = vmatprep.subr.mxu0 0.0
      %969 = vmatpush1.msra.mxu0 0.0
      %970 = vmatprep.subr.mxu0 0.0
      %971 = vmatpush1.msra.mxu0 0.0
      %972 = vmatprep.subr.mxu0 0.0
      %973 = vmatpush1.msra.mxu0 0.0
      %974 = vmatprep.subr.mxu0 0.0
      %975 = vmatpush1.msra.mxu0 0.0
      %976 = vmatprep.subr.mxu0 0.0
      %977 = vmatpush1.msra.mxu0 0.0
      %978 = vmatprep.subr.mxu0 0.0
      %979 = vmatpush1.msra.mxu0 0.0
      %980 = vmatprep.subr.mxu0 0.0
      %981 = vmatpush1.msra.mxu0 0.0
      %982 = vmatprep.subr.mxu0 %v676
      %983 = vmatpush1.msra.mxu0 %v675
      %984 = vmatprep.subr.mxu0 %v672
      %985 = vmatpush1.msra.mxu0 %v671
      %986 = vmatprep.subr.mxu0 %v668
      %987 = vmatpush1.msra.mxu0 %v667
      %988 = vmatprep.subr.mxu0 %v664
      %989 = vmatpush1.msra.mxu0 %v663
      %990 = vmatprep.subr.mxu0 0.0
      %991 = vmatpush2.msra.mxu0 0.0
      %992 = vmatprep.subr.mxu0 0.0
      %993 = vmatpush2.msra.mxu0 0.0
      %994 = vmatprep.subr.mxu0 0.0
      %995 = vmatpush2.msra.mxu0 0.0
      %996 = vmatprep.subr.mxu0 0.0
      %997 = vmatpush2.msra.mxu0 0.0
      %998 = vmatprep.subr.mxu0 0.0
      %999 = vmatpush2.msra.mxu0 0.0
      %1000 = vmatprep.subr.mxu0 0.0
      %1001 = vmatpush2.msra.mxu0 0.0
      %1002 = vmatprep.subr.mxu0 0.0
      %1003 = vmatpush2.msra.mxu0 0.0
      %1004 = vmatprep.subr.mxu0 0.0
      %1005 = vmatpush2.msra.mxu0 0.0
      %1006 = vmatprep.subr.mxu0 0.0
      %1007 = vmatpush2.msra.mxu0 0.0
      %1008 = vmatprep.subr.mxu0 0.0
      %1009 = vmatpush2.msra.mxu0 0.0
      %1010 = vmatprep.subr.mxu0 0.0
      %1011 = vmatpush2.msra.mxu0 0.0
      %1012 = vmatprep.subr.mxu0 0.0
      %1013 = vmatpush2.msra.mxu0 0.0
      %1014 = vmatprep.subr.mxu0 0.0
      %1015 = vmatpush2.msra.mxu0 0.0
      %1016 = vmatprep.subr.mxu0 0.0
      %1017 = vmatpush2.msra.mxu0 0.0
      %1018 = vmatprep.subr.mxu0 0.0
      %1019 = vmatpush2.msra.mxu0 0.0
      %1020 = vmatprep.subr.mxu0 0.0
      %1021 = vmatpush2.msra.mxu0 0.0
      %1022 = vmatprep.mubr.f32.mxu0 0.0
      %1023 = vmatmul.mubr.f32.gmra.mxu0 %v743
      %v1024 = vpop.f32.mrf.mxu0
      %v1025 = vadd.f32 %v954, %v1024
      %v1026 = vpop.f32.mrf.mxu0
      %v1027 = vadd.f32 %v956, %v1026
      %1028 = vdwg.mxu0
      %1029 = vmatprep.subr.mxu0 %v342
      %1030 = vmatpush1.msra.mxu0 %v341
      %1031 = vmatprep.subr.mxu0 %v338
      %1032 = vmatpush1.msra.mxu0 %v337
      %1033 = vmatprep.subr.mxu0 %v334
      %1034 = vmatpush1.msra.mxu0 %v333
      %1035 = vmatprep.subr.mxu0 %v330
      %1036 = vmatpush1.msra.mxu0 %v329
      %1037 = vmatprep.subr.mxu0 %v326
      %1038 = vmatpush1.msra.mxu0 %v325
      %1039 = vmatprep.subr.mxu0 %v322
      %1040 = vmatpush1.msra.mxu0 %v321
      %1041 = vmatprep.subr.mxu0 %v318
      %1042 = vmatpush1.msra.mxu0 %v317
      %1043 = vmatprep.subr.mxu0 %v314
      %1044 = vmatpush1.msra.mxu0 %v313
      %1045 = vmatprep.subr.mxu0 %v310
      %1046 = vmatpush1.msra.mxu0 %v309
      %1047 = vmatprep.subr.mxu0 %v306
      %1048 = vmatpush1.msra.mxu0 %v305
      %1049 = vmatprep.subr.mxu0 %v302
      %1050 = vmatpush1.msra.mxu0 %v301
      %1051 = vmatprep.subr.mxu0 %v298
      %1052 = vmatpush1.msra.mxu0 %v297
      %1053 = vmatprep.subr.mxu0 %v294
      %1054 = vmatpush1.msra.mxu0 %v293
      %1055 = vmatprep.subr.mxu0 %v290
      %1056 = vmatpush1.msra.mxu0 %v289
      %1057 = vmatprep.subr.mxu0 %v286
      %1058 = vmatpush1.msra.mxu0 %v285
      %1059 = vmatprep.subr.mxu0 %v282
      %1060 = vmatpush1.msra.mxu0 %v281
      %1061 = vmatprep.subr.mxu0 %v406
      %1062 = vmatpush2.msra.mxu0 %v405
      %1063 = vmatprep.subr.mxu0 %v402
      %1064 = vmatpush2.msra.mxu0 %v401
      %1065 = vmatprep.subr.mxu0 %v398
      %1066 = vmatpush2.msra.mxu0 %v397
      %1067 = vmatprep.subr.mxu0 %v394
      %1068 = vmatpush2.msra.mxu0 %v393
      %1069 = vmatprep.subr.mxu0 %v390
      %1070 = vmatpush2.msra.mxu0 %v389
      %1071 = vmatprep.subr.mxu0 %v386
      %1072 = vmatpush2.msra.mxu0 %v385
      %1073 = vmatprep.subr.mxu0 %v382
      %1074 = vmatpush2.msra.mxu0 %v381
      %1075 = vmatprep.subr.mxu0 %v378
      %1076 = vmatpush2.msra.mxu0 %v377
      %1077 = vmatprep.subr.mxu0 %v374
      %1078 = vmatpush2.msra.mxu0 %v373
      %1079 = vmatprep.subr.mxu0 %v370
      %1080 = vmatpush2.msra.mxu0 %v369
      %1081 = vmatprep.subr.mxu0 %v366
      %1082 = vmatpush2.msra.mxu0 %v365
      %1083 = vmatprep.subr.mxu0 %v362
      %1084 = vmatpush2.msra.mxu0 %v361
      %1085 = vmatprep.subr.mxu0 %v358
      %1086 = vmatpush2.msra.mxu0 %v357
      %1087 = vmatprep.subr.mxu0 %v354
      %1088 = vmatpush2.msra.mxu0 %v353
      %1089 = vmatprep.subr.mxu0 %v350
      %1090 = vmatpush2.msra.mxu0 %v349
      %1091 = vmatprep.subr.mxu0 %v346
      %1092 = vmatpush2.msra.mxu0 %v345
      %1093 = vmatprep.mubr.f32.mxu0 %v718
      %1094 = vmatmul.mubr.f32.gmra.mxu0 %v710
      %v1095 = vpop.f32.mrf.mxu0
      %v1096 = vadd.f32 %v692, %v1095
      %v1097 = vpop.f32.mrf.mxu0
      %v1098 = vadd.f32 %v696, %v1097
      %1099 = vdwg.mxu0
      %1100 = vmatprep.subr.mxu0 %v470
      %1101 = vmatpush1.msra.mxu0 %v469
      %1102 = vmatprep.subr.mxu0 %v466
      %1103 = vmatpush1.msra.mxu0 %v465
      %1104 = vmatprep.subr.mxu0 %v462
      %1105 = vmatpush1.msra.mxu0 %v461
      %1106 = vmatprep.subr.mxu0 %v458
      %1107 = vmatpush1.msra.mxu0 %v457
      %1108 = vmatprep.subr.mxu0 %v454
      %1109 = vmatpush1.msra.mxu0 %v453
      %1110 = vmatprep.subr.mxu0 %v450
      %1111 = vmatpush1.msra.mxu0 %v449
      %1112 = vmatprep.subr.mxu0 %v446
      %1113 = vmatpush1.msra.mxu0 %v445
      %1114 = vmatprep.subr.mxu0 %v442
      %1115 = vmatpush1.msra.mxu0 %v441
      %1116 = vmatprep.subr.mxu0 %v438
      %1117 = vmatpush1.msra.mxu0 %v437
      %1118 = vmatprep.subr.mxu0 %v434
      %1119 = vmatpush1.msra.mxu0 %v433
      %1120 = vmatprep.subr.mxu0 %v430
      %1121 = vmatpush1.msra.mxu0 %v429
      %1122 = vmatprep.subr.mxu0 %v426
      %1123 = vmatpush1.msra.mxu0 %v425
      %1124 = vmatprep.subr.mxu0 %v422
      %1125 = vmatpush1.msra.mxu0 %v421
      %1126 = vmatprep.subr.mxu0 %v418
      %1127 = vmatpush1.msra.mxu0 %v417
      %1128 = vmatprep.subr.mxu0 %v414
      %1129 = vmatpush1.msra.mxu0 %v413
      %1130 = vmatprep.subr.mxu0 %v410
      %1131 = vmatpush1.msra.mxu0 %v409
      %1132 = vmatprep.subr.mxu0 %v534
      %1133 = vmatpush2.msra.mxu0 %v533
      %1134 = vmatprep.subr.mxu0 %v530
      %1135 = vmatpush2.msra.mxu0 %v529
      %1136 = vmatprep.subr.mxu0 %v526
      %1137 = vmatpush2.msra.mxu0 %v525
      %1138 = vmatprep.subr.mxu0 %v522
      %1139 = vmatpush2.msra.mxu0 %v521
      %1140 = vmatprep.subr.mxu0 %v518
      %1141 = vmatpush2.msra.mxu0 %v517
      %1142 = vmatprep.subr.mxu0 %v514
      %1143 = vmatpush2.msra.mxu0 %v513
      %1144 = vmatprep.subr.mxu0 %v510
      %1145 = vmatpush2.msra.mxu0 %v509
      %1146 = vmatprep.subr.mxu0 %v506
      %1147 = vmatpush2.msra.mxu0 %v505
      %1148 = vmatprep.subr.mxu0 %v502
      %1149 = vmatpush2.msra.mxu0 %v501
      %1150 = vmatprep.subr.mxu0 %v498
      %1151 = vmatpush2.msra.mxu0 %v497
      %1152 = vmatprep.subr.mxu0 %v494
      %1153 = vmatpush2.msra.mxu0 %v493
      %1154 = vmatprep.subr.mxu0 %v490
      %1155 = vmatpush2.msra.mxu0 %v489
      %1156 = vmatprep.subr.mxu0 %v486
      %1157 = vmatpush2.msra.mxu0 %v485
      %1158 = vmatprep.subr.mxu0 %v482
      %1159 = vmatpush2.msra.mxu0 %v481
      %1160 = vmatprep.subr.mxu0 %v478
      %1161 = vmatpush2.msra.mxu0 %v477
      %1162 = vmatprep.subr.mxu0 %v474
      %1163 = vmatpush2.msra.mxu0 %v473
      %1164 = vmatprep.mubr.f32.mxu0 %v719
      %1165 = vmatmul.mubr.f32.gmra.mxu0 %v717
      %v1166 = vpop.f32.mrf.mxu0
      %v1167 = vadd.f32 %v1096, %v1166
      %v1168 = vpop.f32.mrf.mxu0
      %v1169 = vadd.f32 %v1098, %v1168
      %1170 = vdwg.mxu0
      %1171 = vmatprep.subr.mxu0 %v598
      %1172 = vmatpush1.msra.mxu0 %v597
      %1173 = vmatprep.subr.mxu0 %v594
      %1174 = vmatpush1.msra.mxu0 %v593
      %1175 = vmatprep.subr.mxu0 %v590
      %1176 = vmatpush1.msra.mxu0 %v589
      %1177 = vmatprep.subr.mxu0 %v586
      %1178 = vmatpush1.msra.mxu0 %v585
      %1179 = vmatprep.subr.mxu0 %v582
      %1180 = vmatpush1.msra.mxu0 %v581
      %1181 = vmatprep.subr.mxu0 %v578
      %1182 = vmatpush1.msra.mxu0 %v577
      %1183 = vmatprep.subr.mxu0 %v574
      %1184 = vmatpush1.msra.mxu0 %v573
      %1185 = vmatprep.subr.mxu0 %v570
      %1186 = vmatpush1.msra.mxu0 %v569
      %1187 = vmatprep.subr.mxu0 %v566
      %1188 = vmatpush1.msra.mxu0 %v565
      %1189 = vmatprep.subr.mxu0 %v562
      %1190 = vmatpush1.msra.mxu0 %v561
      %1191 = vmatprep.subr.mxu0 %v558
      %1192 = vmatpush1.msra.mxu0 %v557
      %1193 = vmatprep.subr.mxu0 %v554
      %1194 = vmatpush1.msra.mxu0 %v553
      %1195 = vmatprep.subr.mxu0 %v550
      %1196 = vmatpush1.msra.mxu0 %v549
      %1197 = vmatprep.subr.mxu0 %v546
      %1198 = vmatpush1.msra.mxu0 %v545
      %1199 = vmatprep.subr.mxu0 %v542
      %1200 = vmatpush1.msra.mxu0 %v541
      %1201 = vmatprep.subr.mxu0 %v538
      %1202 = vmatpush1.msra.mxu0 %v537
      %1203 = vmatprep.subr.mxu0 %v662
      %1204 = vmatpush2.msra.mxu0 %v661
      %1205 = vmatprep.subr.mxu0 %v658
      %1206 = vmatpush2.msra.mxu0 %v657
      %1207 = vmatprep.subr.mxu0 %v654
      %1208 = vmatpush2.msra.mxu0 %v653
      %1209 = vmatprep.subr.mxu0 %v650
      %1210 = vmatpush2.msra.mxu0 %v649
      %1211 = vmatprep.subr.mxu0 %v646
      %1212 = vmatpush2.msra.mxu0 %v645
      %1213 = vmatprep.subr.mxu0 %v642
      %1214 = vmatpush2.msra.mxu0 %v641
      %1215 = vmatprep.subr.mxu0 %v638
      %1216 = vmatpush2.msra.mxu0 %v637
      %1217 = vmatprep.subr.mxu0 %v634
      %1218 = vmatpush2.msra.mxu0 %v633
      %1219 = vmatprep.subr.mxu0 %v630
      %1220 = vmatpush2.msra.mxu0 %v629
      %1221 = vmatprep.subr.mxu0 %v626
      %1222 = vmatpush2.msra.mxu0 %v625
      %1223 = vmatprep.subr.mxu0 %v622
      %1224 = vmatpush2.msra.mxu0 %v621
      %1225 = vmatprep.subr.mxu0 %v618
      %1226 = vmatpush2.msra.mxu0 %v617
      %1227 = vmatprep.subr.mxu0 %v614
      %1228 = vmatpush2.msra.mxu0 %v613
      %1229 = vmatprep.subr.mxu0 %v610
      %1230 = vmatpush2.msra.mxu0 %v609
      %1231 = vmatprep.subr.mxu0 %v606
      %1232 = vmatpush2.msra.mxu0 %v605
      %1233 = vmatprep.subr.mxu0 %v602
      %1234 = vmatpush2.msra.mxu0 %v601
      %1235 = vmatprep.mubr.f32.mxu0 %v735
      %1236 = vmatmul.mubr.f32.gmra.mxu0 %v727
      %v1237 = vpop.f32.mrf.mxu0
      %v1238 = vadd.f32 %v1167, %v1237
      %v1239 = vpop.f32.mrf.mxu0
      %v1240 = vadd.f32 %v1169, %v1239
      %1241 = vdwg.mxu0
      %1242 = vmatprep.subr.mxu0 0.0
      %1243 = vmatpush1.msra.mxu0 0.0
      %1244 = vmatprep.subr.mxu0 0.0
      %1245 = vmatpush1.msra.mxu0 0.0
      %1246 = vmatprep.subr.mxu0 0.0
      %1247 = vmatpush1.msra.mxu0 0.0
      %1248 = vmatprep.subr.mxu0 0.0
      %1249 = vmatpush1.msra.mxu0 0.0
      %1250 = vmatprep.subr.mxu0 0.0
      %1251 = vmatpush1.msra.mxu0 0.0
      %1252 = vmatprep.subr.mxu0 0.0
      %1253 = vmatpush1.msra.mxu0 0.0
      %1254 = vmatprep.subr.mxu0 0.0
      %1255 = vmatpush1.msra.mxu0 0.0
      %1256 = vmatprep.subr.mxu0 0.0
      %1257 = vmatpush1.msra.mxu0 0.0
      %1258 = vmatprep.subr.mxu0 0.0
      %1259 = vmatpush1.msra.mxu0 0.0
      %1260 = vmatprep.subr.mxu0 0.0
      %1261 = vmatpush1.msra.mxu0 0.0
      %1262 = vmatprep.subr.mxu0 0.0
      %1263 = vmatpush1.msra.mxu0 0.0
      %1264 = vmatprep.subr.mxu0 0.0
      %1265 = vmatpush1.msra.mxu0 0.0
      %1266 = vmatprep.subr.mxu0 %v678
      %1267 = vmatpush1.msra.mxu0 %v677
      %1268 = vmatprep.subr.mxu0 %v674
      %1269 = vmatpush1.msra.mxu0 %v673
      %1270 = vmatprep.subr.mxu0 %v670
      %1271 = vmatpush1.msra.mxu0 %v669
      %1272 = vmatprep.subr.mxu0 %v666
      %1273 = vmatpush1.msra.mxu0 %v665
      %1274 = vmatprep.subr.mxu0 0.0
      %1275 = vmatpush2.msra.mxu0 0.0
      %1276 = vmatprep.subr.mxu0 0.0
      %1277 = vmatpush2.msra.mxu0 0.0
      %1278 = vmatprep.subr.mxu0 0.0
      %1279 = vmatpush2.msra.mxu0 0.0
      %1280 = vmatprep.subr.mxu0 0.0
      %1281 = vmatpush2.msra.mxu0 0.0
      %1282 = vmatprep.subr.mxu0 0.0
      %1283 = vmatpush2.msra.mxu0 0.0
      %1284 = vmatprep.subr.mxu0 0.0
      %1285 = vmatpush2.msra.mxu0 0.0
      %1286 = vmatprep.subr.mxu0 0.0
      %1287 = vmatpush2.msra.mxu0 0.0
      %1288 = vmatprep.subr.mxu0 0.0
      %1289 = vmatpush2.msra.mxu0 0.0
      %1290 = vmatprep.subr.mxu0 0.0
      %1291 = vmatpush2.msra.mxu0 0.0
      %1292 = vmatprep.subr.mxu0 0.0
      %1293 = vmatpush2.msra.mxu0 0.0
      %1294 = vmatprep.subr.mxu0 0.0
      %1295 = vmatpush2.msra.mxu0 0.0
      %1296 = vmatprep.subr.mxu0 0.0
      %1297 = vmatpush2.msra.mxu0 0.0
      %1298 = vmatprep.subr.mxu0 0.0
      %1299 = vmatpush2.msra.mxu0 0.0
      %1300 = vmatprep.subr.mxu0 0.0
      %1301 = vmatpush2.msra.mxu0 0.0
      %1302 = vmatprep.subr.mxu0 0.0
      %1303 = vmatpush2.msra.mxu0 0.0
      %1304 = vmatprep.subr.mxu0 0.0
      %1305 = vmatpush2.msra.mxu0 0.0
      %1306 = vmatprep.mubr.f32.mxu0 0.0
      %1307 = vmatmul.mubr.f32.gmra.mxu0 %v743
      %v1308 = vpop.f32.mrf.mxu0
      %v1309 = vadd.f32 %v1238, %v1308
      %v1310 = vpop.f32.mrf.mxu0
      %v1311 = vadd.f32 %v1240, %v1310
      %1312 = vdwg.mxu0
      %v1313 = vmax.f32 %v1025, 0.0
      %v1314 = vmax.f32 %v1027, 0.0
      %v1315 = vmax.f32 %v1309, 0.0
      %v1316 = vmax.f32 %v1311, 0.0
      %v1317 = vld [vmem:[%s3] sm:$0xff]
      %v1318 = vld [vmem:[%s3 + $0x8] sm:$0xff]
      %v1319 = vld [vmem:[%s3 + $0x10] sm:$0xff]
      %v1320 = vld [vmem:[%s3 + $0x18] sm:$0xff]
      %v1321 = vld [vmem:[%s3 + $0x20] sm:$0xff]
      %v1322 = vld [vmem:[%s3 + $0x28] sm:$0xff]
      %v1323 = vld [vmem:[%s3 + $0x30] sm:$0xff]
      %v1324 = vld [vmem:[%s3 + $0x38] sm:$0xff]
      %v1325 = vld [vmem:[%s3 + $0x40] sm:$0xff]
      %v1326 = vld [vmem:[%s3 + $0x48] sm:$0xff]
      %v1327 = vld [vmem:[%s3 + $0x50] sm:$0xff]
      %v1328 = vld [vmem:[%s3 + $0x58] sm:$0xff]
      %v1329 = vld [vmem:[%s3 + $0x60] sm:$0xff]
      %v1330 = vld [vmem:[%s3 + $0x68] sm:$0xff]
      %v1331 = vld [vmem:[%s3 + $0x70] sm:$0xff]
      %v1332 = vld [vmem:[%s3 + $0x78] sm:$0xff]
      %v1333 = vld [vmem:[%s3 + $0x80] sm:$0xff]
      %v1334 = vld [vmem:[%s3 + $0x88] sm:$0xff]
      %v1335 = vld [vmem:[%s3 + $0x90] sm:$0xff]
      %v1336 = vld [vmem:[%s3 + $0x98] sm:$0xff]
      %v1337 = vld [vmem:[%s3 + $0xa0] sm:$0xff]
      %v1338 = vld [vmem:[%s3 + $0xa8] sm:$0xff]
      %v1339 = vld [vmem:[%s3 + $0xb0] sm:$0xff]
      %v1340 = vld [vmem:[%s3 + $0xb8] sm:$0xff]
      %v1341 = vld [vmem:[%s3 + $0xc0] sm:$0xff]
      %v1342 = vld [vmem:[%s3 + $0xc8] sm:$0xff]
      %v1343 = vld [vmem:[%s3 + $0xd0] sm:$0xff]
      %v1344 = vld [vmem:[%s3 + $0xd8] sm:$0xff]
      %v1345 = vld [vmem:[%s3 + $0xe0] sm:$0xff]
      %v1346 = vld [vmem:[%s3 + $0xe8] sm:$0xff]
      %v1347 = vld [vmem:[%s3 + $0xf0] sm:$0xff]
      %v1348 = vld [vmem:[%s3 + $0xf8] sm:$0xff]
      %v1349 = vld [vmem:[%s3 + $0x100] sm:$0xff]
      %v1350 = vld [vmem:[%s3 + $0x108] sm:$0xff]
      %v1351 = vld [vmem:[%s3 + $0x110] sm:$0xff]
      %v1352 = vld [vmem:[%s3 + $0x118] sm:$0xff]
      %v1353 = vld [vmem:[%s3 + $0x120] sm:$0xff]
      %v1354 = vld [vmem:[%s3 + $0x128] sm:$0xff]
      %v1355 = vld [vmem:[%s3 + $0x130] sm:$0xff]
      %v1356 = vld [vmem:[%s3 + $0x138] sm:$0xff]
      %v1357 = vld [vmem:[%s3 + $0x140] sm:$0xff]
      %v1358 = vld [vmem:[%s3 + $0x148] sm:$0xff]
      %v1359 = vld [vmem:[%s3 + $0x150] sm:$0xff]
      %v1360 = vld [vmem:[%s3 + $0x158] sm:$0xff]
      %v1361 = vld [vmem:[%s3 + $0x160] sm:$0xff]
      %v1362 = vld [vmem:[%s3 + $0x168] sm:$0xff]
      %v1363 = vld [vmem:[%s3 + $0x170] sm:$0xff]
      %v1364 = vld [vmem:[%s3 + $0x178] sm:$0xff]
      %v1365 = vld [vmem:[%s3 + $0x180] sm:$0xff]
      %v1366 = vld [vmem:[%s3 + $0x188] sm:$0xff]
      %v1367 = vld [vmem:[%s3 + $0x190] sm:$0xff]
      %v1368 = vld [vmem:[%s3 + $0x198] sm:$0xff]
      %v1369 = vld [vmem:[%s3 + $0x1a0] sm:$0xff]
      %v1370 = vld [vmem:[%s3 + $0x1a8] sm:$0xff]
      %v1371 = vld [vmem:[%s3 + $0x1b0] sm:$0xff]
      %v1372 = vld [vmem:[%s3 + $0x1b8] sm:$0xff]
      %v1373 = vld [vmem:[%s3 + $0x1c0] sm:$0xff]
      %v1374 = vld [vmem:[%s3 + $0x1c8] sm:$0xff]
      %v1375 = vld [vmem:[%s3 + $0x1d0] sm:$0xff]
      %v1376 = vld [vmem:[%s3 + $0x1d8] sm:$0xff]
      %v1377 = vld [vmem:[%s3 + $0x1e0] sm:$0xff]
      %v1378 = vld [vmem:[%s3 + $0x1e8] sm:$0xff]
      %v1379 = vld [vmem:[%s3 + $0x1f0] sm:$0xf]
      %v1380 = vld [vmem:[%s4] sm:$0x1]
      %v1382 = vlaneseq
      %v1383 = vshrl.u32 %v1382, 7
      %v1384 = vsub.s32 0, %v1383
      %v1385 = vrot.slane %v1380, %v1384
      %vm1387 = vcmask 949248
      %v1389 = vsel %vm1387, %v1316, 0
      %vm1391 = vcmask 1043456
      %v1393 = vsel %vm1391, %v1379, 0
      %1395 = vmatprep.subr.mxu0 0.0
      %1396 = vmatpush1.msra.mxu0 %v1332
      %1397 = vmatprep.subr.mxu0 0.0
      %1398 = vmatpush1.msra.mxu0 %v1331
      %1399 = vmatprep.subr.mxu0 0.0
      %1400 = vmatpush1.msra.mxu0 %v1330
      %1401 = vmatprep.subr.mxu0 0.0
      %1402 = vmatpush1.msra.mxu0 %v1329
      %1403 = vmatprep.subr.mxu0 0.0
      %1404 = vmatpush1.msra.mxu0 %v1328
      %1405 = vmatprep.subr.mxu0 0.0
      %1406 = vmatpush1.msra.mxu0 %v1327
      %1407 = vmatprep.subr.mxu0 0.0
      %1408 = vmatpush1.msra.mxu0 %v1326
      %1409 = vmatprep.subr.mxu0 0.0
      %1410 = vmatpush1.msra.mxu0 %v1325
      %1411 = vmatprep.subr.mxu0 0.0
      %1412 = vmatpush1.msra.mxu0 %v1324
      %1413 = vmatprep.subr.mxu0 0.0
      %1414 = vmatpush1.msra.mxu0 %v1323
      %1415 = vmatprep.subr.mxu0 0.0
      %1416 = vmatpush1.msra.mxu0 %v1322
      %1417 = vmatprep.subr.mxu0 0.0
      %1418 = vmatpush1.msra.mxu0 %v1321
      %1419 = vmatprep.subr.mxu0 0.0
      %1420 = vmatpush1.msra.mxu0 %v1320
      %1421 = vmatprep.subr.mxu0 0.0
      %1422 = vmatpush1.msra.mxu0 %v1319
      %1423 = vmatprep.subr.mxu0 0.0
      %1424 = vmatpush1.msra.mxu0 %v1318
      %1425 = vmatprep.subr.mxu0 0.0
      %1426 = vmatpush1.msra.mxu0 %v1317
      %1427 = vmatprep.subr.mxu0 0.0
      %1428 = vmatpush2.msra.mxu0 %v1348
      %1429 = vmatprep.subr.mxu0 0.0
      %1430 = vmatpush2.msra.mxu0 %v1347
      %1431 = vmatprep.subr.mxu0 0.0
      %1432 = vmatpush2.msra.mxu0 %v1346
      %1433 = vmatprep.subr.mxu0 0.0
      %1434 = vmatpush2.msra.mxu0 %v1345
      %1435 = vmatprep.subr.mxu0 0.0
      %1436 = vmatpush2.msra.mxu0 %v1344
      %1437 = vmatprep.subr.mxu0 0.0
      %1438 = vmatpush2.msra.mxu0 %v1343
      %1439 = vmatprep.subr.mxu0 0.0
      %1440 = vmatpush2.msra.mxu0 %v1342
      %1441 = vmatprep.subr.mxu0 0.0
      %1442 = vmatpush2.msra.mxu0 %v1341
      %1443 = vmatprep.subr.mxu0 0.0
      %1444 = vmatpush2.msra.mxu0 %v1340
      %1445 = vmatprep.subr.mxu0 0.0
      %1446 = vmatpush2.msra.mxu0 %v1339
      %1447 = vmatprep.subr.mxu0 0.0
      %1448 = vmatpush2.msra.mxu0 %v1338
      %1449 = vmatprep.subr.mxu0 0.0
      %1450 = vmatpush2.msra.mxu0 %v1337
      %1451 = vmatprep.subr.mxu0 0.0
      %1452 = vmatpush2.msra.mxu0 %v1336
      %1453 = vmatprep.subr.mxu0 0.0
      %1454 = vmatpush2.msra.mxu0 %v1335
      %1455 = vmatprep.subr.mxu0 0.0
      %1456 = vmatpush2.msra.mxu0 %v1334
      %1457 = vmatprep.subr.mxu0 0.0
      %1458 = vmatpush2.msra.mxu0 %v1333
      %1459 = vmatprep.mubr.f32.mxu0 %v1314
      %1460 = vmatmul.mubr.f32.gmra.mxu0 %v1313
      %v1461 = vpop.f32.mrf.mxu0
      %v1462 = vadd.f32 %v1385, %v1461
      %v1463 = vpop.f32.mrf.mxu0
      %1464 = vdwg.mxu0
      %1465 = vmatprep.subr.mxu0 0.0
      %1466 = vmatpush1.msra.mxu0 %v1364
      %1467 = vmatprep.subr.mxu0 0.0
      %1468 = vmatpush1.msra.mxu0 %v1363
      %1469 = vmatprep.subr.mxu0 0.0
      %1470 = vmatpush1.msra.mxu0 %v1362
      %1471 = vmatprep.subr.mxu0 0.0
      %1472 = vmatpush1.msra.mxu0 %v1361
      %1473 = vmatprep.subr.mxu0 0.0
      %1474 = vmatpush1.msra.mxu0 %v1360
      %1475 = vmatprep.subr.mxu0 0.0
      %1476 = vmatpush1.msra.mxu0 %v1359
      %1477 = vmatprep.subr.mxu0 0.0
      %1478 = vmatpush1.msra.mxu0 %v1358
      %1479 = vmatprep.subr.mxu0 0.0
      %1480 = vmatpush1.msra.mxu0 %v1357
      %1481 = vmatprep.subr.mxu0 0.0
      %1482 = vmatpush1.msra.mxu0 %v1356
      %1483 = vmatprep.subr.mxu0 0.0
      %1484 = vmatpush1.msra.mxu0 %v1355
      %1485 = vmatprep.subr.mxu0 0.0
      %1486 = vmatpush1.msra.mxu0 %v1354
      %1487 = vmatprep.subr.mxu0 0.0
      %1488 = vmatpush1.msra.mxu0 %v1353
      %1489 = vmatprep.subr.mxu0 0.0
      %1490 = vmatpush1.msra.mxu0 %v1352
      %1491 = vmatprep.subr.mxu0 0.0
      %1492 = vmatpush1.msra.mxu0 %v1351
      %1493 = vmatprep.subr.mxu0 0.0
      %1494 = vmatpush1.msra.mxu0 %v1350
      %1495 = vmatprep.subr.mxu0 0.0
      %1496 = vmatpush1.msra.mxu0 %v1349
      %1497 = vmatprep.subr.mxu0 0.0
      %1498 = vmatpush2.msra.mxu0 0.0
      %1499 = vmatprep.subr.mxu0 0.0
      %1500 = vmatpush2.msra.mxu0 %v1393
      %1501 = vmatprep.subr.mxu0 0.0
      %1502 = vmatpush2.msra.mxu0 %v1378
      %1503 = vmatprep.subr.mxu0 0.0
      %1504 = vmatpush2.msra.mxu0 %v1377
      %1505 = vmatprep.subr.mxu0 0.0
      %1506 = vmatpush2.msra.mxu0 %v1376
      %1507 = vmatprep.subr.mxu0 0.0
      %1508 = vmatpush2.msra.mxu0 %v1375
      %1509 = vmatprep.subr.mxu0 0.0
      %1510 = vmatpush2.msra.mxu0 %v1374
      %1511 = vmatprep.subr.mxu0 0.0
      %1512 = vmatpush2.msra.mxu0 %v1373
      %1513 = vmatprep.subr.mxu0 0.0
      %1514 = vmatpush2.msra.mxu0 %v1372
      %1515 = vmatprep.subr.mxu0 0.0
      %1516 = vmatpush2.msra.mxu0 %v1371
      %1517 = vmatprep.subr.mxu0 0.0
      %1518 = vmatpush2.msra.mxu0 %v1370
      %1519 = vmatprep.subr.mxu0 0.0
      %1520 = vmatpush2.msra.mxu0 %v1369
      %1521 = vmatprep.subr.mxu0 0.0
      %1522 = vmatpush2.msra.mxu0 %v1368
      %1523 = vmatprep.subr.mxu0 0.0
      %1524 = vmatpush2.msra.mxu0 %v1367
      %1525 = vmatprep.subr.mxu0 0.0
      %1526 = vmatpush2.msra.mxu0 %v1366
      %1527 = vmatprep.subr.mxu0 0.0
      %1528 = vmatpush2.msra.mxu0 %v1365
      %1529 = vmatprep.mubr.f32.mxu0 %v1389
      %1530 = vmatmul.mubr.f32.gmra.mxu0 %v1315
      %v1531 = vpop.f32.mrf.mxu0
      %v1532 = vadd.f32 %v1462, %v1531
      %v1533 = vpop.f32.mrf.mxu0
      %1534 = vdwg.mxu0
      %v1535 = vld [vmem:[%s5] sm:$0xff]
      %v1536 = vld [vmem:[%s5 + $0x8] sm:$0x3]
      %v1537 = vld [vmem:[%s6] sm:$0x1]
      %v1539 = vlaneseq
      %v1540 = vshrl.u32 %v1539, 7
      %v1541 = vsub.s32 0, %v1540
      %v1542 = vrot.slane %v1537, %v1541
      %vm1544 = vcmask 80896
      %v1546 = vsel %vm1544, %v1532, 0
      %vm1548 = vcmask 1041408
      %v1550 = vsel %vm1548, %v1536, 0
      %1552 = vmatprep.subr.mxu0 0.0
      %1553 = vmatpush1.msra.mxu0 0.0
      %1554 = vmatprep.subr.mxu0 0.0
      %1555 = vmatpush1.msra.mxu0 0.0
      %1556 = vmatprep.subr.mxu0 0.0
      %1557 = vmatpush1.msra.mxu0 0.0
      %1558 = vmatprep.subr.mxu0 0.0
      %1559 = vmatpush1.msra.mxu0 0.0
      %1560 = vmatprep.subr.mxu0 0.0
      %1561 = vmatpush1.msra.mxu0 0.0
      %1562 = vmatprep.subr.mxu0 0.0
      %1563 = vmatpush1.msra.mxu0 0.0
      %1564 = vmatprep.subr.mxu0 0.0
      %1565 = vmatpush1.msra.mxu0 0.0
      %1566 = vmatprep.subr.mxu0 0.0
      %1567 = vmatpush1.msra.mxu0 0.0
      %1568 = vmatprep.subr.mxu0 0.0
      %1569 = vmatpush1.msra.mxu0 0.0
      %1570 = vmatprep.subr.mxu0 0.0
      %1571 = vmatpush1.msra.mxu0 0.0
      %1572 = vmatprep.subr.mxu0 0.0
      %1573 = vmatpush1.msra.mxu0 0.0
      %1574 = vmatprep.subr.mxu0 0.0
      %1575 = vmatpush1.msra.mxu0 0.0
      %1576 = vmatprep.subr.mxu0 0.0
      %1577 = vmatpush1.msra.mxu0 0.0
      %1578 = vmatprep.subr.mxu0 0.0
      %1579 = vmatpush1.msra.mxu0 0.0
      %1580 = vmatprep.subr.mxu0 0.0
      %1581 = vmatpush1.msra.mxu0 %v1550
      %1582 = vmatprep.subr.mxu0 0.0
      %1583 = vmatpush1.msra.mxu0 %v1535
      %1584 = vmatprep.subr.mxu0 0.0
      %1585 = vmatpush2.msra.mxu0 0.0
      %1586 = vmatprep.subr.mxu0 0.0
      %1587 = vmatpush2.msra.mxu0 0.0
      %1588 = vmatprep.subr.mxu0 0.0
      %1589 = vmatpush2.msra.mxu0 0.0
      %1590 = vmatprep.subr.mxu0 0.0
      %1591 = vmatpush2.msra.mxu0 0.0
      %1592 = vmatprep.subr.mxu0 0.0
      %1593 = vmatpush2.msra.mxu0 0.0
      %1594 = vmatprep.subr.mxu0 0.0
      %1595 = vmatpush2.msra.mxu0 0.0
      %1596 = vmatprep.subr.mxu0 0.0
      %1597 = vmatpush2.msra.mxu0 0.0
      %1598 = vmatprep.subr.mxu0 0.0
      %1599 = vmatpush2.msra.mxu0 0.0
      %1600 = vmatprep.subr.mxu0 0.0
      %1601 = vmatpush2.msra.mxu0 0.0
      %1602 = vmatprep.subr.mxu0 0.0
      %1603 = vmatpush2.msra.mxu0 0.0
      %1604 = vmatprep.subr.mxu0 0.0
      %1605 = vmatpush2.msra.mxu0 0.0
      %1606 = vmatprep.subr.mxu0 0.0
      %1607 = vmatpush2.msra.mxu0 0.0
      %1608 = vmatprep.subr.mxu0 0.0
      %1609 = vmatpush2.msra.mxu0 0.0
      %1610 = vmatprep.subr.mxu0 0.0
      %1611 = vmatpush2.msra.mxu0 0.0
      %1612 = vmatprep.subr.mxu0 0.0
      %1613 = vmatpush2.msra.mxu0 0.0
      %1614 = vmatprep.subr.mxu0 0.0
      %1615 = vmatpush2.msra.mxu0 0.0
      %1616 = vmatprep.mubr.f32.mxu0 0.0
      %1617 = vmatmul.mubr.f32.gmra.mxu0 %v1546
      %v1618 = vpop.f32.mrf.mxu0
      %v1619 = vadd.f32 %v1542, %v1618
      %v1620 = vpop.f32.mrf.mxu0
      %1621 = vdwg.mxu0
      %vm1622 = vcmask 9216
      %1623 = vst.msk [vmem:[%s276] sm:$0x3] %vm1622, %v1619
      %p1624 = scmp.lt.s32.totalorder %s18, 1
      %s1625 = scalar_select %p1624, %s18, 1
      %s1626 = smul.addr %s1625, 2
      %s1627 = scalar_lea.vmem %s7, %s1626
      // Predicated region
      $region49: #{forward.5} parent=47 // pred_check
        %p1628 = pneg %p188
      $region50: #{forward.5} parent=47 // pred_check_branch
        %1630 = sbr.rel (%p1628) target = $region52
      $region51: #{forward.5} parent=47 // pred_region
        _
      $region52: #{forward.5} parent=47 // pred_fallthru
        _
    $region48: #{forward.5} parent=5 // pred_fallthru
      _
    %p1631 = scmp.le.s32.totalorder 2, %s13
    // Predicated region
    $region53: #{forward.5} parent=5 // pred_check
      %p1632 = pneg %p1631
    $region54: #{forward.5} parent=5 // pred_check_branch
      %1634 = sbr.rel (%p1632) target = $region56
    $region55: #{forward.5} parent=5 // pred_region
      %s1635 = ssub.s32 %s13, 2
      // Predicated region
      $region57: #{forward.5} parent=55 // pred_check
        %p1636 = pneg %p194
      $region58: #{forward.5} parent=55 // pred_check_branch
        %1638 = sbr.rel (%p1636) target = $region60
      $region59: #{forward.5} parent=55 // pred_region
        %p1639 = scmp.lt.s32.totalorder %s19, 1
        %s1640 = scalar_select %p1639, %s19, 1
        %s1641 = smul.addr %s1640, 2
        %s1642 = scalar_lea.vmem %s7, %s1641
      $region60: #{forward.5} parent=55 // pred_fallthru
        _
    $region56: #{forward.5} parent=5 // pred_fallthru
      _
  $region6: #{forward.5} parent=0 // loop_footer
    %s17 = sadd.s32 1, %s13
  $region7: #{forward.5} parent=0 // loop_footer_branch
    %12 = sbr.rel target = $region3
  $region8: #{forward.5} parent=0 // loop_exit
    _

</llo_original>
